<compile_context>
chip_gen: v7x
topology: tpu7x:2x2x1
jax: 0.10.0
libtpu: 0.0.40
codegen_flags: <defaults>
</compile_context>

<pallas_src>
import math

import jax
import jax.numpy as jnp
from jax import lax
from jax.experimental import pallas as pl
from jax.experimental.pallas import tpu as pltpu

# Small shapes consistent with the module (tie_weights => embedding_size == hidden_size)
B, S, E, H, V = 2, 8, 32, 32, 64


# ----------------------------------------------------------------------------
# Fused kernel: LSTM recurrence + causal additive attention + concat + decoder
# ----------------------------------------------------------------------------
def fused_lm_kernel(x_ref, wih_ref, whh_ref, bg_ref,
                    a1w_ref, a1b_ref, a2w_ref, a2b_ref,
                    wc_ref, we_ref, cb_ref, decw_ref, decb_ref,
                    out_ref, hn_ref, cn_ref, enc_scr):
    # x_ref:    (S*B, E)  embedded input, time-major rows
    # wih_ref:  (4, E, H) per-gate (i,f,g,o) input->gate weights, pre-transposed
    # whh_ref:  (4, H, H) per-gate hidden->gate weights, pre-transposed
    # bg_ref:   (4, 1, H) per-gate bias (b_ih + b_hh)
    # a1w_ref:  (H, H)    attn_1 weight, pre-transposed;   a1b_ref: (1, H)
    # a2w_ref:  (1, H)    attn_2 weight (row vector);       a2b_ref: (1, 1)
    # wc_ref:   (H, H)    concat-weight half acting on context, pre-transposed
    # we_ref:   (H, H)    concat-weight half acting on encoder out, pre-transposed
    # cb_ref:   (1, H)    concat bias
    # decw_ref: (H, V)    tied decoder weight (embedding.T); decb_ref: (1, V)
    # out_ref:  (B*S, V)  logits, batch-major rows
    # hn_ref/cn_ref: (B, H) final LSTM state
    # enc_scr:  (B, S, H) VMEM scratch holding encoder outputs for the attention stage
    b, s, h_dim = enc_scr.shape

    x2d = x_ref[...]                                            # (S*B, E)

    # Per-gate input contributions for all timesteps (off the serial chain).
    pre = [jnp.dot(x2d, wih_ref[g], preferred_element_type=jnp.float32) + bg_ref[g]
           for g in range(4)]                                   # 4 x (S*B, H)
    whh = [whh_ref[g] for g in range(4)]                        # loaded once, 4 x (H, H)

    h = jnp.zeros((b, h_dim), jnp.float32)
    c = jnp.zeros((b, h_dim), jnp.float32)
    # Statically unrolled recurrence (S is a small compile-time constant) so the
    # scheduler can interleave MXU pushes, EUP sigmoid/tanh and VPU gate math of
    # adjacent steps. Each gate is its own lane-aligned (B, H) value — no
    # cross-lane extracts of a (B, 4H) vector on the serial chain.
    for t in range(s):
        lo = t * b
        i_g = jax.nn.sigmoid(pre[0][lo:lo + b] +
                             jnp.dot(h, whh[0], preferred_element_type=jnp.float32))
        f_g = jax.nn.sigmoid(pre[1][lo:lo + b] +
                             jnp.dot(h, whh[1], preferred_element_type=jnp.float32))
        g_g = jnp.tanh(pre[2][lo:lo + b] +
                       jnp.dot(h, whh[2], preferred_element_type=jnp.float32))
        o_g = jax.nn.sigmoid(pre[3][lo:lo + b] +
                             jnp.dot(h, whh[3], preferred_element_type=jnp.float32))
        c = f_g * c + i_g * g_g
        h = o_g * jnp.tanh(c)
        enc_scr[:, t, :] = h                                    # VMEM scratch, never HBM

    hn_ref[...] = h
    cn_ref[...] = c

    enc = enc_scr[...]                                          # (B, S, H)
    enc2d = enc.reshape(b * s, h_dim)                           # layout-preserving

    # Attention scores: Linear(H->1)(tanh(Linear(H->H)(enc)))
    h1 = jnp.tanh(jnp.dot(enc2d, a1w_ref[...], preferred_element_type=jnp.float32)
                  + a1b_ref[...])
    scores = jnp.sum(h1 * a2w_ref[...], axis=-1, keepdims=True) + a2b_ref[...]
    scores = scores.reshape(b, s)

    # Causal softmax over history j <= t (vectorizes the per-t python loop).
    t_idx = lax.broadcasted_iota(jnp.int32, (s, s), 0)
    j_idx = lax.broadcasted_iota(jnp.int32, (s, s), 1)
    causal = (j_idx <= t_idx)[None, :, :]                       # (1, S, S)
    logits = jnp.where(causal, scores[:, None, :], -1e30)       # (B, S, S)
    logits = logits - jnp.max(logits, axis=-1, keepdims=True)
    p = jnp.exp(logits)
    p = p / jnp.sum(p, axis=-1, keepdims=True)
    ctx = jnp.einsum('btj,bjh->bth', p, enc,
                     preferred_element_type=jnp.float32)        # (B, S, H)

    # concatenation_layer: tanh(cat(ctx, enc) @ W.T + b), W split into two halves.
    comb = jnp.tanh(
        jnp.dot(ctx.reshape(b * s, h_dim), wc_ref[...], preferred_element_type=jnp.float32)
        + jnp.dot(enc2d, we_ref[...], preferred_element_type=jnp.float32)
        + cb_ref[...])

    # Tied-weight decoder.
    # TODO(synk): if V scales, pad/tile the decoder output to 128-lane multiples with a
    # grid for lane-dense stores; at V=64 the extra pad+slice XLA ops would cost more.
    out_ref[...] = (jnp.dot(comb, decw_ref[...], preferred_element_type=jnp.float32)
                    + decb_ref[...])


# ----------------------------------------------------------------------------
# Parameter init (deterministic, mirrors the PyTorch init scheme/shapes)
# ----------------------------------------------------------------------------
def init_params(key):
    ks = jax.random.split(key, 8)
    k_h = 1.0 / math.sqrt(H)
    xav1 = math.sqrt(6.0 / (H + H))
    xav2 = math.sqrt(6.0 / (H + 1))
    k_c = 1.0 / math.sqrt(2 * H)
    return dict(
        emb_w=jax.random.uniform(ks[0], (V, E), jnp.float32, -0.1, 0.1),  # tied decoder.weight
        w_ih=jax.random.uniform(ks[1], (4 * H, E), jnp.float32, -k_h, k_h),
        w_hh=jax.random.uniform(ks[2], (4 * H, H), jnp.float32, -k_h, k_h),
        b_ih=jax.random.uniform(ks[3], (4 * H,), jnp.float32, -k_h, k_h),
        b_hh=jax.random.uniform(ks[4], (4 * H,), jnp.float32, -k_h, k_h),
        attn1_w=jax.random.uniform(ks[5], (H, H), jnp.float32, -xav1, xav1),
        attn1_b=jnp.zeros((H,), jnp.float32),
        attn2_w=jax.random.uniform(ks[6], (1, H), jnp.float32, -xav2, xav2),
        attn2_b=jnp.zeros((1,), jnp.float32),
        concat_w=jax.random.uniform(ks[7], (H, 2 * H), jnp.float32, -k_c, k_c),
        concat_b=jnp.zeros((H,), jnp.float32),
        dec_b=jnp.zeros((V,), jnp.float32),
    )


# ----------------------------------------------------------------------------
# Wrapper: weight plumbing (transposes / per-gate split) happens once in XLA
# ----------------------------------------------------------------------------
@jax.jit
def model_forward(params, input_ids, hidden):
    # TODO(synk): nn.Dropout layers are identity here (eval-mode semantics).
    del hidden  # use_hidden=False -> encoder starts from zero state

    # Embedding gather emitted directly in time-major 2-D layout (no activation transpose).
    flat_ids = jnp.transpose(input_ids, (1, 0)).reshape(-1)       # (S*B,) time-major
    x2d = jnp.take(params['emb_w'], flat_ids, axis=0)             # (S*B, E)

    # Pre-transposed / per-gate-split weights so the kernel never does ref[...].T.
    b_sum = params['b_ih'] + params['b_hh']
    wih_g = jnp.stack([params['w_ih'][g * H:(g + 1) * H, :].T for g in range(4)])   # (4,E,H)
    whh_g = jnp.stack([params['w_hh'][g * H:(g + 1) * H, :].T for g in range(4)])   # (4,H,H)
    bg = jnp.stack([b_sum[g * H:(g + 1) * H].reshape(1, H) for g in range(4)])      # (4,1,H)

    a1w_t = params['attn1_w'].T                                   # (H, H)
    wc_t = params['concat_w'][:, :H].T                            # (H, H) context half
    we_t = params['concat_w'][:, H:].T                            # (H, H) encoder half
    decw_t = params['emb_w'].T                                    # (H, V) tied decoder

    vmem = pl.BlockSpec(memory_space=pltpu.MemorySpace.VMEM)
    cost = pl.CostEstimate(flops=500_000, transcendentals=4_000, bytes_accessed=80_000)

    dec2d, h_n, c_n = pl.pallas_call(
        fused_lm_kernel,
        out_shape=(jax.ShapeDtypeStruct((B * S, V), jnp.float32),
                   jax.ShapeDtypeStruct((B, H), jnp.float32),
                   jax.ShapeDtypeStruct((B, H), jnp.float32)),
        in_specs=[vmem] * 13,
        out_specs=(vmem, vmem, vmem),
        scratch_shapes=[pltpu.VMEM((B, S, H), jnp.float32)],
        cost_estimate=cost,
    )(x2d, wih_g, whh_g, bg,
      a1w_t, params['attn1_b'].reshape(1, H),
      params['attn2_w'], params['attn2_b'].reshape(1, 1),
      wc_t, we_t, params['concat_b'].reshape(1, H),
      decw_t, params['dec_b'].reshape(1, V))

    decoded = dec2d.reshape(B, S, V)                              # free XLA reshape
    return decoded, (h_n[None], c_n[None])                        # hidden: (1, B, H) each


# ----------------------------------------------------------------------------
# Pure-JAX reference (mirrors the PyTorch forward) for correctness check
# ----------------------------------------------------------------------------
def reference_forward(params, input_ids):
    embedded = jnp.take(params['emb_w'], input_ids, axis=0)
    h = jnp.zeros((B, H), jnp.float32)
    c = jnp.zeros((B, H), jnp.float32)
    b_sum = params['b_ih'] + params['b_hh']
    outs = []
    for t in range(S):
        g = embedded[:, t, :] @ params['w_ih'].T + h @ params['w_hh'].T + b_sum
        i = jax.nn.sigmoid(g[:, :H]); f = jax.nn.sigmoid(g[:, H:2 * H])
        gg = jnp.tanh(g[:, 2 * H:3 * H]); o = jax.nn.sigmoid(g[:, 3 * H:])
        c = f * c + i * gg
        h = o * jnp.tanh(c)
        outs.append(h)
    enc = jnp.stack(outs, axis=1)                                  # (B, S, H)
    scores = (jnp.tanh(enc @ params['attn1_w'].T + params['attn1_b'])
              @ params['attn2_w'].T + params['attn2_b'])           # (B, S, 1)
    ctxs = []
    for t in range(S):
        w = jax.nn.softmax(scores[:, :t + 1, :], axis=1)
        ctxs.append(jnp.sum(w * enc[:, :t + 1, :], axis=1))
    ctx = jnp.stack(ctxs, axis=1)                                  # (B, S, H)
    comb = jnp.concatenate([ctx, enc], axis=2)
    att = jnp.tanh(comb @ params['concat_w'].T + params['concat_b'])
    dec = att @ params['emb_w'].T + params['dec_b']
    return dec, (h[None], c[None])


if __name__ == "__main__":
    import numpy as np

    key = jax.random.PRNGKey(0)
    pkey, ikey = jax.random.split(key)
    params = init_params(pkey)
    input_ids = jax.random.randint(ikey, (B, S), 0, V, dtype=jnp.int32)
    hidden0 = (jnp.zeros((1, B, H), jnp.float32), jnp.zeros((1, B, H), jnp.float32))

    decoded, (h_n, c_n) = model_forward(params, input_ids, hidden0)
    jax.block_until_ready(decoded)

    ref_dec, (ref_h, ref_c) = reference_forward(params, input_ids)
    assert decoded.shape == (B, S, V)
    np.testing.assert_allclose(np.asarray(decoded), np.asarray(ref_dec), rtol=1e-4, atol=1e-4)
    np.testing.assert_allclose(np.asarray(h_n), np.asarray(ref_h), rtol=1e-4, atol=1e-4)
    np.testing.assert_allclose(np.asarray(c_n), np.asarray(ref_c), rtol=1e-4, atol=1e-4)
    print("KERNEL_OK")
</pallas_src>

<mosaic_0001>
module attributes {stable_mosaic.version = 11 : i64} {
  func.func @fused_lm_kernel(%arg0: memref<16x32xf32, #tpu.memory_space<vmem>>, %arg1: memref<4x32x32xf32, #tpu.memory_space<vmem>>, %arg2: memref<4x32x32xf32, #tpu.memory_space<vmem>>, %arg3: memref<4x1x32xf32, #tpu.memory_space<vmem>>, %arg4: memref<32x32xf32, #tpu.memory_space<vmem>>, %arg5: memref<1x32xf32, #tpu.memory_space<vmem>>, %arg6: memref<1x32xf32, #tpu.memory_space<vmem>>, %arg7: memref<1x1xf32, #tpu.memory_space<vmem>>, %arg8: memref<32x32xf32, #tpu.memory_space<vmem>>, %arg9: memref<32x32xf32, #tpu.memory_space<vmem>>, %arg10: memref<1x32xf32, #tpu.memory_space<vmem>>, %arg11: memref<32x64xf32, #tpu.memory_space<vmem>>, %arg12: memref<1x64xf32, #tpu.memory_space<vmem>>, %arg13: memref<16x64xf32, #tpu.memory_space<vmem>>, %arg14: memref<2x32xf32, #tpu.memory_space<vmem>>, %arg15: memref<2x32xf32, #tpu.memory_space<vmem>>, %arg16: memref<2x8x32xf32, #tpu.memory_space<vmem>>) attributes {dimension_semantics = [], scalar_prefetch = 0 : i64, scratch_operands = 1 : i64, tpu.core_type = #tpu.core_type<tc>} {
    %c0 = arith.constant 0 : index
    %c0_0 = arith.constant 0 : index
    %0 = vector.load %arg0[%c0, %c0_0] : memref<16x32xf32, #tpu.memory_space<vmem>>, vector<16x32xf32>
    %c0_1 = arith.constant 0 : index
    %c0_2 = arith.constant 0 : index
    %c0_3 = arith.constant 0 : index
    %1 = vector.load %arg1[%c0_1, %c0_2, %c0_3] : memref<4x32x32xf32, #tpu.memory_space<vmem>>, vector<1x32x32xf32>
    %2 = vector.shape_cast %1 : vector<1x32x32xf32> to vector<32x32xf32>
    %cst = arith.constant dense<0.000000e+00> : vector<16x32xf32>
    %3 = tpu.matmul %0, %2, %cst {dimension_numbers = #tpu.dot_dimension_numbers<[1], [0], [0], [1], [0, 0, 1, 1], [], []>} : vector<16x32xf32>, vector<32x32xf32>, vector<16x32xf32> -> vector<16x32xf32>
    %c0_4 = arith.constant 0 : index
    %c0_5 = arith.constant 0 : index
    %c0_6 = arith.constant 0 : index
    %4 = vector.load %arg3[%c0_4, %c0_5, %c0_6] : memref<4x1x32xf32, #tpu.memory_space<vmem>>, vector<1x1x32xf32>
    %5 = vector.shape_cast %4 : vector<1x1x32xf32> to vector<1x32xf32>
    %6 = vector.broadcast %5 : vector<1x32xf32> to vector<16x32xf32>
    %7 = arith.addf %3, %6 : vector<16x32xf32>
    %c1 = arith.constant 1 : index
    %c0_7 = arith.constant 0 : index
    %c0_8 = arith.constant 0 : index
    %8 = vector.load %arg1[%c1, %c0_7, %c0_8] : memref<4x32x32xf32, #tpu.memory_space<vmem>>, vector<1x32x32xf32>
    %9 = vector.shape_cast %8 : vector<1x32x32xf32> to vector<32x32xf32>
    %cst_9 = arith.constant dense<0.000000e+00> : vector<16x32xf32>
    %10 = tpu.matmul %0, %9, %cst_9 {dimension_numbers = #tpu.dot_dimension_numbers<[1], [0], [0], [1], [0, 0, 1, 1], [], []>} : vector<16x32xf32>, vector<32x32xf32>, vector<16x32xf32> -> vector<16x32xf32>
    %c1_10 = arith.constant 1 : index
    %c0_11 = arith.constant 0 : index
    %c0_12 = arith.constant 0 : index
    %11 = vector.load %arg3[%c1_10, %c0_11, %c0_12] : memref<4x1x32xf32, #tpu.memory_space<vmem>>, vector<1x1x32xf32>
    %12 = vector.shape_cast %11 : vector<1x1x32xf32> to vector<1x32xf32>
    %13 = vector.broadcast %12 : vector<1x32xf32> to vector<16x32xf32>
    %14 = arith.addf %10, %13 : vector<16x32xf32>
    %c2 = arith.constant 2 : index
    %c0_13 = arith.constant 0 : index
    %c0_14 = arith.constant 0 : index
    %15 = vector.load %arg1[%c2, %c0_13, %c0_14] : memref<4x32x32xf32, #tpu.memory_space<vmem>>, vector<1x32x32xf32>
    %16 = vector.shape_cast %15 : vector<1x32x32xf32> to vector<32x32xf32>
    %cst_15 = arith.constant dense<0.000000e+00> : vector<16x32xf32>
    %17 = tpu.matmul %0, %16, %cst_15 {dimension_numbers = #tpu.dot_dimension_numbers<[1], [0], [0], [1], [0, 0, 1, 1], [], []>} : vector<16x32xf32>, vector<32x32xf32>, vector<16x32xf32> -> vector<16x32xf32>
    %c2_16 = arith.constant 2 : index
    %c0_17 = arith.constant 0 : index
    %c0_18 = arith.constant 0 : index
    %18 = vector.load %arg3[%c2_16, %c0_17, %c0_18] : memref<4x1x32xf32, #tpu.memory_space<vmem>>, vector<1x1x32xf32>
    %19 = vector.shape_cast %18 : vector<1x1x32xf32> to vector<1x32xf32>
    %20 = vector.broadcast %19 : vector<1x32xf32> to vector<16x32xf32>
    %21 = arith.addf %17, %20 : vector<16x32xf32>
    %c3 = arith.constant 3 : index
    %c0_19 = arith.constant 0 : index
    %c0_20 = arith.constant 0 : index
    %22 = vector.load %arg1[%c3, %c0_19, %c0_20] : memref<4x32x32xf32, #tpu.memory_space<vmem>>, vector<1x32x32xf32>
    %23 = vector.shape_cast %22 : vector<1x32x32xf32> to vector<32x32xf32>
    %cst_21 = arith.constant dense<0.000000e+00> : vector<16x32xf32>
    %24 = tpu.matmul %0, %23, %cst_21 {dimension_numbers = #tpu.dot_dimension_numbers<[1], [0], [0], [1], [0, 0, 1, 1], [], []>} : vector<16x32xf32>, vector<32x32xf32>, vector<16x32xf32> -> vector<16x32xf32>
    %c3_22 = arith.constant 3 : index
    %c0_23 = arith.constant 0 : index
    %c0_24 = arith.constant 0 : index
    %25 = vector.load %arg3[%c3_22, %c0_23, %c0_24] : memref<4x1x32xf32, #tpu.memory_space<vmem>>, vector<1x1x32xf32>
    %26 = vector.shape_cast %25 : vector<1x1x32xf32> to vector<1x32xf32>
    %27 = vector.broadcast %26 : vector<1x32xf32> to vector<16x32xf32>
    %28 = arith.addf %24, %27 : vector<16x32xf32>
    %c0_25 = arith.constant 0 : index
    %c0_26 = arith.constant 0 : index
    %c0_27 = arith.constant 0 : index
    %29 = vector.load %arg2[%c0_25, %c0_26, %c0_27] : memref<4x32x32xf32, #tpu.memory_space<vmem>>, vector<1x32x32xf32>
    %30 = vector.shape_cast %29 : vector<1x32x32xf32> to vector<32x32xf32>
    %c1_28 = arith.constant 1 : index
    %c0_29 = arith.constant 0 : index
    %c0_30 = arith.constant 0 : index
    %31 = vector.load %arg2[%c1_28, %c0_29, %c0_30] : memref<4x32x32xf32, #tpu.memory_space<vmem>>, vector<1x32x32xf32>
    %32 = vector.shape_cast %31 : vector<1x32x32xf32> to vector<32x32xf32>
    %c2_31 = arith.constant 2 : index
    %c0_32 = arith.constant 0 : index
    %c0_33 = arith.constant 0 : index
    %33 = vector.load %arg2[%c2_31, %c0_32, %c0_33] : memref<4x32x32xf32, #tpu.memory_space<vmem>>, vector<1x32x32xf32>
    %34 = vector.shape_cast %33 : vector<1x32x32xf32> to vector<32x32xf32>
    %c3_34 = arith.constant 3 : index
    %c0_35 = arith.constant 0 : index
    %c0_36 = arith.constant 0 : index
    %35 = vector.load %arg2[%c3_34, %c0_35, %c0_36] : memref<4x32x32xf32, #tpu.memory_space<vmem>>, vector<1x32x32xf32>
    %36 = vector.shape_cast %35 : vector<1x32x32xf32> to vector<32x32xf32>
    %cst_37 = arith.constant 0.000000e+00 : f32
    %37 = vector.broadcast %cst_37 : f32 to vector<2x32xf32>
    %cst_38 = arith.constant 0.000000e+00 : f32
    %38 = vector.broadcast %cst_38 : f32 to vector<2x32xf32>
    %39 = vector.extract_strided_slice %7 {offsets = [0, 0], sizes = [2, 32], strides = [1, 1]} : vector<16x32xf32> to vector<2x32xf32>
    %cst_39 = arith.constant dense<0.000000e+00> : vector<2x32xf32>
    %40 = tpu.matmul %37, %30, %cst_39 {dimension_numbers = #tpu.dot_dimension_numbers<[1], [0], [0], [1], [0, 0, 1, 1], [], []>} : vector<2x32xf32>, vector<32x32xf32>, vector<2x32xf32> -> vector<2x32xf32>
    %41 = arith.addf %39, %40 : vector<2x32xf32>
    %42 = arith.negf %41 : vector<2x32xf32>
    %43 = math.exp %42 : vector<2x32xf32>
    %cst_40 = arith.constant 1.000000e+00 : f32
    %44 = vector.broadcast %cst_40 : f32 to vector<2x32xf32>
    %45 = arith.addf %44, %43 : vector<2x32xf32>
    %46 = arith.divf %44, %45 : vector<2x32xf32>
    %47 = vector.extract_strided_slice %14 {offsets = [0, 0], sizes = [2, 32], strides = [1, 1]} : vector<16x32xf32> to vector<2x32xf32>
    %cst_41 = arith.constant dense<0.000000e+00> : vector<2x32xf32>
    %48 = tpu.matmul %37, %32, %cst_41 {dimension_numbers = #tpu.dot_dimension_numbers<[1], [0], [0], [1], [0, 0, 1, 1], [], []>} : vector<2x32xf32>, vector<32x32xf32>, vector<2x32xf32> -> vector<2x32xf32>
    %49 = arith.addf %47, %48 : vector<2x32xf32>
    %50 = arith.negf %49 : vector<2x32xf32>
    %51 = math.exp %50 : vector<2x32xf32>
    %cst_42 = arith.constant 1.000000e+00 : f32
    %52 = vector.broadcast %cst_42 : f32 to vector<2x32xf32>
    %53 = arith.addf %52, %51 : vector<2x32xf32>
    %54 = arith.divf %52, %53 : vector<2x32xf32>
    %55 = vector.extract_strided_slice %21 {offsets = [0, 0], sizes = [2, 32], strides = [1, 1]} : vector<16x32xf32> to vector<2x32xf32>
    %cst_43 = arith.constant dense<0.000000e+00> : vector<2x32xf32>
    %56 = tpu.matmul %37, %34, %cst_43 {dimension_numbers = #tpu.dot_dimension_numbers<[1], [0], [0], [1], [0, 0, 1, 1], [], []>} : vector<2x32xf32>, vector<32x32xf32>, vector<2x32xf32> -> vector<2x32xf32>
    %57 = arith.addf %55, %56 : vector<2x32xf32>
    %58 = math.tanh %57 : vector<2x32xf32>
    %59 = vector.extract_strided_slice %28 {offsets = [0, 0], sizes = [2, 32], strides = [1, 1]} : vector<16x32xf32> to vector<2x32xf32>
    %cst_44 = arith.constant dense<0.000000e+00> : vector<2x32xf32>
    %60 = tpu.matmul %37, %36, %cst_44 {dimension_numbers = #tpu.dot_dimension_numbers<[1], [0], [0], [1], [0, 0, 1, 1], [], []>} : vector<2x32xf32>, vector<32x32xf32>, vector<2x32xf32> -> vector<2x32xf32>
    %61 = arith.addf %59, %60 : vector<2x32xf32>
    %62 = arith.negf %61 : vector<2x32xf32>
    %63 = math.exp %62 : vector<2x32xf32>
    %cst_45 = arith.constant 1.000000e+00 : f32
    %64 = vector.broadcast %cst_45 : f32 to vector<2x32xf32>
    %65 = arith.addf %64, %63 : vector<2x32xf32>
    %66 = arith.divf %64, %65 : vector<2x32xf32>
    %67 = arith.mulf %54, %38 : vector<2x32xf32>
    %68 = arith.mulf %46, %58 : vector<2x32xf32>
    %69 = arith.addf %67, %68 : vector<2x32xf32>
    %70 = math.tanh %69 : vector<2x32xf32>
    %71 = arith.mulf %66, %70 : vector<2x32xf32>
    %c0_46 = arith.constant 0 : index
    %c0_47 = arith.constant 0 : index
    %c0_48 = arith.constant 0 : index
    %72 = vector.load %arg16[%c0_46, %c0_47, %c0_48] : memref<2x8x32xf32, #tpu.memory_space<vmem>>, vector<2x1x32xf32>
    %73 = vector.shape_cast %72 : vector<2x1x32xf32> to vector<2x32xf32>
    %74 = vector.shape_cast %71 : vector<2x32xf32> to vector<2x1x32xf32>
    tpu.vector_store %arg16[%c0_46, %c0_47, %c0_48], %74 {strides = array<i32>} : memref<2x8x32xf32, #tpu.memory_space<vmem>>, vector<2x1x32xf32>,
    %75 = vector.extract_strided_slice %7 {offsets = [2, 0], sizes = [2, 32], strides = [1, 1]} : vector<16x32xf32> to vector<2x32xf32>
    %cst_49 = arith.constant dense<0.000000e+00> : vector<2x32xf32>
    %76 = tpu.matmul %71, %30, %cst_49 {dimension_numbers = #tpu.dot_dimension_numbers<[1], [0], [0], [1], [0, 0, 1, 1], [], []>} : vector<2x32xf32>, vector<32x32xf32>, vector<2x32xf32> -> vector<2x32xf32>
    %77 = arith.addf %75, %76 : vector<2x32xf32>
    %78 = arith.negf %77 : vector<2x32xf32>
    %79 = math.exp %78 : vector<2x32xf32>
    %cst_50 = arith.constant 1.000000e+00 : f32
    %80 = vector.broadcast %cst_50 : f32 to vector<2x32xf32>
    %81 = arith.addf %80, %79 : vector<2x32xf32>
    %82 = arith.divf %80, %81 : vector<2x32xf32>
    %83 = vector.extract_strided_slice %14 {offsets = [2, 0], sizes = [2, 32], strides = [1, 1]} : vector<16x32xf32> to vector<2x32xf32>
    %cst_51 = arith.constant dense<0.000000e+00> : vector<2x32xf32>
    %84 = tpu.matmul %71, %32, %cst_51 {dimension_numbers = #tpu.dot_dimension_numbers<[1], [0], [0], [1], [0, 0, 1, 1], [], []>} : vector<2x32xf32>, vector<32x32xf32>, vector<2x32xf32> -> vector<2x32xf32>
    %85 = arith.addf %83, %84 : vector<2x32xf32>
    %86 = arith.negf %85 : vector<2x32xf32>
    %87 = math.exp %86 : vector<2x32xf32>
    %cst_52 = arith.constant 1.000000e+00 : f32
    %88 = vector.broadcast %cst_52 : f32 to vector<2x32xf32>
    %89 = arith.addf %88, %87 : vector<2x32xf32>
    %90 = arith.divf %88, %89 : vector<2x32xf32>
    %91 = vector.extract_strided_slice %21 {offsets = [2, 0], sizes = [2, 32], strides = [1, 1]} : vector<16x32xf32> to vector<2x32xf32>
    %cst_53 = arith.constant dense<0.000000e+00> : vector<2x32xf32>
    %92 = tpu.matmul %71, %34, %cst_53 {dimension_numbers = #tpu.dot_dimension_numbers<[1], [0], [0], [1], [0, 0, 1, 1], [], []>} : vector<2x32xf32>, vector<32x32xf32>, vector<2x32xf32> -> vector<2x32xf32>
    %93 = arith.addf %91, %92 : vector<2x32xf32>
    %94 = math.tanh %93 : vector<2x32xf32>
    %95 = vector.extract_strided_slice %28 {offsets = [2, 0], sizes = [2, 32], strides = [1, 1]} : vector<16x32xf32> to vector<2x32xf32>
    %cst_54 = arith.constant dense<0.000000e+00> : vector<2x32xf32>
    %96 = tpu.matmul %71, %36, %cst_54 {dimension_numbers = #tpu.dot_dimension_numbers<[1], [0], [0], [1], [0, 0, 1, 1], [], []>} : vector<2x32xf32>, vector<32x32xf32>, vector<2x32xf32> -> vector<2x32xf32>
    %97 = arith.addf %95, %96 : vector<2x32xf32>
    %98 = arith.negf %97 : vector<2x32xf32>
    %99 = math.exp %98 : vector<2x32xf32>
    %cst_55 = arith.constant 1.000000e+00 : f32
    %100 = vector.broadcast %cst_55 : f32 to vector<2x32xf32>
    %101 = arith.addf %100, %99 : vector<2x32xf32>
    %102 = arith.divf %100, %101 : vector<2x32xf32>
    %103 = arith.mulf %90, %69 : vector<2x32xf32>
    %104 = arith.mulf %82, %94 : vector<2x32xf32>
    %105 = arith.addf %103, %104 : vector<2x32xf32>
    %106 = math.tanh %105 : vector<2x32xf32>
    %107 = arith.mulf %102, %106 : vector<2x32xf32>
    %c0_56 = arith.constant 0 : index
    %c1_57 = arith.constant 1 : index
    %c0_58 = arith.constant 0 : index
    %108 = vector.load %arg16[%c0_56, %c1_57, %c0_58] : memref<2x8x32xf32, #tpu.memory_space<vmem>>, vector<2x1x32xf32>
    %109 = vector.shape_cast %108 : vector<2x1x32xf32> to vector<2x32xf32>
    %110 = vector.shape_cast %107 : vector<2x32xf32> to vector<2x1x32xf32>
    tpu.vector_store %arg16[%c0_56, %c1_57, %c0_58], %110 {strides = array<i32>} : memref<2x8x32xf32, #tpu.memory_space<vmem>>, vector<2x1x32xf32>,
    %111 = vector.extract_strided_slice %7 {offsets = [4, 0], sizes = [2, 32], strides = [1, 1]} : vector<16x32xf32> to vector<2x32xf32>
    %cst_59 = arith.constant dense<0.000000e+00> : vector<2x32xf32>
    %112 = tpu.matmul %107, %30, %cst_59 {dimension_numbers = #tpu.dot_dimension_numbers<[1], [0], [0], [1], [0, 0, 1, 1], [], []>} : vector<2x32xf32>, vector<32x32xf32>, vector<2x32xf32> -> vector<2x32xf32>
    %113 = arith.addf %111, %112 : vector<2x32xf32>
    %114 = arith.negf %113 : vector<2x32xf32>
    %115 = math.exp %114 : vector<2x32xf32>
    %cst_60 = arith.constant 1.000000e+00 : f32
    %116 = vector.broadcast %cst_60 : f32 to vector<2x32xf32>
    %117 = arith.addf %116, %115 : vector<2x32xf32>
    %118 = arith.divf %116, %117 : vector<2x32xf32>
    %119 = vector.extract_strided_slice %14 {offsets = [4, 0], sizes = [2, 32], strides = [1, 1]} : vector<16x32xf32> to vector<2x32xf32>
    %cst_61 = arith.constant dense<0.000000e+00> : vector<2x32xf32>
    %120 = tpu.matmul %107, %32, %cst_61 {dimension_numbers = #tpu.dot_dimension_numbers<[1], [0], [0], [1], [0, 0, 1, 1], [], []>} : vector<2x32xf32>, vector<32x32xf32>, vector<2x32xf32> -> vector<2x32xf32>
    %121 = arith.addf %119, %120 : vector<2x32xf32>
    %122 = arith.negf %121 : vector<2x32xf32>
    %123 = math.exp %122 : vector<2x32xf32>
    %cst_62 = arith.constant 1.000000e+00 : f32
    %124 = vector.broadcast %cst_62 : f32 to vector<2x32xf32>
    %125 = arith.addf %124, %123 : vector<2x32xf32>
    %126 = arith.divf %124, %125 : vector<2x32xf32>
    %127 = vector.extract_strided_slice %21 {offsets = [4, 0], sizes = [2, 32], strides = [1, 1]} : vector<16x32xf32> to vector<2x32xf32>
    %cst_63 = arith.constant dense<0.000000e+00> : vector<2x32xf32>
    %128 = tpu.matmul %107, %34, %cst_63 {dimension_numbers = #tpu.dot_dimension_numbers<[1], [0], [0], [1], [0, 0, 1, 1], [], []>} : vector<2x32xf32>, vector<32x32xf32>, vector<2x32xf32> -> vector<2x32xf32>
    %129 = arith.addf %127, %128 : vector<2x32xf32>
    %130 = math.tanh %129 : vector<2x32xf32>
    %131 = vector.extract_strided_slice %28 {offsets = [4, 0], sizes = [2, 32], strides = [1, 1]} : vector<16x32xf32> to vector<2x32xf32>
    %cst_64 = arith.constant dense<0.000000e+00> : vector<2x32xf32>
    %132 = tpu.matmul %107, %36, %cst_64 {dimension_numbers = #tpu.dot_dimension_numbers<[1], [0], [0], [1], [0, 0, 1, 1], [], []>} : vector<2x32xf32>, vector<32x32xf32>, vector<2x32xf32> -> vector<2x32xf32>
    %133 = arith.addf %131, %132 : vector<2x32xf32>
    %134 = arith.negf %133 : vector<2x32xf32>
    %135 = math.exp %134 : vector<2x32xf32>
    %cst_65 = arith.constant 1.000000e+00 : f32
    %136 = vector.broadcast %cst_65 : f32 to vector<2x32xf32>
    %137 = arith.addf %136, %135 : vector<2x32xf32>
    %138 = arith.divf %136, %137 : vector<2x32xf32>
    %139 = arith.mulf %126, %105 : vector<2x32xf32>
    %140 = arith.mulf %118, %130 : vector<2x32xf32>
    %141 = arith.addf %139, %140 : vector<2x32xf32>
    %142 = math.tanh %141 : vector<2x32xf32>
    %143 = arith.mulf %138, %142 : vector<2x32xf32>
    %c0_66 = arith.constant 0 : index
    %c2_67 = arith.constant 2 : index
    %c0_68 = arith.constant 0 : index
    %144 = vector.load %arg16[%c0_66, %c2_67, %c0_68] : memref<2x8x32xf32, #tpu.memory_space<vmem>>, vector<2x1x32xf32>
    %145 = vector.shape_cast %144 : vector<2x1x32xf32> to vector<2x32xf32>
    %146 = vector.shape_cast %143 : vector<2x32xf32> to vector<2x1x32xf32>
    tpu.vector_store %arg16[%c0_66, %c2_67, %c0_68], %146 {strides = array<i32>} : memref<2x8x32xf32, #tpu.memory_space<vmem>>, vector<2x1x32xf32>,
    %147 = vector.extract_strided_slice %7 {offsets = [6, 0], sizes = [2, 32], strides = [1, 1]} : vector<16x32xf32> to vector<2x32xf32>
    %cst_69 = arith.constant dense<0.000000e+00> : vector<2x32xf32>
    %148 = tpu.matmul %143, %30, %cst_69 {dimension_numbers = #tpu.dot_dimension_numbers<[1], [0], [0], [1], [0, 0, 1, 1], [], []>} : vector<2x32xf32>, vector<32x32xf32>, vector<2x32xf32> -> vector<2x32xf32>
    %149 = arith.addf %147, %148 : vector<2x32xf32>
    %150 = arith.negf %149 : vector<2x32xf32>
    %151 = math.exp %150 : vector<2x32xf32>
    %cst_70 = arith.constant 1.000000e+00 : f32
    %152 = vector.broadcast %cst_70 : f32 to vector<2x32xf32>
    %153 = arith.addf %152, %151 : vector<2x32xf32>
    %154 = arith.divf %152, %153 : vector<2x32xf32>
    %155 = vector.extract_strided_slice %14 {offsets = [6, 0], sizes = [2, 32], strides = [1, 1]} : vector<16x32xf32> to vector<2x32xf32>
    %cst_71 = arith.constant dense<0.000000e+00> : vector<2x32xf32>
    %156 = tpu.matmul %143, %32, %cst_71 {dimension_numbers = #tpu.dot_dimension_numbers<[1], [0], [0], [1], [0, 0, 1, 1], [], []>} : vector<2x32xf32>, vector<32x32xf32>, vector<2x32xf32> -> vector<2x32xf32>
    %157 = arith.addf %155, %156 : vector<2x32xf32>
    %158 = arith.negf %157 : vector<2x32xf32>
    %159 = math.exp %158 : vector<2x32xf32>
    %cst_72 = arith.constant 1.000000e+00 : f32
    %160 = vector.broadcast %cst_72 : f32 to vector<2x32xf32>
    %161 = arith.addf %160, %159 : vector<2x32xf32>
    %162 = arith.divf %160, %161 : vector<2x32xf32>
    %163 = vector.extract_strided_slice %21 {offsets = [6, 0], sizes = [2, 32], strides = [1, 1]} : vector<16x32xf32> to vector<2x32xf32>
    %cst_73 = arith.constant dense<0.000000e+00> : vector<2x32xf32>
    %164 = tpu.matmul %143, %34, %cst_73 {dimension_numbers = #tpu.dot_dimension_numbers<[1], [0], [0], [1], [0, 0, 1, 1], [], []>} : vector<2x32xf32>, vector<32x32xf32>, vector<2x32xf32> -> vector<2x32xf32>
    %165 = arith.addf %163, %164 : vector<2x32xf32>
    %166 = math.tanh %165 : vector<2x32xf32>
    %167 = vector.extract_strided_slice %28 {offsets = [6, 0], sizes = [2, 32], strides = [1, 1]} : vector<16x32xf32> to vector<2x32xf32>
    %cst_74 = arith.constant dense<0.000000e+00> : vector<2x32xf32>
    %168 = tpu.matmul %143, %36, %cst_74 {dimension_numbers = #tpu.dot_dimension_numbers<[1], [0], [0], [1], [0, 0, 1, 1], [], []>} : vector<2x32xf32>, vector<32x32xf32>, vector<2x32xf32> -> vector<2x32xf32>
    %169 = arith.addf %167, %168 : vector<2x32xf32>
    %170 = arith.negf %169 : vector<2x32xf32>
    %171 = math.exp %170 : vector<2x32xf32>
    %cst_75 = arith.constant 1.000000e+00 : f32
    %172 = vector.broadcast %cst_75 : f32 to vector<2x32xf32>
    %173 = arith.addf %172, %171 : vector<2x32xf32>
    %174 = arith.divf %172, %173 : vector<2x32xf32>
    %175 = arith.mulf %162, %141 : vector<2x32xf32>
    %176 = arith.mulf %154, %166 : vector<2x32xf32>
    %177 = arith.addf %175, %176 : vector<2x32xf32>
    %178 = math.tanh %177 : vector<2x32xf32>
    %179 = arith.mulf %174, %178 : vector<2x32xf32>
    %c0_76 = arith.constant 0 : index
    %c3_77 = arith.constant 3 : index
    %c0_78 = arith.constant 0 : index
    %180 = vector.load %arg16[%c0_76, %c3_77, %c0_78] : memref<2x8x32xf32, #tpu.memory_space<vmem>>, vector<2x1x32xf32>
    %181 = vector.shape_cast %180 : vector<2x1x32xf32> to vector<2x32xf32>
    %182 = vector.shape_cast %179 : vector<2x32xf32> to vector<2x1x32xf32>
    tpu.vector_store %arg16[%c0_76, %c3_77, %c0_78], %182 {strides = array<i32>} : memref<2x8x32xf32, #tpu.memory_space<vmem>>, vector<2x1x32xf32>,
    %183 = vector.extract_strided_slice %7 {offsets = [8, 0], sizes = [2, 32], strides = [1, 1]} : vector<16x32xf32> to vector<2x32xf32>
    %cst_79 = arith.constant dense<0.000000e+00> : vector<2x32xf32>
    %184 = tpu.matmul %179, %30, %cst_79 {dimension_numbers = #tpu.dot_dimension_numbers<[1], [0], [0], [1], [0, 0, 1, 1], [], []>} : vector<2x32xf32>, vector<32x32xf32>, vector<2x32xf32> -> vector<2x32xf32>
    %185 = arith.addf %183, %184 : vector<2x32xf32>
    %186 = arith.negf %185 : vector<2x32xf32>
    %187 = math.exp %186 : vector<2x32xf32>
    %cst_80 = arith.constant 1.000000e+00 : f32
    %188 = vector.broadcast %cst_80 : f32 to vector<2x32xf32>
    %189 = arith.addf %188, %187 : vector<2x32xf32>
    %190 = arith.divf %188, %189 : vector<2x32xf32>
    %191 = vector.extract_strided_slice %14 {offsets = [8, 0], sizes = [2, 32], strides = [1, 1]} : vector<16x32xf32> to vector<2x32xf32>
    %cst_81 = arith.constant dense<0.000000e+00> : vector<2x32xf32>
    %192 = tpu.matmul %179, %32, %cst_81 {dimension_numbers = #tpu.dot_dimension_numbers<[1], [0], [0], [1], [0, 0, 1, 1], [], []>} : vector<2x32xf32>, vector<32x32xf32>, vector<2x32xf32> -> vector<2x32xf32>
    %193 = arith.addf %191, %192 : vector<2x32xf32>
    %194 = arith.negf %193 : vector<2x32xf32>
    %195 = math.exp %194 : vector<2x32xf32>
    %cst_82 = arith.constant 1.000000e+00 : f32
    %196 = vector.broadcast %cst_82 : f32 to vector<2x32xf32>
    %197 = arith.addf %196, %195 : vector<2x32xf32>
    %198 = arith.divf %196, %197 : vector<2x32xf32>
    %199 = vector.extract_strided_slice %21 {offsets = [8, 0], sizes = [2, 32], strides = [1, 1]} : vector<16x32xf32> to vector<2x32xf32>
    %cst_83 = arith.constant dense<0.000000e+00> : vector<2x32xf32>
    %200 = tpu.matmul %179, %34, %cst_83 {dimension_numbers = #tpu.dot_dimension_numbers<[1], [0], [0], [1], [0, 0, 1, 1], [], []>} : vector<2x32xf32>, vector<32x32xf32>, vector<2x32xf32> -> vector<2x32xf32>
    %201 = arith.addf %199, %200 : vector<2x32xf32>
    %202 = math.tanh %201 : vector<2x32xf32>
    %203 = vector.extract_strided_slice %28 {offsets = [8, 0], sizes = [2, 32], strides = [1, 1]} : vector<16x32xf32> to vector<2x32xf32>
    %cst_84 = arith.constant dense<0.000000e+00> : vector<2x32xf32>
    %204 = tpu.matmul %179, %36, %cst_84 {dimension_numbers = #tpu.dot_dimension_numbers<[1], [0], [0], [1], [0, 0, 1, 1], [], []>} : vector<2x32xf32>, vector<32x32xf32>, vector<2x32xf32> -> vector<2x32xf32>
    %205 = arith.addf %203, %204 : vector<2x32xf32>
    %206 = arith.negf %205 : vector<2x32xf32>
    %207 = math.exp %206 : vector<2x32xf32>
    %cst_85 = arith.constant 1.000000e+00 : f32
    %208 = vector.broadcast %cst_85 : f32 to vector<2x32xf32>
    %209 = arith.addf %208, %207 : vector<2x32xf32>
    %210 = arith.divf %208, %209 : vector<2x32xf32>
    %211 = arith.mulf %198, %177 : vector<2x32xf32>
    %212 = arith.mulf %190, %202 : vector<2x32xf32>
    %213 = arith.addf %211, %212 : vector<2x32xf32>
    %214 = math.tanh %213 : vector<2x32xf32>
    %215 = arith.mulf %210, %214 : vector<2x32xf32>
    %c0_86 = arith.constant 0 : index
    %c4 = arith.constant 4 : index
    %c0_87 = arith.constant 0 : index
    %216 = vector.load %arg16[%c0_86, %c4, %c0_87] : memref<2x8x32xf32, #tpu.memory_space<vmem>>, vector<2x1x32xf32>
    %217 = vector.shape_cast %216 : vector<2x1x32xf32> to vector<2x32xf32>
    %218 = vector.shape_cast %215 : vector<2x32xf32> to vector<2x1x32xf32>
    tpu.vector_store %arg16[%c0_86, %c4, %c0_87], %218 {strides = array<i32>} : memref<2x8x32xf32, #tpu.memory_space<vmem>>, vector<2x1x32xf32>,
    %219 = vector.extract_strided_slice %7 {offsets = [10, 0], sizes = [2, 32], strides = [1, 1]} : vector<16x32xf32> to vector<2x32xf32>
    %cst_88 = arith.constant dense<0.000000e+00> : vector<2x32xf32>
    %220 = tpu.matmul %215, %30, %cst_88 {dimension_numbers = #tpu.dot_dimension_numbers<[1], [0], [0], [1], [0, 0, 1, 1], [], []>} : vector<2x32xf32>, vector<32x32xf32>, vector<2x32xf32> -> vector<2x32xf32>
    %221 = arith.addf %219, %220 : vector<2x32xf32>
    %222 = arith.negf %221 : vector<2x32xf32>
    %223 = math.exp %222 : vector<2x32xf32>
    %cst_89 = arith.constant 1.000000e+00 : f32
    %224 = vector.broadcast %cst_89 : f32 to vector<2x32xf32>
    %225 = arith.addf %224, %223 : vector<2x32xf32>
    %226 = arith.divf %224, %225 : vector<2x32xf32>
    %227 = vector.extract_strided_slice %14 {offsets = [10, 0], sizes = [2, 32], strides = [1, 1]} : vector<16x32xf32> to vector<2x32xf32>
    %cst_90 = arith.constant dense<0.000000e+00> : vector<2x32xf32>
    %228 = tpu.matmul %215, %32, %cst_90 {dimension_numbers = #tpu.dot_dimension_numbers<[1], [0], [0], [1], [0, 0, 1, 1], [], []>} : vector<2x32xf32>, vector<32x32xf32>, vector<2x32xf32> -> vector<2x32xf32>
    %229 = arith.addf %227, %228 : vector<2x32xf32>
    %230 = arith.negf %229 : vector<2x32xf32>
    %231 = math.exp %230 : vector<2x32xf32>
    %cst_91 = arith.constant 1.000000e+00 : f32
    %232 = vector.broadcast %cst_91 : f32 to vector<2x32xf32>
    %233 = arith.addf %232, %231 : vector<2x32xf32>
    %234 = arith.divf %232, %233 : vector<2x32xf32>
    %235 = vector.extract_strided_slice %21 {offsets = [10, 0], sizes = [2, 32], strides = [1, 1]} : vector<16x32xf32> to vector<2x32xf32>
    %cst_92 = arith.constant dense<0.000000e+00> : vector<2x32xf32>
    %236 = tpu.matmul %215, %34, %cst_92 {dimension_numbers = #tpu.dot_dimension_numbers<[1], [0], [0], [1], [0, 0, 1, 1], [], []>} : vector<2x32xf32>, vector<32x32xf32>, vector<2x32xf32> -> vector<2x32xf32>
    %237 = arith.addf %235, %236 : vector<2x32xf32>
    %238 = math.tanh %237 : vector<2x32xf32>
    %239 = vector.extract_strided_slice %28 {offsets = [10, 0], sizes = [2, 32], strides = [1, 1]} : vector<16x32xf32> to vector<2x32xf32>
    %cst_93 = arith.constant dense<0.000000e+00> : vector<2x32xf32>
    %240 = tpu.matmul %215, %36, %cst_93 {dimension_numbers = #tpu.dot_dimension_numbers<[1], [0], [0], [1], [0, 0, 1, 1], [], []>} : vector<2x32xf32>, vector<32x32xf32>, vector<2x32xf32> -> vector<2x32xf32>
    %241 = arith.addf %239, %240 : vector<2x32xf32>
    %242 = arith.negf %241 : vector<2x32xf32>
    %243 = math.exp %242 : vector<2x32xf32>
    %cst_94 = arith.constant 1.000000e+00 : f32
    %244 = vector.broadcast %cst_94 : f32 to vector<2x32xf32>
    %245 = arith.addf %244, %243 : vector<2x32xf32>
    %246 = arith.divf %244, %245 : vector<2x32xf32>
    %247 = arith.mulf %234, %213 : vector<2x32xf32>
    %248 = arith.mulf %226, %238 : vector<2x32xf32>
    %249 = arith.addf %247, %248 : vector<2x32xf32>
    %250 = math.tanh %249 : vector<2x32xf32>
    %251 = arith.mulf %246, %250 : vector<2x32xf32>
    %c0_95 = arith.constant 0 : index
    %c5 = arith.constant 5 : index
    %c0_96 = arith.constant 0 : index
    %252 = vector.load %arg16[%c0_95, %c5, %c0_96] : memref<2x8x32xf32, #tpu.memory_space<vmem>>, vector<2x1x32xf32>
    %253 = vector.shape_cast %252 : vector<2x1x32xf32> to vector<2x32xf32>
    %254 = vector.shape_cast %251 : vector<2x32xf32> to vector<2x1x32xf32>
    tpu.vector_store %arg16[%c0_95, %c5, %c0_96], %254 {strides = array<i32>} : memref<2x8x32xf32, #tpu.memory_space<vmem>>, vector<2x1x32xf32>,
    %255 = vector.extract_strided_slice %7 {offsets = [12, 0], sizes = [2, 32], strides = [1, 1]} : vector<16x32xf32> to vector<2x32xf32>
    %cst_97 = arith.constant dense<0.000000e+00> : vector<2x32xf32>
    %256 = tpu.matmul %251, %30, %cst_97 {dimension_numbers = #tpu.dot_dimension_numbers<[1], [0], [0], [1], [0, 0, 1, 1], [], []>} : vector<2x32xf32>, vector<32x32xf32>, vector<2x32xf32> -> vector<2x32xf32>
    %257 = arith.addf %255, %256 : vector<2x32xf32>
    %258 = arith.negf %257 : vector<2x32xf32>
    %259 = math.exp %258 : vector<2x32xf32>
    %cst_98 = arith.constant 1.000000e+00 : f32
    %260 = vector.broadcast %cst_98 : f32 to vector<2x32xf32>
    %261 = arith.addf %260, %259 : vector<2x32xf32>
    %262 = arith.divf %260, %261 : vector<2x32xf32>
    %263 = vector.extract_strided_slice %14 {offsets = [12, 0], sizes = [2, 32], strides = [1, 1]} : vector<16x32xf32> to vector<2x32xf32>
    %cst_99 = arith.constant dense<0.000000e+00> : vector<2x32xf32>
    %264 = tpu.matmul %251, %32, %cst_99 {dimension_numbers = #tpu.dot_dimension_numbers<[1], [0], [0], [1], [0, 0, 1, 1], [], []>} : vector<2x32xf32>, vector<32x32xf32>, vector<2x32xf32> -> vector<2x32xf32>
    %265 = arith.addf %263, %264 : vector<2x32xf32>
    %266 = arith.negf %265 : vector<2x32xf32>
    %267 = math.exp %266 : vector<2x32xf32>
    %cst_100 = arith.constant 1.000000e+00 : f32
    %268 = vector.broadcast %cst_100 : f32 to vector<2x32xf32>
    %269 = arith.addf %268, %267 : vector<2x32xf32>
    %270 = arith.divf %268, %269 : vector<2x32xf32>
    %271 = vector.extract_strided_slice %21 {offsets = [12, 0], sizes = [2, 32], strides = [1, 1]} : vector<16x32xf32> to vector<2x32xf32>
    %cst_101 = arith.constant dense<0.000000e+00> : vector<2x32xf32>
    %272 = tpu.matmul %251, %34, %cst_101 {dimension_numbers = #tpu.dot_dimension_numbers<[1], [0], [0], [1], [0, 0, 1, 1], [], []>} : vector<2x32xf32>, vector<32x32xf32>, vector<2x32xf32> -> vector<2x32xf32>
    %273 = arith.addf %271, %272 : vector<2x32xf32>
    %274 = math.tanh %273 : vector<2x32xf32>
    %275 = vector.extract_strided_slice %28 {offsets = [12, 0], sizes = [2, 32], strides = [1, 1]} : vector<16x32xf32> to vector<2x32xf32>
    %cst_102 = arith.constant dense<0.000000e+00> : vector<2x32xf32>
    %276 = tpu.matmul %251, %36, %cst_102 {dimension_numbers = #tpu.dot_dimension_numbers<[1], [0], [0], [1], [0, 0, 1, 1], [], []>} : vector<2x32xf32>, vector<32x32xf32>, vector<2x32xf32> -> vector<2x32xf32>
    %277 = arith.addf %275, %276 : vector<2x32xf32>
    %278 = arith.negf %277 : vector<2x32xf32>
    %279 = math.exp %278 : vector<2x32xf32>
    %cst_103 = arith.constant 1.000000e+00 : f32
    %280 = vector.broadcast %cst_103 : f32 to vector<2x32xf32>
    %281 = arith.addf %280, %279 : vector<2x32xf32>
    %282 = arith.divf %280, %281 : vector<2x32xf32>
    %283 = arith.mulf %270, %249 : vector<2x32xf32>
    %284 = arith.mulf %262, %274 : vector<2x32xf32>
    %285 = arith.addf %283, %284 : vector<2x32xf32>
    %286 = math.tanh %285 : vector<2x32xf32>
    %287 = arith.mulf %282, %286 : vector<2x32xf32>
    %c0_104 = arith.constant 0 : index
    %c6 = arith.constant 6 : index
    %c0_105 = arith.constant 0 : index
    %288 = vector.load %arg16[%c0_104, %c6, %c0_105] : memref<2x8x32xf32, #tpu.memory_space<vmem>>, vector<2x1x32xf32>
    %289 = vector.shape_cast %288 : vector<2x1x32xf32> to vector<2x32xf32>
    %290 = vector.shape_cast %287 : vector<2x32xf32> to vector<2x1x32xf32>
    tpu.vector_store %arg16[%c0_104, %c6, %c0_105], %290 {strides = array<i32>} : memref<2x8x32xf32, #tpu.memory_space<vmem>>, vector<2x1x32xf32>,
    %291 = vector.extract_strided_slice %7 {offsets = [14, 0], sizes = [2, 32], strides = [1, 1]} : vector<16x32xf32> to vector<2x32xf32>
    %cst_106 = arith.constant dense<0.000000e+00> : vector<2x32xf32>
    %292 = tpu.matmul %287, %30, %cst_106 {dimension_numbers = #tpu.dot_dimension_numbers<[1], [0], [0], [1], [0, 0, 1, 1], [], []>} : vector<2x32xf32>, vector<32x32xf32>, vector<2x32xf32> -> vector<2x32xf32>
    %293 = arith.addf %291, %292 : vector<2x32xf32>
    %294 = arith.negf %293 : vector<2x32xf32>
    %295 = math.exp %294 : vector<2x32xf32>
    %cst_107 = arith.constant 1.000000e+00 : f32
    %296 = vector.broadcast %cst_107 : f32 to vector<2x32xf32>
    %297 = arith.addf %296, %295 : vector<2x32xf32>
    %298 = arith.divf %296, %297 : vector<2x32xf32>
    %299 = vector.extract_strided_slice %14 {offsets = [14, 0], sizes = [2, 32], strides = [1, 1]} : vector<16x32xf32> to vector<2x32xf32>
    %cst_108 = arith.constant dense<0.000000e+00> : vector<2x32xf32>
    %300 = tpu.matmul %287, %32, %cst_108 {dimension_numbers = #tpu.dot_dimension_numbers<[1], [0], [0], [1], [0, 0, 1, 1], [], []>} : vector<2x32xf32>, vector<32x32xf32>, vector<2x32xf32> -> vector<2x32xf32>
    %301 = arith.addf %299, %300 : vector<2x32xf32>
    %302 = arith.negf %301 : vector<2x32xf32>
    %303 = math.exp %302 : vector<2x32xf32>
    %cst_109 = arith.constant 1.000000e+00 : f32
    %304 = vector.broadcast %cst_109 : f32 to vector<2x32xf32>
    %305 = arith.addf %304, %303 : vector<2x32xf32>
    %306 = arith.divf %304, %305 : vector<2x32xf32>
    %307 = vector.extract_strided_slice %21 {offsets = [14, 0], sizes = [2, 32], strides = [1, 1]} : vector<16x32xf32> to vector<2x32xf32>
    %cst_110 = arith.constant dense<0.000000e+00> : vector<2x32xf32>
    %308 = tpu.matmul %287, %34, %cst_110 {dimension_numbers = #tpu.dot_dimension_numbers<[1], [0], [0], [1], [0, 0, 1, 1], [], []>} : vector<2x32xf32>, vector<32x32xf32>, vector<2x32xf32> -> vector<2x32xf32>
    %309 = arith.addf %307, %308 : vector<2x32xf32>
    %310 = math.tanh %309 : vector<2x32xf32>
    %311 = vector.extract_strided_slice %28 {offsets = [14, 0], sizes = [2, 32], strides = [1, 1]} : vector<16x32xf32> to vector<2x32xf32>
    %cst_111 = arith.constant dense<0.000000e+00> : vector<2x32xf32>
    %312 = tpu.matmul %287, %36, %cst_111 {dimension_numbers = #tpu.dot_dimension_numbers<[1], [0], [0], [1], [0, 0, 1, 1], [], []>} : vector<2x32xf32>, vector<32x32xf32>, vector<2x32xf32> -> vector<2x32xf32>
    %313 = arith.addf %311, %312 : vector<2x32xf32>
    %314 = arith.negf %313 : vector<2x32xf32>
    %315 = math.exp %314 : vector<2x32xf32>
    %cst_112 = arith.constant 1.000000e+00 : f32
    %316 = vector.broadcast %cst_112 : f32 to vector<2x32xf32>
    %317 = arith.addf %316, %315 : vector<2x32xf32>
    %318 = arith.divf %316, %317 : vector<2x32xf32>
    %319 = arith.mulf %306, %285 : vector<2x32xf32>
    %320 = arith.mulf %298, %310 : vector<2x32xf32>
    %321 = arith.addf %319, %320 : vector<2x32xf32>
    %322 = math.tanh %321 : vector<2x32xf32>
    %323 = arith.mulf %318, %322 : vector<2x32xf32>
    %c0_113 = arith.constant 0 : index
    %c7 = arith.constant 7 : index
    %c0_114 = arith.constant 0 : index
    %324 = vector.load %arg16[%c0_113, %c7, %c0_114] : memref<2x8x32xf32, #tpu.memory_space<vmem>>, vector<2x1x32xf32>
    %325 = vector.shape_cast %324 : vector<2x1x32xf32> to vector<2x32xf32>
    %326 = vector.shape_cast %323 : vector<2x32xf32> to vector<2x1x32xf32>
    tpu.vector_store %arg16[%c0_113, %c7, %c0_114], %326 {strides = array<i32>} : memref<2x8x32xf32, #tpu.memory_space<vmem>>, vector<2x1x32xf32>,
    %c0_115 = arith.constant 0 : index
    %c0_116 = arith.constant 0 : index
    %327 = vector.load %arg14[%c0_115, %c0_116] : memref<2x32xf32, #tpu.memory_space<vmem>>, vector<2x32xf32>
    tpu.vector_store %arg14[%c0_115, %c0_116], %323 {strides = array<i32>} : memref<2x32xf32, #tpu.memory_space<vmem>>, vector<2x32xf32>,
    %c0_117 = arith.constant 0 : index
    %c0_118 = arith.constant 0 : index
    %328 = vector.load %arg15[%c0_117, %c0_118] : memref<2x32xf32, #tpu.memory_space<vmem>>, vector<2x32xf32>
    tpu.vector_store %arg15[%c0_117, %c0_118], %321 {strides = array<i32>} : memref<2x32xf32, #tpu.memory_space<vmem>>, vector<2x32xf32>,
    %c0_119 = arith.constant 0 : index
    %c0_120 = arith.constant 0 : index
    %c0_121 = arith.constant 0 : index
    %329 = vector.load %arg16[%c0_119, %c0_120, %c0_121] : memref<2x8x32xf32, #tpu.memory_space<vmem>>, vector<2x8x32xf32>
    %330 = vector.shape_cast %329 : vector<2x8x32xf32> to vector<16x32xf32>
    %c0_122 = arith.constant 0 : index
    %c0_123 = arith.constant 0 : index
    %331 = vector.load %arg4[%c0_122, %c0_123] : memref<32x32xf32, #tpu.memory_space<vmem>>, vector<32x32xf32>
    %cst_124 = arith.constant dense<0.000000e+00> : vector<16x32xf32>
    %332 = tpu.matmul %330, %331, %cst_124 {dimension_numbers = #tpu.dot_dimension_numbers<[1], [0], [0], [1], [0, 0, 1, 1], [], []>} : vector<16x32xf32>, vector<32x32xf32>, vector<16x32xf32> -> vector<16x32xf32>
    %c0_125 = arith.constant 0 : index
    %c0_126 = arith.constant 0 : index
    %333 = vector.load %arg5[%c0_125, %c0_126] : memref<1x32xf32, #tpu.memory_space<vmem>>, vector<1x32xf32>
    %334 = vector.broadcast %333 : vector<1x32xf32> to vector<16x32xf32>
    %335 = arith.addf %332, %334 : vector<16x32xf32>
    %336 = math.tanh %335 : vector<16x32xf32>
    %c0_127 = arith.constant 0 : index
    %c0_128 = arith.constant 0 : index
    %337 = vector.load %arg6[%c0_127, %c0_128] : memref<1x32xf32, #tpu.memory_space<vmem>>, vector<1x32xf32>
    %338 = vector.broadcast %337 : vector<1x32xf32> to vector<16x32xf32>
    %339 = arith.mulf %336, %338 : vector<16x32xf32>
    %cst_129 = arith.constant dense<0.000000e+00> : vector<16xf32>
    %340 = vector.multi_reduction <add>, %339, %cst_129 [1] : vector<16x32xf32> to vector<16xf32>
    %341 = vector.shape_cast %340 : vector<16xf32> to vector<16x1xf32>
    %c0_130 = arith.constant 0 : index
    %c0_131 = arith.constant 0 : index
    %342 = vector.load %arg7[%c0_130, %c0_131] : memref<1x1xf32, #tpu.memory_space<vmem>>, vector<1x1xf32>
    %343 = vector.broadcast %342 : vector<1x1xf32> to vector<16x1xf32>
    %344 = arith.addf %341, %343 : vector<16x1xf32>
    %345 = vector.shape_cast %344 : vector<16x1xf32> to vector<2x8xf32>
    %346 = tpu.iota {dimensions = array<i32: 0>} : vector<8x8xi32>
    %347 = tpu.iota {dimensions = array<i32: 1>} : vector<8x8xi32>
    %348 = arith.cmpi sle, %347, %346 : vector<8x8xi32>
    %349 = vector.shape_cast %348 : vector<8x8xi1> to vector<1x8x8xi1>
    %350 = vector.shape_cast %345 : vector<2x8xf32> to vector<2x1x8xf32>
    %cst_132 = arith.constant -1.000000e+30 : f32
    %351 = vector.shape_cast %349 : vector<1x8x8xi1> to vector<1x8x8xi1>
    %352 = vector.broadcast %351 : vector<1x8x8xi1> to vector<2x8x8xi1>
    %353 = vector.shape_cast %350 : vector<2x1x8xf32> to vector<2x1x8xf32>
    %354 = vector.broadcast %353 : vector<2x1x8xf32> to vector<2x8x8xf32>
    %355 = vector.broadcast %cst_132 : f32 to vector<2x8x8xf32>
    %356 = arith.select %352, %354, %355 : vector<2x8x8xi1>, vector<2x8x8xf32>
    %cst_133 = arith.constant dense<0xFF800000> : vector<2x8xf32>
    %357 = vector.multi_reduction <maximumf>, %356, %cst_133 [2] : vector<2x8x8xf32> to vector<2x8xf32>
    %358 = vector.shape_cast %357 : vector<2x8xf32> to vector<2x8x1xf32>
    %359 = vector.broadcast %358 : vector<2x8x1xf32> to vector<2x8x8xf32>
    %360 = arith.subf %356, %359 : vector<2x8x8xf32>
    %361 = math.exp %360 : vector<2x8x8xf32>
    %cst_134 = arith.constant dense<0.000000e+00> : vector<2x8xf32>
    %362 = vector.multi_reduction <add>, %361, %cst_134 [2] : vector<2x8x8xf32> to vector<2x8xf32>
    %363 = vector.shape_cast %362 : vector<2x8xf32> to vector<2x8x1xf32>
    %364 = vector.broadcast %363 : vector<2x8x1xf32> to vector<2x8x8xf32>
    %365 = arith.divf %361, %364 : vector<2x8x8xf32>
    "tpu.trace_start"() <{level = 10 : i32, message = "btj,bjh->bth"}> : () -> ()
    %cst_135 = arith.constant dense<0.000000e+00> : vector<2x8x32xf32>
    %366 = tpu.matmul %365, %329, %cst_135 {dimension_numbers = #tpu.dot_dimension_numbers<[2], [1], [1], [2], [0, 0, 0, 1, 1, 2], [0], [0]>} : vector<2x8x8xf32>, vector<2x8x32xf32>, vector<2x8x32xf32> -> vector<2x8x32xf32>
    "tpu.trace_stop"() : () -> ()
    %367 = vector.shape_cast %366 : vector<2x8x32xf32> to vector<16x32xf32>
    %c0_136 = arith.constant 0 : index
    %c0_137 = arith.constant 0 : index
    %368 = vector.load %arg8[%c0_136, %c0_137] : memref<32x32xf32, #tpu.memory_space<vmem>>, vector<32x32xf32>
    %cst_138 = arith.constant dense<0.000000e+00> : vector<16x32xf32>
    %369 = tpu.matmul %367, %368, %cst_138 {dimension_numbers = #tpu.dot_dimension_numbers<[1], [0], [0], [1], [0, 0, 1, 1], [], []>} : vector<16x32xf32>, vector<32x32xf32>, vector<16x32xf32> -> vector<16x32xf32>
    %c0_139 = arith.constant 0 : index
    %c0_140 = arith.constant 0 : index
    %370 = vector.load %arg9[%c0_139, %c0_140] : memref<32x32xf32, #tpu.memory_space<vmem>>, vector<32x32xf32>
    %cst_141 = arith.constant dense<0.000000e+00> : vector<16x32xf32>
    %371 = tpu.matmul %330, %370, %cst_141 {dimension_numbers = #tpu.dot_dimension_numbers<[1], [0], [0], [1], [0, 0, 1, 1], [], []>} : vector<16x32xf32>, vector<32x32xf32>, vector<16x32xf32> -> vector<16x32xf32>
    %372 = arith.addf %369, %371 : vector<16x32xf32>
    %c0_142 = arith.constant 0 : index
    %c0_143 = arith.constant 0 : index
    %373 = vector.load %arg10[%c0_142, %c0_143] : memref<1x32xf32, #tpu.memory_space<vmem>>, vector<1x32xf32>
    %374 = vector.broadcast %373 : vector<1x32xf32> to vector<16x32xf32>
    %375 = arith.addf %372, %374 : vector<16x32xf32>
    %376 = math.tanh %375 : vector<16x32xf32>
    %c0_144 = arith.constant 0 : index
    %c0_145 = arith.constant 0 : index
    %377 = vector.load %arg11[%c0_144, %c0_145] : memref<32x64xf32, #tpu.memory_space<vmem>>, vector<32x64xf32>
    %cst_146 = arith.constant dense<0.000000e+00> : vector<16x64xf32>
    %378 = tpu.matmul %376, %377, %cst_146 {dimension_numbers = #tpu.dot_dimension_numbers<[1], [0], [0], [1], [0, 0, 1, 1], [], []>} : vector<16x32xf32>, vector<32x64xf32>, vector<16x64xf32> -> vector<16x64xf32>
    %c0_147 = arith.constant 0 : index
    %c0_148 = arith.constant 0 : index
    %379 = vector.load %arg12[%c0_147, %c0_148] : memref<1x64xf32, #tpu.memory_space<vmem>>, vector<1x64xf32>
    %380 = vector.broadcast %379 : vector<1x64xf32> to vector<16x64xf32>
    %381 = arith.addf %378, %380 : vector<16x64xf32>
    %c0_149 = arith.constant 0 : index
    %c0_150 = arith.constant 0 : index
    %382 = vector.load %arg13[%c0_149, %c0_150] : memref<16x64xf32, #tpu.memory_space<vmem>>, vector<16x64xf32>
    tpu.vector_store %arg13[%c0_149, %c0_150], %381 {strides = array<i32>} : memref<16x64xf32, #tpu.memory_space<vmem>>, vector<16x64xf32>,
    return
  }
}

</mosaic_0001>

<llo_original>
// kernel: model_forward.1
$region0: #{model_forward.1}
  #allocation0 [shape = 'u32[]', space=smem, size = 0x4, offset = 0x4, fixed_abs, tag = 'smem constant byte address 0x4 - core index']
  #allocation1 [shape = 'u32[144,128]{1,0:T(1,128)}', space=vmem, size = 0x12000, scoped, tag = 'internal scratch']
  #allocation2 [shape = 'f32[2,8,32]{2,1,0:T(8,128)}', space=vmem, size = 0x2000, scoped, tag = 'scratch operand']
  #allocation3 [shape = 'f32[1,1]{1,0:T(1,128)S(1)}', space=vmem, size = 0x200, scoped, tag = 'scoped memory for model_forward.1']
  %s0 = inlined_call_operand.vmem [shape: f32[16,32], index: 0, kind: input, shape index: {}]
  %s1 = inlined_call_operand.vmem [shape: f32[4,32,32], index: 1, kind: input, shape index: {}]
  %s2 = inlined_call_operand.vmem [shape: f32[4,32,32], index: 2, kind: input, shape index: {}]
  %s3 = inlined_call_operand.vmem [shape: f32[4,1,32], index: 3, kind: input, shape index: {}]
  %s4 = inlined_call_operand.vmem [shape: f32[32,32], index: 4, kind: input, shape index: {}]
  %s5 = inlined_call_operand.vmem [shape: f32[1,32], index: 5, kind: input, shape index: {}]
  %s6 = inlined_call_operand.vmem [shape: f32[1,32], index: 6, kind: input, shape index: {}]
  %s7 = inlined_call_operand.<no memory space> [shape: f32[1,1], index: 7, kind: input, shape index: {}]
  %s8 = inlined_call_operand.vmem [shape: f32[32,32], index: 8, kind: input, shape index: {}]
  %s9 = inlined_call_operand.vmem [shape: f32[32,32], index: 9, kind: input, shape index: {}]
  %s10 = inlined_call_operand.vmem [shape: f32[1,32], index: 10, kind: input, shape index: {}]
  %s11 = inlined_call_operand.vmem [shape: f32[32,64], index: 11, kind: input, shape index: {}]
  %s12 = inlined_call_operand.vmem [shape: f32[1,64], index: 12, kind: input, shape index: {}]
  %s13 = inlined_call_operand.hbm [shape: f32[16,64], index: 13, kind: output, shape index: {0}]
  %s14 = inlined_call_operand.hbm [shape: f32[2,32], index: 14, kind: output, shape index: {1}]
  %s15 = inlined_call_operand.hbm [shape: f32[2,32], index: 15, kind: output, shape index: {2}]
  %16 = xla_tuple %s13, %s14, %s15
  %s17 = sld [smem:[#allocation0]]
  $region78: #{model_forward.1} parent=0
    _
  %s19 = ssub.s32 1, %s17
  %s20 = scalar_select 0, %s19, %s17
  %v21 = vstv %s7
  %22 = vst [vmem:[#allocation3] sm:$0x1] %v21
  $region1: #{model_forward.1} parent=0
    #allocation4 [shape = 'u8[8192]{0}', space=vmem, size = 0x2000, scoped, tag = 'output window, operand 0, single buffered']
    #allocation5 [shape = 's32[1]{0}', space=sflag, size = 0x4, scoped, tag = 'scoped memory for model_forward.1']
    #allocation6 [shape = 'u8[1024]{0}', space=vmem, size = 0x400, scoped, tag = 'output window, operand 1, single buffered']
    #allocation7 [shape = 's32[1]{0}', space=sflag, size = 0x4, scoped, tag = 'scoped memory for model_forward.1']
    #allocation8 [shape = 'u8[1024]{0}', space=vmem, size = 0x400, scoped, tag = 'output window, operand 2, single buffered']
    %23 = vsyncpa [#allocation5], 0
    %24 = vsyncpa [#allocation7], 0
    // Predicated region
    $region2: #{model_forward.1} parent=1 // pred_check
      _
    $region3: #{model_forward.1} parent=1 // pred_check_branch
      %26 = sbr.rel (0) target = $region5
    $region4: #{model_forward.1} parent=1 // pred_region
      _
    $region5: #{model_forward.1} parent=1 // pred_fallthru
      _
    // Predicated region
    $region6: #{model_forward.1} parent=1 // pred_check
      _
    $region7: #{model_forward.1} parent=1 // pred_check_branch
      %28 = sbr.rel (0) target = $region9
    $region8: #{model_forward.1} parent=1 // pred_region
      _
    $region9: #{model_forward.1} parent=1 // pred_fallthru
      _
    // Predicated region
    $region10: #{model_forward.1} parent=1 // pred_check
      _
    $region11: #{model_forward.1} parent=1 // pred_check_branch
      %30 = sbr.rel (0) target = $region13
    $region12: #{model_forward.1} parent=1 // pred_region
      _
    $region13: #{model_forward.1} parent=1 // pred_fallthru
      _
    // Predicated region
    $region14: #{model_forward.1} parent=1 // pred_check
      _
    $region15: #{model_forward.1} parent=1 // pred_check_branch
      %32 = sbr.rel (0) target = $region17
    $region16: #{model_forward.1} parent=1 // pred_region
      _
    $region17: #{model_forward.1} parent=1 // pred_fallthru
      _
    // Predicated region
    $region18: #{model_forward.1} parent=1 // pred_check
      _
    $region19: #{model_forward.1} parent=1 // pred_check_branch
      %34 = sbr.rel (0) target = $region21
    $region20: #{model_forward.1} parent=1 // pred_region
      _
    $region21: #{model_forward.1} parent=1 // pred_fallthru
      _
    // Predicated region
    $region22: #{model_forward.1} parent=1 // pred_check
      _
    $region23: #{model_forward.1} parent=1 // pred_check_branch
      %36 = sbr.rel (0) target = $region25
    $region24: #{model_forward.1} parent=1 // pred_region
      _
    $region25: #{model_forward.1} parent=1 // pred_fallthru
      _
    // Predicated region
    $region26: #{model_forward.1} parent=1 // pred_check
      _
    $region27: #{model_forward.1} parent=1 // pred_check_branch
      %38 = sbr.rel (0) target = $region29
    $region28: #{model_forward.1} parent=1 // pred_region
      _
    $region29: #{model_forward.1} parent=1 // pred_fallthru
      _
    // Predicated region
    $region30: #{model_forward.1} parent=1 // pred_check
      _
    $region31: #{model_forward.1} parent=1 // pred_check_branch
      %40 = sbr.rel (0) target = $region33
    $region32: #{model_forward.1} parent=1 // pred_region
      _
    $region33: #{model_forward.1} parent=1 // pred_fallthru
      _
    // Predicated region
    $region34: #{model_forward.1} parent=1 // pred_check
      _
    $region35: #{model_forward.1} parent=1 // pred_check_branch
      %42 = sbr.rel (0) target = $region37
    $region36: #{model_forward.1} parent=1 // pred_region
      _
    $region37: #{model_forward.1} parent=1 // pred_fallthru
      _
    // Predicated region
    $region38: #{model_forward.1} parent=1 // pred_check
      _
    $region39: #{model_forward.1} parent=1 // pred_check_branch
      %44 = sbr.rel (0) target = $region41
    $region40: #{model_forward.1} parent=1 // pred_region
      _
    $region41: #{model_forward.1} parent=1 // pred_fallthru
      _
    // Predicated region
    $region42: #{model_forward.1} parent=1 // pred_check
      _
    $region43: #{model_forward.1} parent=1 // pred_check_branch
      %46 = sbr.rel (0) target = $region45
    $region44: #{model_forward.1} parent=1 // pred_region
      _
    $region45: #{model_forward.1} parent=1 // pred_fallthru
      _
    // Predicated region
    $region46: #{model_forward.1} parent=1 // pred_check
      _
    $region47: #{model_forward.1} parent=1 // pred_check_branch
      %48 = sbr.rel (0) target = $region49
    $region48: #{model_forward.1} parent=1 // pred_region
      _
    $region49: #{model_forward.1} parent=1 // pred_fallthru
      _
    // Predicated region
    $region50: #{model_forward.1} parent=1 // pred_check
      _
    $region51: #{model_forward.1} parent=1 // pred_check_branch
      %50 = sbr.rel (0) target = $region53
    $region52: #{model_forward.1} parent=1 // pred_region
      _
    $region53: #{model_forward.1} parent=1 // pred_fallthru
      _
    %v51 = vld [vmem:[%s0] sm:$0xff]
    %v52 = vld [vmem:[%s0 + $0x8] sm:$0xff]
    %v53 = vld [vmem:[%s1] sm:$0xff]
    %v54 = vld [vmem:[%s1 + $0x8] sm:$0xff]
    %v55 = vld [vmem:[%s1 + $0x10] sm:$0xff]
    %v56 = vld [vmem:[%s1 + $0x18] sm:$0xff]
    %v57 = vld [vmem:[%s3] sm:$0x1]
    %v59 = vlaneseq
    %v60 = vshrl.u32 %v59, 7
    %v61 = vsub.s32 0, %v60
    %v62 = vrot.slane %v57, %v61
    %vm64 = vcmask 261120
    %v66 = vsel %vm64, %v51, 0
    %v69 = vsel %vm64, %v52, 0
    %71 = vmatprep.subr.mxu0 0.0
    %72 = vmatpush1.msra.mxu0 %v53
    %73 = vmatprep.subr.mxu0 0.0
    %74 = vmatpush1.msra.mxu0 %v54
    %75 = vmatprep.subr.mxu0 0.0
    %76 = vmatpush1.msra.mxu0 %v55
    %77 = vmatprep.subr.mxu0 0.0
    %78 = vmatpush1.msra.mxu0 %v56
    %79 = vmatprep.subr.mxu0 0.0
    %80 = vmatpush1.msra.mxu0 0.0
    %81 = vmatprep.subr.mxu0 0.0
    %82 = vmatpush1.msra.mxu0 0.0
    %83 = vmatprep.subr.mxu0 0.0
    %84 = vmatpush1.msra.mxu0 0.0
    %85 = vmatprep.subr.mxu0 0.0
    %86 = vmatpush1.msra.mxu0 0.0
    %87 = vmatprep.subr.mxu0 0.0
    %88 = vmatpush1.msra.mxu0 0.0
    %89 = vmatprep.subr.mxu0 0.0
    %90 = vmatpush1.msra.mxu0 0.0
    %91 = vmatprep.subr.mxu0 0.0
    %92 = vmatpush1.msra.mxu0 0.0
    %93 = vmatprep.subr.mxu0 0.0
    %94 = vmatpush1.msra.mxu0 0.0
    %95 = vmatprep.subr.mxu0 0.0
    %96 = vmatpush1.msra.mxu0 0.0
    %97 = vmatprep.subr.mxu0 0.0
    %98 = vmatpush1.msra.mxu0 0.0
    %99 = vmatprep.subr.mxu0 0.0
    %100 = vmatpush1.msra.mxu0 0.0
    %101 = vmatprep.subr.mxu0 0.0
    %102 = vmatpush1.msra.mxu0 0.0
    %103 = vmatprep.subr.mxu0 0.0
    %104 = vmatpush1.msra.mxu0 0.0
    %105 = vmatprep.subr.mxu0 0.0
    %106 = vmatpush1.msra.mxu0 0.0
    %107 = vmatprep.subr.mxu0 0.0
    %108 = vmatpush1.msra.mxu0 0.0
    %109 = vmatprep.subr.mxu0 0.0
    %110 = vmatpush1.msra.mxu0 0.0
    %111 = vmatprep.subr.mxu0 0.0
    %112 = vmatpush1.msra.mxu0 0.0
    %113 = vmatprep.subr.mxu0 0.0
    %114 = vmatpush1.msra.mxu0 0.0
    %115 = vmatprep.subr.mxu0 0.0
    %116 = vmatpush1.msra.mxu0 0.0
    %117 = vmatprep.subr.mxu0 0.0
    %118 = vmatpush1.msra.mxu0 0.0
    %119 = vmatprep.subr.mxu0 0.0
    %120 = vmatpush1.msra.mxu0 0.0
    %121 = vmatprep.subr.mxu0 0.0
    %122 = vmatpush1.msra.mxu0 0.0
    %123 = vmatprep.subr.mxu0 0.0
    %124 = vmatpush1.msra.mxu0 0.0
    %125 = vmatprep.subr.mxu0 0.0
    %126 = vmatpush1.msra.mxu0 0.0
    %127 = vmatprep.subr.mxu0 0.0
    %128 = vmatpush1.msra.mxu0 0.0
    %129 = vmatprep.subr.mxu0 0.0
    %130 = vmatpush1.msra.mxu0 0.0
    %131 = vmatprep.subr.mxu0 0.0
    %132 = vmatpush1.msra.mxu0 0.0
    %133 = vmatprep.subr.mxu0 0.0
    %134 = vmatpush1.msra.mxu0 0.0
    %135 = vmatprep.mubr.f32.mxu0 0.0
    %136 = vmatmul.mubr.f32.gmra.mrb[0].mxu0 %v66
    %v137 = vpop.f32.mrb[0].mxu0
    %v138 = vadd.f32 %v62, %v137
    %v139 = vpop.f32.mrb[0].mxu0
    %140 = vmatprep.mubr.f32.mxu0 0.0
    %141 = vmatmul.mubr.f32.gmra.mrb[0].mxu0 %v69
    %v142 = vpop.f32.mrb[0].mxu0
    %v143 = vadd.f32 %v62, %v142
    %v144 = vpop.f32.mrb[0].mxu0
    %145 = vdwg.mxu0
    %s146 = scalar_lea.vmem %s1, 32
    %v147 = vld [vmem:[%s146] sm:$0xff]
    %v148 = vld [vmem:[%s146 + $0x8] sm:$0xff]
    %v149 = vld [vmem:[%s146 + $0x10] sm:$0xff]
    %v150 = vld [vmem:[%s146 + $0x18] sm:$0xff]
    %s151 = scalar_lea.vmem %s3, 1
    %v152 = vld [vmem:[%s151] sm:$0x1]
    %v154 = vlaneseq
    %v155 = vshrl.u32 %v154, 7
    %v156 = vsub.s32 0, %v155
    %v157 = vrot.slane %v152, %v156
    %159 = vmatprep.subr.mxu0 0.0
    %160 = vmatpush1.msra.mxu0 %v147
    %161 = vmatprep.subr.mxu0 0.0
    %162 = vmatpush1.msra.mxu0 %v148
    %163 = vmatprep.subr.mxu0 0.0
    %164 = vmatpush1.msra.mxu0 %v149
    %165 = vmatprep.subr.mxu0 0.0
    %166 = vmatpush1.msra.mxu0 %v150
    %167 = vmatprep.subr.mxu0 0.0
    %168 = vmatpush1.msra.mxu0 0.0
    %169 = vmatprep.subr.mxu0 0.0
    %170 = vmatpush1.msra.mxu0 0.0
    %171 = vmatprep.subr.mxu0 0.0
    %172 = vmatpush1.msra.mxu0 0.0
    %173 = vmatprep.subr.mxu0 0.0
    %174 = vmatpush1.msra.mxu0 0.0
    %175 = vmatprep.subr.mxu0 0.0
    %176 = vmatpush1.msra.mxu0 0.0
    %177 = vmatprep.subr.mxu0 0.0
    %178 = vmatpush1.msra.mxu0 0.0
    %179 = vmatprep.subr.mxu0 0.0
    %180 = vmatpush1.msra.mxu0 0.0
    %181 = vmatprep.subr.mxu0 0.0
    %182 = vmatpush1.msra.mxu0 0.0
    %183 = vmatprep.subr.mxu0 0.0
    %184 = vmatpush1.msra.mxu0 0.0
    %185 = vmatprep.subr.mxu0 0.0
    %186 = vmatpush1.msra.mxu0 0.0
    %187 = vmatprep.subr.mxu0 0.0
    %188 = vmatpush1.msra.mxu0 0.0
    %189 = vmatprep.subr.mxu0 0.0
    %190 = vmatpush1.msra.mxu0 0.0
    %191 = vmatprep.subr.mxu0 0.0
    %192 = vmatpush1.msra.mxu0 0.0
    %193 = vmatprep.subr.mxu0 0.0
    %194 = vmatpush1.msra.mxu0 0.0
    %195 = vmatprep.subr.mxu0 0.0
    %196 = vmatpush1.msra.mxu0 0.0
    %197 = vmatprep.subr.mxu0 0.0
    %198 = vmatpush1.msra.mxu0 0.0
    %199 = vmatprep.subr.mxu0 0.0
    %200 = vmatpush1.msra.mxu0 0.0
    %201 = vmatprep.subr.mxu0 0.0
    %202 = vmatpush1.msra.mxu0 0.0
    %203 = vmatprep.subr.mxu0 0.0
    %204 = vmatpush1.msra.mxu0 0.0
    %205 = vmatprep.subr.mxu0 0.0
    %206 = vmatpush1.msra.mxu0 0.0
    %207 = vmatprep.subr.mxu0 0.0
    %208 = vmatpush1.msra.mxu0 0.0
    %209 = vmatprep.subr.mxu0 0.0
    %210 = vmatpush1.msra.mxu0 0.0
    %211 = vmatprep.subr.mxu0 0.0
    %212 = vmatpush1.msra.mxu0 0.0
    %213 = vmatprep.subr.mxu0 0.0
    %214 = vmatpush1.msra.mxu0 0.0
    %215 = vmatprep.subr.mxu0 0.0
    %216 = vmatpush1.msra.mxu0 0.0
    %217 = vmatprep.subr.mxu0 0.0
    %218 = vmatpush1.msra.mxu0 0.0
    %219 = vmatprep.subr.mxu0 0.0
    %220 = vmatpush1.msra.mxu0 0.0
    %221 = vmatprep.subr.mxu0 0.0
    %222 = vmatpush1.msra.mxu0 0.0
    %223 = vmatprep.mubr.f32.mxu0 0.0
    %224 = vmatmul.mubr.f32.gmra.mrb[0].mxu0 %v66
    %v225 = vpop.f32.mrb[0].mxu0
    %v226 = vadd.f32 %v157, %v225
    %v227 = vpop.f32.mrb[0].mxu0
    %228 = vmatprep.mubr.f32.mxu0 0.0
    %229 = vmatmul.mubr.f32.gmra.mrb[0].mxu0 %v69
    %v230 = vpop.f32.mrb[0].mxu0
    %v231 = vadd.f32 %v157, %v230
    %v232 = vpop.f32.mrb[0].mxu0
    %233 = vdwg.mxu0
    %s234 = scalar_lea.vmem %s1, 64
    %v235 = vld [vmem:[%s234] sm:$0xff]
    %v236 = vld [vmem:[%s234 + $0x8] sm:$0xff]
    %v237 = vld [vmem:[%s234 + $0x10] sm:$0xff]
    %v238 = vld [vmem:[%s234 + $0x18] sm:$0xff]
    %s239 = scalar_lea.vmem %s3, 2
    %v240 = vld [vmem:[%s239] sm:$0x1]
    %v242 = vlaneseq
    %v243 = vshrl.u32 %v242, 7
    %v244 = vsub.s32 0, %v243
    %v245 = vrot.slane %v240, %v244
    %247 = vmatprep.subr.mxu0 0.0
    %248 = vmatpush1.msra.mxu0 %v235
    %249 = vmatprep.subr.mxu0 0.0
    %250 = vmatpush1.msra.mxu0 %v236
    %251 = vmatprep.subr.mxu0 0.0
    %252 = vmatpush1.msra.mxu0 %v237
    %253 = vmatprep.subr.mxu0 0.0
    %254 = vmatpush1.msra.mxu0 %v238
    %255 = vmatprep.subr.mxu0 0.0
    %256 = vmatpush1.msra.mxu0 0.0
    %257 = vmatprep.subr.mxu0 0.0
    %258 = vmatpush1.msra.mxu0 0.0
    %259 = vmatprep.subr.mxu0 0.0
    %260 = vmatpush1.msra.mxu0 0.0
    %261 = vmatprep.subr.mxu0 0.0
    %262 = vmatpush1.msra.mxu0 0.0
    %263 = vmatprep.subr.mxu0 0.0
    %264 = vmatpush1.msra.mxu0 0.0
    %265 = vmatprep.subr.mxu0 0.0
    %266 = vmatpush1.msra.mxu0 0.0
    %267 = vmatprep.subr.mxu0 0.0
    %268 = vmatpush1.msra.mxu0 0.0
    %269 = vmatprep.subr.mxu0 0.0
    %270 = vmatpush1.msra.mxu0 0.0
    %271 = vmatprep.subr.mxu0 0.0
    %272 = vmatpush1.msra.mxu0 0.0
    %273 = vmatprep.subr.mxu0 0.0
    %274 = vmatpush1.msra.mxu0 0.0
    %275 = vmatprep.subr.mxu0 0.0
    %276 = vmatpush1.msra.mxu0 0.0
    %277 = vmatprep.subr.mxu0 0.0
    %278 = vmatpush1.msra.mxu0 0.0
    %279 = vmatprep.subr.mxu0 0.0
    %280 = vmatpush1.msra.mxu0 0.0
    %281 = vmatprep.subr.mxu0 0.0
    %282 = vmatpush1.msra.mxu0 0.0
    %283 = vmatprep.subr.mxu0 0.0
    %284 = vmatpush1.msra.mxu0 0.0
    %285 = vmatprep.subr.mxu0 0.0
    %286 = vmatpush1.msra.mxu0 0.0
    %287 = vmatprep.subr.mxu0 0.0
    %288 = vmatpush1.msra.mxu0 0.0
    %289 = vmatprep.subr.mxu0 0.0
    %290 = vmatpush1.msra.mxu0 0.0
    %291 = vmatprep.subr.mxu0 0.0
    %292 = vmatpush1.msra.mxu0 0.0
    %293 = vmatprep.subr.mxu0 0.0
    %294 = vmatpush1.msra.mxu0 0.0
    %295 = vmatprep.subr.mxu0 0.0
    %296 = vmatpush1.msra.mxu0 0.0
    %297 = vmatprep.subr.mxu0 0.0
    %298 = vmatpush1.msra.mxu0 0.0
    %299 = vmatprep.subr.mxu0 0.0
    %300 = vmatpush1.msra.mxu0 0.0
    %301 = vmatprep.subr.mxu0 0.0
    %302 = vmatpush1.msra.mxu0 0.0
    %303 = vmatprep.subr.mxu0 0.0
    %304 = vmatpush1.msra.mxu0 0.0
    %305 = vmatprep.subr.mxu0 0.0
    %306 = vmatpush1.msra.mxu0 0.0
    %307 = vmatprep.subr.mxu0 0.0
    %308 = vmatpush1.msra.mxu0 0.0
    %309 = vmatprep.subr.mxu0 0.0
    %310 = vmatpush1.msra.mxu0 0.0
    %311 = vmatprep.mubr.f32.mxu0 0.0
    %312 = vmatmul.mubr.f32.gmra.mrb[0].mxu0 %v66
    %v313 = vpop.f32.mrb[0].mxu0
    %v314 = vadd.f32 %v245, %v313
    %v315 = vpop.f32.mrb[0].mxu0
    %316 = vmatprep.mubr.f32.mxu0 0.0
    %317 = vmatmul.mubr.f32.gmra.mrb[0].mxu0 %v69
    %v318 = vpop.f32.mrb[0].mxu0
    %v319 = vadd.f32 %v245, %v318
    %v320 = vpop.f32.mrb[0].mxu0
    %321 = vdwg.mxu0
    %s322 = scalar_lea.vmem %s1, 96
    %v323 = vld [vmem:[%s322] sm:$0xff]
    %v324 = vld [vmem:[%s322 + $0x8] sm:$0xff]
    %v325 = vld [vmem:[%s322 + $0x10] sm:$0xff]
    %v326 = vld [vmem:[%s322 + $0x18] sm:$0xff]
    %s327 = scalar_lea.vmem %s3, 3
    %v328 = vld [vmem:[%s327] sm:$0x1]
    %v330 = vlaneseq
    %v331 = vshrl.u32 %v330, 7
    %v332 = vsub.s32 0, %v331
    %v333 = vrot.slane %v328, %v332
    %335 = vmatprep.subr.mxu0 0.0
    %336 = vmatpush1.msra.mxu0 %v323
    %337 = vmatprep.subr.mxu0 0.0
    %338 = vmatpush1.msra.mxu0 %v324
    %339 = vmatprep.subr.mxu0 0.0
    %340 = vmatpush1.msra.mxu0 %v325
    %341 = vmatprep.subr.mxu0 0.0
    %342 = vmatpush1.msra.mxu0 %v326
    %343 = vmatprep.subr.mxu0 0.0
    %344 = vmatpush1.msra.mxu0 0.0
    %345 = vmatprep.subr.mxu0 0.0
    %346 = vmatpush1.msra.mxu0 0.0
    %347 = vmatprep.subr.mxu0 0.0
    %348 = vmatpush1.msra.mxu0 0.0
    %349 = vmatprep.subr.mxu0 0.0
    %350 = vmatpush1.msra.mxu0 0.0
    %351 = vmatprep.subr.mxu0 0.0
    %352 = vmatpush1.msra.mxu0 0.0
    %353 = vmatprep.subr.mxu0 0.0
    %354 = vmatpush1.msra.mxu0 0.0
    %355 = vmatprep.subr.mxu0 0.0
    %356 = vmatpush1.msra.mxu0 0.0
    %357 = vmatprep.subr.mxu0 0.0
    %358 = vmatpush1.msra.mxu0 0.0
    %359 = vmatprep.subr.mxu0 0.0
    %360 = vmatpush1.msra.mxu0 0.0
    %361 = vmatprep.subr.mxu0 0.0
    %362 = vmatpush1.msra.mxu0 0.0
    %363 = vmatprep.subr.mxu0 0.0
    %364 = vmatpush1.msra.mxu0 0.0
    %365 = vmatprep.subr.mxu0 0.0
    %366 = vmatpush1.msra.mxu0 0.0
    %367 = vmatprep.subr.mxu0 0.0
    %368 = vmatpush1.msra.mxu0 0.0
    %369 = vmatprep.subr.mxu0 0.0
    %370 = vmatpush1.msra.mxu0 0.0
    %371 = vmatprep.subr.mxu0 0.0
    %372 = vmatpush1.msra.mxu0 0.0
    %373 = vmatprep.subr.mxu0 0.0
    %374 = vmatpush1.msra.mxu0 0.0
    %375 = vmatprep.subr.mxu0 0.0
    %376 = vmatpush1.msra.mxu0 0.0
    %377 = vmatprep.subr.mxu0 0.0
    %378 = vmatpush1.msra.mxu0 0.0
    %379 = vmatprep.subr.mxu0 0.0
    %380 = vmatpush1.msra.mxu0 0.0
    %381 = vmatprep.subr.mxu0 0.0
    %382 = vmatpush1.msra.mxu0 0.0
    %383 = vmatprep.subr.mxu0 0.0
    %384 = vmatpush1.msra.mxu0 0.0
    %385 = vmatprep.subr.mxu0 0.0
    %386 = vmatpush1.msra.mxu0 0.0
    %387 = vmatprep.subr.mxu0 0.0
    %388 = vmatpush1.msra.mxu0 0.0
    %389 = vmatprep.subr.mxu0 0.0
    %390 = vmatpush1.msra.mxu0 0.0
    %391 = vmatprep.subr.mxu0 0.0
    %392 = vmatpush1.msra.mxu0 0.0
    %393 = vmatprep.subr.mxu0 0.0
    %394 = vmatpush1.msra.mxu0 0.0
    %395 = vmatprep.subr.mxu0 0.0
    %396 = vmatpush1.msra.mxu0 0.0
    %397 = vmatprep.subr.mxu0 0.0
    %398 = vmatpush1.msra.mxu0 0.0
    %399 = vmatprep.mubr.f32.mxu0 0.0
    %400 = vmatmul.mubr.f32.gmra.mrb[0].mxu0 %v66
    %v401 = vpop.f32.mrb[0].mxu0
    %v402 = vadd.f32 %v333, %v401
    %v403 = vpop.f32.mrb[0].mxu0
    %404 = vmatprep.mubr.f32.mxu0 0.0
    %405 = vmatmul.mubr.f32.gmra.mrb[0].mxu0 %v69
    %v406 = vpop.f32.mrb[0].mxu0
    %v407 = vadd.f32 %v333, %v406
    %v408 = vpop.f32.mrb[0].mxu0
    %409 = vdwg.mxu0
    %v410 = vld [vmem:[%s2] sm:$0xff]
    %v411 = vld [vmem:[%s2 + $0x8] sm:$0xff]
    %v412 = vld [vmem:[%s2 + $0x10] sm:$0xff]
    %v413 = vld [vmem:[%s2 + $0x18] sm:$0xff]
    %s414 = scalar_lea.vmem %s2, 32
    %v415 = vld [vmem:[%s414] sm:$0xff]
    %v416 = vld [vmem:[%s414 + $0x8] sm:$0xff]
    %v417 = vld [vmem:[%s414 + $0x10] sm:$0xff]
    %v418 = vld [vmem:[%s414 + $0x18] sm:$0xff]
    %s419 = scalar_lea.vmem %s2, 64
    %v420 = vld [vmem:[%s419] sm:$0xff]
    %v421 = vld [vmem:[%s419 + $0x8] sm:$0xff]
    %v422 = vld [vmem:[%s419 + $0x10] sm:$0xff]
    %v423 = vld [vmem:[%s419 + $0x18] sm:$0xff]
    %s424 = scalar_lea.vmem %s2, 96
    %v425 = vld [vmem:[%s424] sm:$0xff]
    %v426 = vld [vmem:[%s424 + $0x8] sm:$0xff]
    %v427 = vld [vmem:[%s424 + $0x10] sm:$0xff]
    %v428 = vld [vmem:[%s424 + $0x18] sm:$0xff]
    %v430 = vsel %vm64, 0.0, 0
    %432 = vmatprep.subr.mxu0 0.0
    %433 = vmatpush1.msra.mxu0 %v410
    %434 = vmatprep.subr.mxu0 0.0
    %435 = vmatpush1.msra.mxu0 %v411
    %436 = vmatprep.subr.mxu0 0.0
    %437 = vmatpush1.msra.mxu0 %v412
    %438 = vmatprep.subr.mxu0 0.0
    %439 = vmatpush1.msra.mxu0 %v413
    %440 = vmatprep.subr.mxu0 0.0
    %441 = vmatpush1.msra.mxu0 0.0
    %442 = vmatprep.subr.mxu0 0.0
    %443 = vmatpush1.msra.mxu0 0.0
    %444 = vmatprep.subr.mxu0 0.0
    %445 = vmatpush1.msra.mxu0 0.0
    %446 = vmatprep.subr.mxu0 0.0
    %447 = vmatpush1.msra.mxu0 0.0
    %448 = vmatprep.subr.mxu0 0.0
    %449 = vmatpush1.msra.mxu0 0.0
    %450 = vmatprep.subr.mxu0 0.0
    %451 = vmatpush1.msra.mxu0 0.0
    %452 = vmatprep.subr.mxu0 0.0
    %453 = vmatpush1.msra.mxu0 0.0
    %454 = vmatprep.subr.mxu0 0.0
    %455 = vmatpush1.msra.mxu0 0.0
    %456 = vmatprep.subr.mxu0 0.0
    %457 = vmatpush1.msra.mxu0 0.0
    %458 = vmatprep.subr.mxu0 0.0
    %459 = vmatpush1.msra.mxu0 0.0
    %460 = vmatprep.subr.mxu0 0.0
    %461 = vmatpush1.msra.mxu0 0.0
    %462 = vmatprep.subr.mxu0 0.0
    %463 = vmatpush1.msra.mxu0 0.0
    %464 = vmatprep.subr.mxu0 0.0
    %465 = vmatpush1.msra.mxu0 0.0
    %466 = vmatprep.subr.mxu0 0.0
    %467 = vmatpush1.msra.mxu0 0.0
    %468 = vmatprep.subr.mxu0 0.0
    %469 = vmatpush1.msra.mxu0 0.0
    %470 = vmatprep.subr.mxu0 0.0
    %471 = vmatpush1.msra.mxu0 0.0
    %472 = vmatprep.subr.mxu0 0.0
    %473 = vmatpush1.msra.mxu0 0.0
    %474 = vmatprep.subr.mxu0 0.0
    %475 = vmatpush1.msra.mxu0 0.0
    %476 = vmatprep.subr.mxu0 0.0
    %477 = vmatpush1.msra.mxu0 0.0
    %478 = vmatprep.subr.mxu0 0.0
    %479 = vmatpush1.msra.mxu0 0.0
    %480 = vmatprep.subr.mxu0 0.0
    %481 = vmatpush1.msra.mxu0 0.0
    %482 = vmatprep.subr.mxu0 0.0
    %483 = vmatpush1.msra.mxu0 0.0
    %484 = vmatprep.subr.mxu0 0.0
    %485 = vmatpush1.msra.mxu0 0.0
    %486 = vmatprep.subr.mxu0 0.0
    %487 = vmatpush1.msra.mxu0 0.0
    %488 = vmatprep.subr.mxu0 0.0
    %489 = vmatpush1.msra.mxu0 0.0
    %490 = vmatprep.subr.mxu0 0.0
    %491 = vmatpush1.msra.mxu0 0.0
    %492 = vmatprep.subr.mxu0 0.0
    %493 = vmatpush1.msra.mxu0 0.0
    %494 = vmatprep.subr.mxu0 0.0
    %495 = vmatpush1.msra.mxu0 0.0
    %496 = vmatprep.mubr.f32.mxu0 0.0
    %497 = vmatmul.mubr.f32.gmra.mrb[0].mxu0 %v430
    %v498 = vpop.f32.mrb[0].mxu0
    %v499 = vadd.f32 0.0, %v498
    %v500 = vpop.f32.mrb[0].mxu0
    %501 = vdwg.mxu0
    %v502 = vadd.f32 %v138, %v499
    %v503 = vxor.u32 %v502, 2147483648
    %v504 = vmul.f32 %v503, 1.442695
    %v505 = vpow.pop %v504
    %v506 = vadd.f32 %v505, 1.0
    %v507 = vrcp.pop %v506
    %v508 = vmul.f32 1.0, %v507
    %509 = vmatprep.subr.mxu0 0.0
    %510 = vmatpush1.msra.mxu0 %v415
    %511 = vmatprep.subr.mxu0 0.0
    %512 = vmatpush1.msra.mxu0 %v416
    %513 = vmatprep.subr.mxu0 0.0
    %514 = vmatpush1.msra.mxu0 %v417
    %515 = vmatprep.subr.mxu0 0.0
    %516 = vmatpush1.msra.mxu0 %v418
    %517 = vmatprep.subr.mxu0 0.0
    %518 = vmatpush1.msra.mxu0 0.0
    %519 = vmatprep.subr.mxu0 0.0
    %520 = vmatpush1.msra.mxu0 0.0
    %521 = vmatprep.subr.mxu0 0.0
    %522 = vmatpush1.msra.mxu0 0.0
    %523 = vmatprep.subr.mxu0 0.0
    %524 = vmatpush1.msra.mxu0 0.0
    %525 = vmatprep.subr.mxu0 0.0
    %526 = vmatpush1.msra.mxu0 0.0
    %527 = vmatprep.subr.mxu0 0.0
    %528 = vmatpush1.msra.mxu0 0.0
    %529 = vmatprep.subr.mxu0 0.0
    %530 = vmatpush1.msra.mxu0 0.0
    %531 = vmatprep.subr.mxu0 0.0
    %532 = vmatpush1.msra.mxu0 0.0
    %533 = vmatprep.subr.mxu0 0.0
    %534 = vmatpush1.msra.mxu0 0.0
    %535 = vmatprep.subr.mxu0 0.0
    %536 = vmatpush1.msra.mxu0 0.0
    %537 = vmatprep.subr.mxu0 0.0
    %538 = vmatpush1.msra.mxu0 0.0
    %539 = vmatprep.subr.mxu0 0.0
    %540 = vmatpush1.msra.mxu0 0.0
    %541 = vmatprep.subr.mxu0 0.0
    %542 = vmatpush1.msra.mxu0 0.0
    %543 = vmatprep.subr.mxu0 0.0
    %544 = vmatpush1.msra.mxu0 0.0
    %545 = vmatprep.subr.mxu0 0.0
    %546 = vmatpush1.msra.mxu0 0.0
    %547 = vmatprep.subr.mxu0 0.0
    %548 = vmatpush1.msra.mxu0 0.0
    %549 = vmatprep.subr.mxu0 0.0
    %550 = vmatpush1.msra.mxu0 0.0
    %551 = vmatprep.subr.mxu0 0.0
    %552 = vmatpush1.msra.mxu0 0.0
    %553 = vmatprep.subr.mxu0 0.0
    %554 = vmatpush1.msra.mxu0 0.0
    %555 = vmatprep.subr.mxu0 0.0
    %556 = vmatpush1.msra.mxu0 0.0
    %557 = vmatprep.subr.mxu0 0.0
    %558 = vmatpush1.msra.mxu0 0.0
    %559 = vmatprep.subr.mxu0 0.0
    %560 = vmatpush1.msra.mxu0 0.0
    %561 = vmatprep.subr.mxu0 0.0
    %562 = vmatpush1.msra.mxu0 0.0
    %563 = vmatprep.subr.mxu0 0.0
    %564 = vmatpush1.msra.mxu0 0.0
    %565 = vmatprep.subr.mxu0 0.0
    %566 = vmatpush1.msra.mxu0 0.0
    %567 = vmatprep.subr.mxu0 0.0
    %568 = vmatpush1.msra.mxu0 0.0
    %569 = vmatprep.subr.mxu0 0.0
    %570 = vmatpush1.msra.mxu0 0.0
    %571 = vmatprep.subr.mxu0 0.0
    %572 = vmatpush1.msra.mxu0 0.0
    %573 = vmatprep.mubr.f32.mxu0 0.0
    %574 = vmatmul.mubr.f32.gmra.mrb[0].mxu0 %v430
    %v575 = vpop.f32.mrb[0].mxu0
    %v576 = vadd.f32 0.0, %v575
    %v577 = vpop.f32.mrb[0].mxu0
    %578 = vdwg.mxu0
    %v579 = vadd.f32 %v226, %v576
    %v580 = vxor.u32 %v579, 2147483648
    %v581 = vmul.f32 %v580, 1.442695
    %v582 = vpow.pop %v581
    %v583 = vadd.f32 %v582, 1.0
    %v584 = vrcp.pop %v583
    %v585 = vmul.f32 1.0, %v584
    %586 = vmatprep.subr.mxu0 0.0
    %587 = vmatpush1.msra.mxu0 %v420
    %588 = vmatprep.subr.mxu0 0.0
    %589 = vmatpush1.msra.mxu0 %v421
    %590 = vmatprep.subr.mxu0 0.0
    %591 = vmatpush1.msra.mxu0 %v422
    %592 = vmatprep.subr.mxu0 0.0
    %593 = vmatpush1.msra.mxu0 %v423
    %594 = vmatprep.subr.mxu0 0.0
    %595 = vmatpush1.msra.mxu0 0.0
    %596 = vmatprep.subr.mxu0 0.0
    %597 = vmatpush1.msra.mxu0 0.0
    %598 = vmatprep.subr.mxu0 0.0
    %599 = vmatpush1.msra.mxu0 0.0
    %600 = vmatprep.subr.mxu0 0.0
    %601 = vmatpush1.msra.mxu0 0.0
    %602 = vmatprep.subr.mxu0 0.0
    %603 = vmatpush1.msra.mxu0 0.0
    %604 = vmatprep.subr.mxu0 0.0
    %605 = vmatpush1.msra.mxu0 0.0
    %606 = vmatprep.subr.mxu0 0.0
    %607 = vmatpush1.msra.mxu0 0.0
    %608 = vmatprep.subr.mxu0 0.0
    %609 = vmatpush1.msra.mxu0 0.0
    %610 = vmatprep.subr.mxu0 0.0
    %611 = vmatpush1.msra.mxu0 0.0
    %612 = vmatprep.subr.mxu0 0.0
    %613 = vmatpush1.msra.mxu0 0.0
    %614 = vmatprep.subr.mxu0 0.0
    %615 = vmatpush1.msra.mxu0 0.0
    %616 = vmatprep.subr.mxu0 0.0
    %617 = vmatpush1.msra.mxu0 0.0
    %618 = vmatprep.subr.mxu0 0.0
    %619 = vmatpush1.msra.mxu0 0.0
    %620 = vmatprep.subr.mxu0 0.0
    %621 = vmatpush1.msra.mxu0 0.0
    %622 = vmatprep.subr.mxu0 0.0
    %623 = vmatpush1.msra.mxu0 0.0
    %624 = vmatprep.subr.mxu0 0.0
    %625 = vmatpush1.msra.mxu0 0.0
    %626 = vmatprep.subr.mxu0 0.0
    %627 = vmatpush1.msra.mxu0 0.0
    %628 = vmatprep.subr.mxu0 0.0
    %629 = vmatpush1.msra.mxu0 0.0
    %630 = vmatprep.subr.mxu0 0.0
    %631 = vmatpush1.msra.mxu0 0.0
    %632 = vmatprep.subr.mxu0 0.0
    %633 = vmatpush1.msra.mxu0 0.0
    %634 = vmatprep.subr.mxu0 0.0
    %635 = vmatpush1.msra.mxu0 0.0
    %636 = vmatprep.subr.mxu0 0.0
    %637 = vmatpush1.msra.mxu0 0.0
    %638 = vmatprep.subr.mxu0 0.0
    %639 = vmatpush1.msra.mxu0 0.0
    %640 = vmatprep.subr.mxu0 0.0
    %641 = vmatpush1.msra.mxu0 0.0
    %642 = vmatprep.subr.mxu0 0.0
    %643 = vmatpush1.msra.mxu0 0.0
    %644 = vmatprep.subr.mxu0 0.0
    %645 = vmatpush1.msra.mxu0 0.0
    %646 = vmatprep.subr.mxu0 0.0
    %647 = vmatpush1.msra.mxu0 0.0
    %648 = vmatprep.subr.mxu0 0.0
    %649 = vmatpush1.msra.mxu0 0.0
    %650 = vmatprep.mubr.f32.mxu0 0.0
    %651 = vmatmul.mubr.f32.gmra.mrb[0].mxu0 %v430
    %v652 = vpop.f32.mrb[0].mxu0
    %v653 = vadd.f32 0.0, %v652
    %v654 = vpop.f32.mrb[0].mxu0
    %655 = vdwg.mxu0
    %v656 = vadd.f32 %v314, %v653
    %v657 = vtanh.pop %v656
    %658 = vmatprep.subr.mxu0 0.0
    %659 = vmatpush1.msra.mxu0 %v425
    %660 = vmatprep.subr.mxu0 0.0
    %661 = vmatpush1.msra.mxu0 %v426
    %662 = vmatprep.subr.mxu0 0.0
    %663 = vmatpush1.msra.mxu0 %v427
    %664 = vmatprep.subr.mxu0 0.0
    %665 = vmatpush1.msra.mxu0 %v428
    %666 = vmatprep.subr.mxu0 0.0
    %667 = vmatpush1.msra.mxu0 0.0
    %668 = vmatprep.subr.mxu0 0.0
    %669 = vmatpush1.msra.mxu0 0.0
    %670 = vmatprep.subr.mxu0 0.0
    %671 = vmatpush1.msra.mxu0 0.0
    %672 = vmatprep.subr.mxu0 0.0
    %673 = vmatpush1.msra.mxu0 0.0
    %674 = vmatprep.subr.mxu0 0.0
    %675 = vmatpush1.msra.mxu0 0.0
    %676 = vmatprep.subr.mxu0 0.0
    %677 = vmatpush1.msra.mxu0 0.0
    %678 = vmatprep.subr.mxu0 0.0
    %679 = vmatpush1.msra.mxu0 0.0
    %680 = vmatprep.subr.mxu0 0.0
    %681 = vmatpush1.msra.mxu0 0.0
    %682 = vmatprep.subr.mxu0 0.0
    %683 = vmatpush1.msra.mxu0 0.0
    %684 = vmatprep.subr.mxu0 0.0
    %685 = vmatpush1.msra.mxu0 0.0
    %686 = vmatprep.subr.mxu0 0.0
    %687 = vmatpush1.msra.mxu0 0.0
    %688 = vmatprep.subr.mxu0 0.0
    %689 = vmatpush1.msra.mxu0 0.0
    %690 = vmatprep.subr.mxu0 0.0
    %691 = vmatpush1.msra.mxu0 0.0
    %692 = vmatprep.subr.mxu0 0.0
    %693 = vmatpush1.msra.mxu0 0.0
    %694 = vmatprep.subr.mxu0 0.0
    %695 = vmatpush1.msra.mxu0 0.0
    %696 = vmatprep.subr.mxu0 0.0
    %697 = vmatpush1.msra.mxu0 0.0
    %698 = vmatprep.subr.mxu0 0.0
    %699 = vmatpush1.msra.mxu0 0.0
    %700 = vmatprep.subr.mxu0 0.0
    %701 = vmatpush1.msra.mxu0 0.0
    %702 = vmatprep.subr.mxu0 0.0
    %703 = vmatpush1.msra.mxu0 0.0
    %704 = vmatprep.subr.mxu0 0.0
    %705 = vmatpush1.msra.mxu0 0.0
    %706 = vmatprep.subr.mxu0 0.0
    %707 = vmatpush1.msra.mxu0 0.0
    %708 = vmatprep.subr.mxu0 0.0
    %709 = vmatpush1.msra.mxu0 0.0
    %710 = vmatprep.subr.mxu0 0.0
    %711 = vmatpush1.msra.mxu0 0.0
    %712 = vmatprep.subr.mxu0 0.0
    %713 = vmatpush1.msra.mxu0 0.0
    %714 = vmatprep.subr.mxu0 0.0
    %715 = vmatpush1.msra.mxu0 0.0
    %716 = vmatprep.subr.mxu0 0.0
    %717 = vmatpush1.msra.mxu0 0.0
    %718 = vmatprep.subr.mxu0 0.0
    %719 = vmatpush1.msra.mxu0 0.0
    %720 = vmatprep.subr.mxu0 0.0
    %721 = vmatpush1.msra.mxu0 0.0
    %722 = vmatprep.mubr.f32.mxu0 0.0
    %723 = vmatmul.mubr.f32.gmra.mrb[0].mxu0 %v430
    %v724 = vpop.f32.mrb[0].mxu0
    %v725 = vadd.f32 0.0, %v724
    %v726 = vpop.f32.mrb[0].mxu0
    %727 = vdwg.mxu0
    %v728 = vadd.f32 %v402, %v725
    %v729 = vxor.u32 %v728, 2147483648
    %v730 = vmul.f32 %v729, 1.442695
    %v731 = vpow.pop %v730
    %v732 = vadd.f32 %v731, 1.0
    %v733 = vrcp.pop %v732
    %v734 = vmul.f32 1.0, %v733
    %v735 = vmul.f32 %v585, 0.0
    %v736 = vmul.f32 %v508, %v657
    %v737 = vadd.f32 %v735, %v736
    %v738 = vtanh.pop %v737
    %v739 = vmul.f32 %v734, %v738
    %v742 = vunpack.c.l.s4 1966171168
    %v743 = vunpack.c.0.s8 %v742
    %v744 = vlaneseq
    %v745 = vshrl.u32 %v744, 7
    %v746 = vsub.s32 %v743, %v745
    %v747 = vrot.slane %v739, %v746
    %v748 = vcombine.high %v747, %v747
    %v750 = vunpack.c.l.s4 1966171168
    %v751 = vunpack.c.0.s8 %v750
    %v752 = vlaneseq
    %v753 = vshrl.u32 %v752, 7
    %v754 = vsub.s32 %v751, %v753
    %v755 = vrot.slane %v747, %v754
    %v757 = vunpack.c.l.s4 1966171168
    %v758 = vunpack.c.0.s8 %v757
    %v759 = vlaneseq
    %v760 = vshrl.u32 %v759, 7
    %v761 = vsub.s32 %v758, %v760
    %v762 = vrot.slane %v748, %v761
    %vm765 = vcmask 253952
    %766 = vst.msk [vmem:[#allocation2] sm:$0x1] %vm765, %v755
    %767 = vst.msk [vmem:[#allocation2 + $0x8] sm:$0x1] %vm765, %v762
    %v768 = vsel %vm64, %v739, 0
    %770 = vmatprep.subr.mxu0 0.0
    %771 = vmatpush1.msra.mxu0 %v410
    %772 = vmatprep.subr.mxu0 0.0
    %773 = vmatpush1.msra.mxu0 %v411
    %774 = vmatprep.subr.mxu0 0.0
    %775 = vmatpush1.msra.mxu0 %v412
    %776 = vmatprep.subr.mxu0 0.0
    %777 = vmatpush1.msra.mxu0 %v413
    %778 = vmatprep.subr.mxu0 0.0
    %779 = vmatpush1.msra.mxu0 0.0
    %780 = vmatprep.subr.mxu0 0.0
    %781 = vmatpush1.msra.mxu0 0.0
    %782 = vmatprep.subr.mxu0 0.0
    %783 = vmatpush1.msra.mxu0 0.0
    %784 = vmatprep.subr.mxu0 0.0
    %785 = vmatpush1.msra.mxu0 0.0
    %786 = vmatprep.subr.mxu0 0.0
    %787 = vmatpush1.msra.mxu0 0.0
    %788 = vmatprep.subr.mxu0 0.0
    %789 = vmatpush1.msra.mxu0 0.0
    %790 = vmatprep.subr.mxu0 0.0
    %791 = vmatpush1.msra.mxu0 0.0
    %792 = vmatprep.subr.mxu0 0.0
    %793 = vmatpush1.msra.mxu0 0.0
    %794 = vmatprep.subr.mxu0 0.0
    %795 = vmatpush1.msra.mxu0 0.0
    %796 = vmatprep.subr.mxu0 0.0
    %797 = vmatpush1.msra.mxu0 0.0
    %798 = vmatprep.subr.mxu0 0.0
    %799 = vmatpush1.msra.mxu0 0.0
    %800 = vmatprep.subr.mxu0 0.0
    %801 = vmatpush1.msra.mxu0 0.0
    %802 = vmatprep.subr.mxu0 0.0
    %803 = vmatpush1.msra.mxu0 0.0
    %804 = vmatprep.subr.mxu0 0.0
    %805 = vmatpush1.msra.mxu0 0.0
    %806 = vmatprep.subr.mxu0 0.0
    %807 = vmatpush1.msra.mxu0 0.0
    %808 = vmatprep.subr.mxu0 0.0
    %809 = vmatpush1.msra.mxu0 0.0
    %810 = vmatprep.subr.mxu0 0.0
    %811 = vmatpush1.msra.mxu0 0.0
    %812 = vmatprep.subr.mxu0 0.0
    %813 = vmatpush1.msra.mxu0 0.0
    %814 = vmatprep.subr.mxu0 0.0
    %815 = vmatpush1.msra.mxu0 0.0
    %816 = vmatprep.subr.mxu0 0.0
    %817 = vmatpush1.msra.mxu0 0.0
    %818 = vmatprep.subr.mxu0 0.0
    %819 = vmatpush1.msra.mxu0 0.0
    %820 = vmatprep.subr.mxu0 0.0
    %821 = vmatpush1.msra.mxu0 0.0
    %822 = vmatprep.subr.mxu0 0.0
    %823 = vmatpush1.msra.mxu0 0.0
    %824 = vmatprep.subr.mxu0 0.0
    %825 = vmatpush1.msra.mxu0 0.0
    %826 = vmatprep.subr.mxu0 0.0
    %827 = vmatpush1.msra.mxu0 0.0
    %828 = vmatprep.subr.mxu0 0.0
    %829 = vmatpush1.msra.mxu0 0.0
    %830 = vmatprep.subr.mxu0 0.0
    %831 = vmatpush1.msra.mxu0 0.0
    %832 = vmatprep.subr.mxu0 0.0
    %833 = vmatpush1.msra.mxu0 0.0
    %834 = vmatprep.mubr.f32.mxu0 0.0
    %835 = vmatmul.mubr.f32.gmra.mrb[0].mxu0 %v768
    %v836 = vpop.f32.mrb[0].mxu0
    %v837 = vadd.f32 0.0, %v836
    %v838 = vpop.f32.mrb[0].mxu0
    %839 = vdwg.mxu0
    %v841 = vrot.slane %v837, 6
    %v843 = vadd.f32 %v138, %v841
    %v844 = vxor.u32 %v843, 2147483648
    %v845 = vmul.f32 %v844, 1.442695
    %v846 = vpow.pop %v845
    %v847 = vadd.f32 %v846, 1.0
    %v848 = vrcp.pop %v847
    %v849 = vmul.f32 1.0, %v848
    %850 = vmatprep.subr.mxu0 0.0
    %851 = vmatpush1.msra.mxu0 %v415
    %852 = vmatprep.subr.mxu0 0.0
    %853 = vmatpush1.msra.mxu0 %v416
    %854 = vmatprep.subr.mxu0 0.0
    %855 = vmatpush1.msra.mxu0 %v417
    %856 = vmatprep.subr.mxu0 0.0
    %857 = vmatpush1.msra.mxu0 %v418
    %858 = vmatprep.subr.mxu0 0.0
    %859 = vmatpush1.msra.mxu0 0.0
    %860 = vmatprep.subr.mxu0 0.0
    %861 = vmatpush1.msra.mxu0 0.0
    %862 = vmatprep.subr.mxu0 0.0
    %863 = vmatpush1.msra.mxu0 0.0
    %864 = vmatprep.subr.mxu0 0.0
    %865 = vmatpush1.msra.mxu0 0.0
    %866 = vmatprep.subr.mxu0 0.0
    %867 = vmatpush1.msra.mxu0 0.0
    %868 = vmatprep.subr.mxu0 0.0
    %869 = vmatpush1.msra.mxu0 0.0
    %870 = vmatprep.subr.mxu0 0.0
    %871 = vmatpush1.msra.mxu0 0.0
    %872 = vmatprep.subr.mxu0 0.0
    %873 = vmatpush1.msra.mxu0 0.0
    %874 = vmatprep.subr.mxu0 0.0
    %875 = vmatpush1.msra.mxu0 0.0
    %876 = vmatprep.subr.mxu0 0.0
    %877 = vmatpush1.msra.mxu0 0.0
    %878 = vmatprep.subr.mxu0 0.0
    %879 = vmatpush1.msra.mxu0 0.0
    %880 = vmatprep.subr.mxu0 0.0
    %881 = vmatpush1.msra.mxu0 0.0
    %882 = vmatprep.subr.mxu0 0.0
    %883 = vmatpush1.msra.mxu0 0.0
    %884 = vmatprep.subr.mxu0 0.0
    %885 = vmatpush1.msra.mxu0 0.0
    %886 = vmatprep.subr.mxu0 0.0
    %887 = vmatpush1.msra.mxu0 0.0
    %888 = vmatprep.subr.mxu0 0.0
    %889 = vmatpush1.msra.mxu0 0.0
    %890 = vmatprep.subr.mxu0 0.0
    %891 = vmatpush1.msra.mxu0 0.0
    %892 = vmatprep.subr.mxu0 0.0
    %893 = vmatpush1.msra.mxu0 0.0
    %894 = vmatprep.subr.mxu0 0.0
    %895 = vmatpush1.msra.mxu0 0.0
    %896 = vmatprep.subr.mxu0 0.0
    %897 = vmatpush1.msra.mxu0 0.0
    %898 = vmatprep.subr.mxu0 0.0
    %899 = vmatpush1.msra.mxu0 0.0
    %900 = vmatprep.subr.mxu0 0.0
    %901 = vmatpush1.msra.mxu0 0.0
    %902 = vmatprep.subr.mxu0 0.0
    %903 = vmatpush1.msra.mxu0 0.0
    %904 = vmatprep.subr.mxu0 0.0
    %905 = vmatpush1.msra.mxu0 0.0
    %906 = vmatprep.subr.mxu0 0.0
    %907 = vmatpush1.msra.mxu0 0.0
    %908 = vmatprep.subr.mxu0 0.0
    %909 = vmatpush1.msra.mxu0 0.0
    %910 = vmatprep.subr.mxu0 0.0
    %911 = vmatpush1.msra.mxu0 0.0
    %912 = vmatprep.subr.mxu0 0.0
    %913 = vmatpush1.msra.mxu0 0.0
    %914 = vmatprep.mubr.f32.mxu0 0.0
    %915 = vmatmul.mubr.f32.gmra.mrb[0].mxu0 %v768
    %v916 = vpop.f32.mrb[0].mxu0
    %v917 = vadd.f32 0.0, %v916
    %v918 = vpop.f32.mrb[0].mxu0
    %919 = vdwg.mxu0
    %v921 = vrot.slane %v917, 6
    %v923 = vadd.f32 %v226, %v921
    %v924 = vxor.u32 %v923, 2147483648
    %v925 = vmul.f32 %v924, 1.442695
    %v926 = vpow.pop %v925
    %v927 = vadd.f32 %v926, 1.0
    %v928 = vrcp.pop %v927
    %v929 = vmul.f32 1.0, %v928
    %930 = vmatprep.subr.mxu0 0.0
    %931 = vmatpush1.msra.mxu0 %v420
    %932 = vmatprep.subr.mxu0 0.0
    %933 = vmatpush1.msra.mxu0 %v421
    %934 = vmatprep.subr.mxu0 0.0
    %935 = vmatpush1.msra.mxu0 %v422
    %936 = vmatprep.subr.mxu0 0.0
    %937 = vmatpush1.msra.mxu0 %v423
    %938 = vmatprep.subr.mxu0 0.0
    %939 = vmatpush1.msra.mxu0 0.0
    %940 = vmatprep.subr.mxu0 0.0
    %941 = vmatpush1.msra.mxu0 0.0
    %942 = vmatprep.subr.mxu0 0.0
    %943 = vmatpush1.msra.mxu0 0.0
    %944 = vmatprep.subr.mxu0 0.0
    %945 = vmatpush1.msra.mxu0 0.0
    %946 = vmatprep.subr.mxu0 0.0
    %947 = vmatpush1.msra.mxu0 0.0
    %948 = vmatprep.subr.mxu0 0.0
    %949 = vmatpush1.msra.mxu0 0.0
    %950 = vmatprep.subr.mxu0 0.0
    %951 = vmatpush1.msra.mxu0 0.0
    %952 = vmatprep.subr.mxu0 0.0
    %953 = vmatpush1.msra.mxu0 0.0
    %954 = vmatprep.subr.mxu0 0.0
    %955 = vmatpush1.msra.mxu0 0.0
    %956 = vmatprep.subr.mxu0 0.0
    %957 = vmatpush1.msra.mxu0 0.0
    %958 = vmatprep.subr.mxu0 0.0
    %959 = vmatpush1.msra.mxu0 0.0
    %960 = vmatprep.subr.mxu0 0.0
    %961 = vmatpush1.msra.mxu0 0.0
    %962 = vmatprep.subr.mxu0 0.0
    %963 = vmatpush1.msra.mxu0 0.0
    %964 = vmatprep.subr.mxu0 0.0
    %965 = vmatpush1.msra.mxu0 0.0
    %966 = vmatprep.subr.mxu0 0.0
    %967 = vmatpush1.msra.mxu0 0.0
    %968 = vmatprep.subr.mxu0 0.0
    %969 = vmatpush1.msra.mxu0 0.0
    %970 = vmatprep.subr.mxu0 0.0
    %971 = vmatpush1.msra.mxu0 0.0
    %972 = vmatprep.subr.mxu0 0.0
    %973 = vmatpush1.msra.mxu0 0.0
    %974 = vmatprep.subr.mxu0 0.0
    %975 = vmatpush1.msra.mxu0 0.0
    %976 = vmatprep.subr.mxu0 0.0
    %977 = vmatpush1.msra.mxu0 0.0
    %978 = vmatprep.subr.mxu0 0.0
    %979 = vmatpush1.msra.mxu0 0.0
    %980 = vmatprep.subr.mxu0 0.0
    %981 = vmatpush1.msra.mxu0 0.0
    %982 = vmatprep.subr.mxu0 0.0
    %983 = vmatpush1.msra.mxu0 0.0
    %984 = vmatprep.subr.mxu0 0.0
    %985 = vmatpush1.msra.mxu0 0.0
    %986 = vmatprep.subr.mxu0 0.0
    %987 = vmatpush1.msra.mxu0 0.0
    %988 = vmatprep.subr.mxu0 0.0
    %989 = vmatpush1.msra.mxu0 0.0
    %990 = vmatprep.subr.mxu0 0.0
    %991 = vmatpush1.msra.mxu0 0.0
    %992 = vmatprep.subr.mxu0 0.0
    %993 = vmatpush1.msra.mxu0 0.0
    %994 = vmatprep.mubr.f32.mxu0 0.0
    %995 = vmatmul.mubr.f32.gmra.mrb[0].mxu0 %v768
    %v996 = vpop.f32.mrb[0].mxu0
    %v997 = vadd.f32 0.0, %v996
    %v998 = vpop.f32.mrb[0].mxu0
    %999 = vdwg.mxu0
    %v1001 = vrot.slane %v997, 6
    %v1003 = vadd.f32 %v314, %v1001
    %v1004 = vtanh.pop %v1003
    %1005 = vmatprep.subr.mxu0 0.0
    %1006 = vmatpush1.msra.mxu0 %v425
    %1007 = vmatprep.subr.mxu0 0.0
    %1008 = vmatpush1.msra.mxu0 %v426
    %1009 = vmatprep.subr.mxu0 0.0
    %1010 = vmatpush1.msra.mxu0 %v427
    %1011 = vmatprep.subr.mxu0 0.0
    %1012 = vmatpush1.msra.mxu0 %v428
    %1013 = vmatprep.subr.mxu0 0.0
    %1014 = vmatpush1.msra.mxu0 0.0
    %1015 = vmatprep.subr.mxu0 0.0
    %1016 = vmatpush1.msra.mxu0 0.0
    %1017 = vmatprep.subr.mxu0 0.0
    %1018 = vmatpush1.msra.mxu0 0.0
    %1019 = vmatprep.subr.mxu0 0.0
    %1020 = vmatpush1.msra.mxu0 0.0
    %1021 = vmatprep.subr.mxu0 0.0
    %1022 = vmatpush1.msra.mxu0 0.0
    %1023 = vmatprep.subr.mxu0 0.0
    %1024 = vmatpush1.msra.mxu0 0.0
    %1025 = vmatprep.subr.mxu0 0.0
    %1026 = vmatpush1.msra.mxu0 0.0
    %1027 = vmatprep.subr.mxu0 0.0
    %1028 = vmatpush1.msra.mxu0 0.0
    %1029 = vmatprep.subr.mxu0 0.0
    %1030 = vmatpush1.msra.mxu0 0.0
    %1031 = vmatprep.subr.mxu0 0.0
    %1032 = vmatpush1.msra.mxu0 0.0
    %1033 = vmatprep.subr.mxu0 0.0
    %1034 = vmatpush1.msra.mxu0 0.0
    %1035 = vmatprep.subr.mxu0 0.0
    %1036 = vmatpush1.msra.mxu0 0.0
    %1037 = vmatprep.subr.mxu0 0.0
    %1038 = vmatpush1.msra.mxu0 0.0
    %1039 = vmatprep.subr.mxu0 0.0
    %1040 = vmatpush1.msra.mxu0 0.0
    %1041 = vmatprep.subr.mxu0 0.0
    %1042 = vmatpush1.msra.mxu0 0.0
    %1043 = vmatprep.subr.mxu0 0.0
    %1044 = vmatpush1.msra.mxu0 0.0
    %1045 = vmatprep.subr.mxu0 0.0
    %1046 = vmatpush1.msra.mxu0 0.0
    %1047 = vmatprep.subr.mxu0 0.0
    %1048 = vmatpush1.msra.mxu0 0.0
    %1049 = vmatprep.subr.mxu0 0.0
    %1050 = vmatpush1.msra.mxu0 0.0
    %1051 = vmatprep.subr.mxu0 0.0
    %1052 = vmatpush1.msra.mxu0 0.0
    %1053 = vmatprep.subr.mxu0 0.0
    %1054 = vmatpush1.msra.mxu0 0.0
    %1055 = vmatprep.subr.mxu0 0.0
    %1056 = vmatpush1.msra.mxu0 0.0
    %1057 = vmatprep.subr.mxu0 0.0
    %1058 = vmatpush1.msra.mxu0 0.0
    %1059 = vmatprep.subr.mxu0 0.0
    %1060 = vmatpush1.msra.mxu0 0.0
    %1061 = vmatprep.subr.mxu0 0.0
    %1062 = vmatpush1.msra.mxu0 0.0
    %1063 = vmatprep.subr.mxu0 0.0
    %1064 = vmatpush1.msra.mxu0 0.0
    %1065 = vmatprep.subr.mxu0 0.0
    %1066 = vmatpush1.msra.mxu0 0.0
    %1067 = vmatprep.subr.mxu0 0.0
    %1068 = vmatpush1.msra.mxu0 0.0
    %1069 = vmatprep.mubr.f32.mxu0 0.0
    %1070 = vmatmul.mubr.f32.gmra.mrb[0].mxu0 %v768
    %v1071 = vpop.f32.mrb[0].mxu0
    %v1072 = vadd.f32 0.0, %v1071
    %v1073 = vpop.f32.mrb[0].mxu0
    %1074 = vdwg.mxu0
    %v1076 = vrot.slane %v1072, 6
    %v1078 = vadd.f32 %v402, %v1076
    %v1079 = vxor.u32 %v1078, 2147483648
    %v1080 = vmul.f32 %v1079, 1.442695
    %v1081 = vpow.pop %v1080
    %v1082 = vadd.f32 %v1081, 1.0
    %v1083 = vrcp.pop %v1082
    %v1084 = vmul.f32 1.0, %v1083
    %v1086 = vrot.slane %v737, 6
    %v1088 = vmul.f32 %v929, %v1086
    %v1089 = vmul.f32 %v849, %v1004
    %v1090 = vadd.f32 %v1088, %v1089
    %v1091 = vtanh.pop %v1090
    %v1092 = vmul.f32 %v1084, %v1091
    %v1095 = vunpack.c.l.s4 1966171168
    %v1096 = vunpack.c.0.s8 %v1095
    %v1097 = vlaneseq
    %v1098 = vshrl.u32 %v1097, 7
    %v1099 = vsub.s32 %v1096, %v1098
    %v1100 = vrot.slane %v1092, %v1099
    %v1101 = vcombine.high %v1100, %v1100
    %v1103 = vunpack.c.l.s4 1966171168
    %v1104 = vunpack.c.0.s8 %v1103
    %v1105 = vlaneseq
    %v1106 = vshrl.u32 %v1105, 7
    %v1107 = vsub.s32 %v1104, %v1106
    %v1108 = vrot.slane %v1100, %v1107
    %v1110 = vunpack.c.l.s4 1966171168
    %v1111 = vunpack.c.0.s8 %v1110
    %v1112 = vlaneseq
    %v1113 = vshrl.u32 %v1112, 7
    %v1114 = vsub.s32 %v1111, %v1113
    %v1115 = vrot.slane %v1101, %v1114
    %v1116 = vcombine.high %v1108, %v1108
    %v1117 = vcombine.high %v1115, %v1115
    %1120 = vst.msk [vmem:[#allocation2 + $0x1] sm:$0x1] %vm765, %v1116
    %1121 = vst.msk [vmem:[#allocation2 + $0x9] sm:$0x1] %vm765, %v1117
    %v1122 = vrot.slane %v1092, 2
    %v1123 = vsel %vm64, %v1122, 0
    %1125 = vmatprep.subr.mxu0 0.0
    %1126 = vmatpush1.msra.mxu0 %v410
    %1127 = vmatprep.subr.mxu0 0.0
    %1128 = vmatpush1.msra.mxu0 %v411
    %1129 = vmatprep.subr.mxu0 0.0
    %1130 = vmatpush1.msra.mxu0 %v412
    %1131 = vmatprep.subr.mxu0 0.0
    %1132 = vmatpush1.msra.mxu0 %v413
    %1133 = vmatprep.subr.mxu0 0.0
    %1134 = vmatpush1.msra.mxu0 0.0
    %1135 = vmatprep.subr.mxu0 0.0
    %1136 = vmatpush1.msra.mxu0 0.0
    %1137 = vmatprep.subr.mxu0 0.0
    %1138 = vmatpush1.msra.mxu0 0.0
    %1139 = vmatprep.subr.mxu0 0.0
    %1140 = vmatpush1.msra.mxu0 0.0
    %1141 = vmatprep.subr.mxu0 0.0
    %1142 = vmatpush1.msra.mxu0 0.0
    %1143 = vmatprep.subr.mxu0 0.0
    %1144 = vmatpush1.msra.mxu0 0.0
    %1145 = vmatprep.subr.mxu0 0.0
    %1146 = vmatpush1.msra.mxu0 0.0
    %1147 = vmatprep.subr.mxu0 0.0
    %1148 = vmatpush1.msra.mxu0 0.0
    %1149 = vmatprep.subr.mxu0 0.0
    %1150 = vmatpush1.msra.mxu0 0.0
    %1151 = vmatprep.subr.mxu0 0.0
    %1152 = vmatpush1.msra.mxu0 0.0
    %1153 = vmatprep.subr.mxu0 0.0
    %1154 = vmatpush1.msra.mxu0 0.0
    %1155 = vmatprep.subr.mxu0 0.0
    %1156 = vmatpush1.msra.mxu0 0.0
    %1157 = vmatprep.subr.mxu0 0.0
    %1158 = vmatpush1.msra.mxu0 0.0
    %1159 = vmatprep.subr.mxu0 0.0
    %1160 = vmatpush1.msra.mxu0 0.0
    %1161 = vmatprep.subr.mxu0 0.0
    %1162 = vmatpush1.msra.mxu0 0.0
    %1163 = vmatprep.subr.mxu0 0.0
    %1164 = vmatpush1.msra.mxu0 0.0
    %1165 = vmatprep.subr.mxu0 0.0
    %1166 = vmatpush1.msra.mxu0 0.0
    %1167 = vmatprep.subr.mxu0 0.0
    %1168 = vmatpush1.msra.mxu0 0.0
    %1169 = vmatprep.subr.mxu0 0.0
    %1170 = vmatpush1.msra.mxu0 0.0
    %1171 = vmatprep.subr.mxu0 0.0
    %1172 = vmatpush1.msra.mxu0 0.0
    %1173 = vmatprep.subr.mxu0 0.0
    %1174 = vmatpush1.msra.mxu0 0.0
    %1175 = vmatprep.subr.mxu0 0.0
    %1176 = vmatpush1.msra.mxu0 0.0
    %1177 = vmatprep.subr.mxu0 0.0
    %1178 = vmatpush1.msra.mxu0 0.0
    %1179 = vmatprep.subr.mxu0 0.0
    %1180 = vmatpush1.msra.mxu0 0.0
    %1181 = vmatprep.subr.mxu0 0.0
    %1182 = vmatpush1.msra.mxu0 0.0
    %1183 = vmatprep.subr.mxu0 0.0
    %1184 = vmatpush1.msra.mxu0 0.0
    %1185 = vmatprep.subr.mxu0 0.0
    %1186 = vmatpush1.msra.mxu0 0.0
    %1187 = vmatprep.subr.mxu0 0.0
    %1188 = vmatpush1.msra.mxu0 0.0
    %1189 = vmatprep.mubr.f32.mxu0 0.0
    %1190 = vmatmul.mubr.f32.gmra.mrb[0].mxu0 %v1123
    %v1191 = vpop.f32.mrb[0].mxu0
    %v1192 = vadd.f32 0.0, %v1191
    %v1193 = vpop.f32.mrb[0].mxu0
    %1194 = vdwg.mxu0
    %v1196 = vrot.slane %v1192, 4
    %v1198 = vadd.f32 %v138, %v1196
    %v1199 = vxor.u32 %v1198, 2147483648
    %v1200 = vmul.f32 %v1199, 1.442695
    %v1201 = vpow.pop %v1200
    %v1202 = vadd.f32 %v1201, 1.0
    %v1203 = vrcp.pop %v1202
    %v1204 = vmul.f32 1.0, %v1203
    %1205 = vmatprep.subr.mxu0 0.0
    %1206 = vmatpush1.msra.mxu0 %v415
    %1207 = vmatprep.subr.mxu0 0.0
    %1208 = vmatpush1.msra.mxu0 %v416
    %1209 = vmatprep.subr.mxu0 0.0
    %1210 = vmatpush1.msra.mxu0 %v417
    %1211 = vmatprep.subr.mxu0 0.0
    %1212 = vmatpush1.msra.mxu0 %v418
    %1213 = vmatprep.subr.mxu0 0.0
    %1214 = vmatpush1.msra.mxu0 0.0
    %1215 = vmatprep.subr.mxu0 0.0
    %1216 = vmatpush1.msra.mxu0 0.0
    %1217 = vmatprep.subr.mxu0 0.0
    %1218 = vmatpush1.msra.mxu0 0.0
    %1219 = vmatprep.subr.mxu0 0.0
    %1220 = vmatpush1.msra.mxu0 0.0
    %1221 = vmatprep.subr.mxu0 0.0
    %1222 = vmatpush1.msra.mxu0 0.0
    %1223 = vmatprep.subr.mxu0 0.0
    %1224 = vmatpush1.msra.mxu0 0.0
    %1225 = vmatprep.subr.mxu0 0.0
    %1226 = vmatpush1.msra.mxu0 0.0
    %1227 = vmatprep.subr.mxu0 0.0
    %1228 = vmatpush1.msra.mxu0 0.0
    %1229 = vmatprep.subr.mxu0 0.0
    %1230 = vmatpush1.msra.mxu0 0.0
    %1231 = vmatprep.subr.mxu0 0.0
    %1232 = vmatpush1.msra.mxu0 0.0
    %1233 = vmatprep.subr.mxu0 0.0
    %1234 = vmatpush1.msra.mxu0 0.0
    %1235 = vmatprep.subr.mxu0 0.0
    %1236 = vmatpush1.msra.mxu0 0.0
    %1237 = vmatprep.subr.mxu0 0.0
    %1238 = vmatpush1.msra.mxu0 0.0
    %1239 = vmatprep.subr.mxu0 0.0
    %1240 = vmatpush1.msra.mxu0 0.0
    %1241 = vmatprep.subr.mxu0 0.0
    %1242 = vmatpush1.msra.mxu0 0.0
    %1243 = vmatprep.subr.mxu0 0.0
    %1244 = vmatpush1.msra.mxu0 0.0
    %1245 = vmatprep.subr.mxu0 0.0
    %1246 = vmatpush1.msra.mxu0 0.0
    %1247 = vmatprep.subr.mxu0 0.0
    %1248 = vmatpush1.msra.mxu0 0.0
    %1249 = vmatprep.subr.mxu0 0.0
    %1250 = vmatpush1.msra.mxu0 0.0
    %1251 = vmatprep.subr.mxu0 0.0
    %1252 = vmatpush1.msra.mxu0 0.0
    %1253 = vmatprep.subr.mxu0 0.0
    %1254 = vmatpush1.msra.mxu0 0.0
    %1255 = vmatprep.subr.mxu0 0.0
    %1256 = vmatpush1.msra.mxu0 0.0
    %1257 = vmatprep.subr.mxu0 0.0
    %1258 = vmatpush1.msra.mxu0 0.0
    %1259 = vmatprep.subr.mxu0 0.0
    %1260 = vmatpush1.msra.mxu0 0.0
    %1261 = vmatprep.subr.mxu0 0.0
    %1262 = vmatpush1.msra.mxu0 0.0
    %1263 = vmatprep.subr.mxu0 0.0
    %1264 = vmatpush1.msra.mxu0 0.0
    %1265 = vmatprep.subr.mxu0 0.0
    %1266 = vmatpush1.msra.mxu0 0.0
    %1267 = vmatprep.subr.mxu0 0.0
    %1268 = vmatpush1.msra.mxu0 0.0
    %1269 = vmatprep.mubr.f32.mxu0 0.0
    %1270 = vmatmul.mubr.f32.gmra.mrb[0].mxu0 %v1123
    %v1271 = vpop.f32.mrb[0].mxu0
    %v1272 = vadd.f32 0.0, %v1271
    %v1273 = vpop.f32.mrb[0].mxu0
    %1274 = vdwg.mxu0
    %v1276 = vrot.slane %v1272, 4
    %v1278 = vadd.f32 %v226, %v1276
    %v1279 = vxor.u32 %v1278, 2147483648
    %v1280 = vmul.f32 %v1279, 1.442695
    %v1281 = vpow.pop %v1280
    %v1282 = vadd.f32 %v1281, 1.0
    %v1283 = vrcp.pop %v1282
    %v1284 = vmul.f32 1.0, %v1283
    %1285 = vmatprep.subr.mxu0 0.0
    %1286 = vmatpush1.msra.mxu0 %v420
    %1287 = vmatprep.subr.mxu0 0.0
    %1288 = vmatpush1.msra.mxu0 %v421
    %1289 = vmatprep.subr.mxu0 0.0
    %1290 = vmatpush1.msra.mxu0 %v422
    %1291 = vmatprep.subr.mxu0 0.0
    %1292 = vmatpush1.msra.mxu0 %v423
    %1293 = vmatprep.subr.mxu0 0.0
    %1294 = vmatpush1.msra.mxu0 0.0
    %1295 = vmatprep.subr.mxu0 0.0
    %1296 = vmatpush1.msra.mxu0 0.0
    %1297 = vmatprep.subr.mxu0 0.0
    %1298 = vmatpush1.msra.mxu0 0.0
    %1299 = vmatprep.subr.mxu0 0.0
    %1300 = vmatpush1.msra.mxu0 0.0
    %1301 = vmatprep.subr.mxu0 0.0
    %1302 = vmatpush1.msra.mxu0 0.0
    %1303 = vmatprep.subr.mxu0 0.0
    %1304 = vmatpush1.msra.mxu0 0.0
    %1305 = vmatprep.subr.mxu0 0.0
    %1306 = vmatpush1.msra.mxu0 0.0
    %1307 = vmatprep.subr.mxu0 0.0
    %1308 = vmatpush1.msra.mxu0 0.0
    %1309 = vmatprep.subr.mxu0 0.0
    %1310 = vmatpush1.msra.mxu0 0.0
    %1311 = vmatprep.subr.mxu0 0.0
    %1312 = vmatpush1.msra.mxu0 0.0
    %1313 = vmatprep.subr.mxu0 0.0
    %1314 = vmatpush1.msra.mxu0 0.0
    %1315 = vmatprep.subr.mxu0 0.0
    %1316 = vmatpush1.msra.mxu0 0.0
    %1317 = vmatprep.subr.mxu0 0.0
    %1318 = vmatpush1.msra.mxu0 0.0
    %1319 = vmatprep.subr.mxu0 0.0
    %1320 = vmatpush1.msra.mxu0 0.0
    %1321 = vmatprep.subr.mxu0 0.0
    %1322 = vmatpush1.msra.mxu0 0.0
    %1323 = vmatprep.subr.mxu0 0.0
    %1324 = vmatpush1.msra.mxu0 0.0
    %1325 = vmatprep.subr.mxu0 0.0
    %1326 = vmatpush1.msra.mxu0 0.0
    %1327 = vmatprep.subr.mxu0 0.0
    %1328 = vmatpush1.msra.mxu0 0.0
    %1329 = vmatprep.subr.mxu0 0.0
    %1330 = vmatpush1.msra.mxu0 0.0
    %1331 = vmatprep.subr.mxu0 0.0
    %1332 = vmatpush1.msra.mxu0 0.0
    %1333 = vmatprep.subr.mxu0 0.0
    %1334 = vmatpush1.msra.mxu0 0.0
    %1335 = vmatprep.subr.mxu0 0.0
    %1336 = vmatpush1.msra.mxu0 0.0
    %1337 = vmatprep.subr.mxu0 0.0
    %1338 = vmatpush1.msra.mxu0 0.0
    %1339 = vmatprep.subr.mxu0 0.0
    %1340 = vmatpush1.msra.mxu0 0.0
    %1341 = vmatprep.subr.mxu0 0.0
    %1342 = vmatpush1.msra.mxu0 0.0
    %1343 = vmatprep.subr.mxu0 0.0
    %1344 = vmatpush1.msra.mxu0 0.0
    %1345 = vmatprep.subr.mxu0 0.0
    %1346 = vmatpush1.msra.mxu0 0.0
    %1347 = vmatprep.subr.mxu0 0.0
    %1348 = vmatpush1.msra.mxu0 0.0
    %1349 = vmatprep.mubr.f32.mxu0 0.0
    %1350 = vmatmul.mubr.f32.gmra.mrb[0].mxu0 %v1123
    %v1351 = vpop.f32.mrb[0].mxu0
    %v1352 = vadd.f32 0.0, %v1351
    %v1353 = vpop.f32.mrb[0].mxu0
    %1354 = vdwg.mxu0
    %v1356 = vrot.slane %v1352, 4
    %v1358 = vadd.f32 %v314, %v1356
    %v1359 = vtanh.pop %v1358
    %1360 = vmatprep.subr.mxu0 0.0
    %1361 = vmatpush1.msra.mxu0 %v425
    %1362 = vmatprep.subr.mxu0 0.0
    %1363 = vmatpush1.msra.mxu0 %v426
    %1364 = vmatprep.subr.mxu0 0.0
    %1365 = vmatpush1.msra.mxu0 %v427
    %1366 = vmatprep.subr.mxu0 0.0
    %1367 = vmatpush1.msra.mxu0 %v428
    %1368 = vmatprep.subr.mxu0 0.0
    %1369 = vmatpush1.msra.mxu0 0.0
    %1370 = vmatprep.subr.mxu0 0.0
    %1371 = vmatpush1.msra.mxu0 0.0
    %1372 = vmatprep.subr.mxu0 0.0
    %1373 = vmatpush1.msra.mxu0 0.0
    %1374 = vmatprep.subr.mxu0 0.0
    %1375 = vmatpush1.msra.mxu0 0.0
    %1376 = vmatprep.subr.mxu0 0.0
    %1377 = vmatpush1.msra.mxu0 0.0
    %1378 = vmatprep.subr.mxu0 0.0
    %1379 = vmatpush1.msra.mxu0 0.0
    %1380 = vmatprep.subr.mxu0 0.0
    %1381 = vmatpush1.msra.mxu0 0.0
    %1382 = vmatprep.subr.mxu0 0.0
    %1383 = vmatpush1.msra.mxu0 0.0
    %1384 = vmatprep.subr.mxu0 0.0
    %1385 = vmatpush1.msra.mxu0 0.0
    %1386 = vmatprep.subr.mxu0 0.0
    %1387 = vmatpush1.msra.mxu0 0.0
    %1388 = vmatprep.subr.mxu0 0.0
    %1389 = vmatpush1.msra.mxu0 0.0
    %1390 = vmatprep.subr.mxu0 0.0
    %1391 = vmatpush1.msra.mxu0 0.0
    %1392 = vmatprep.subr.mxu0 0.0
    %1393 = vmatpush1.msra.mxu0 0.0
    %1394 = vmatprep.subr.mxu0 0.0
    %1395 = vmatpush1.msra.mxu0 0.0
    %1396 = vmatprep.subr.mxu0 0.0
    %1397 = vmatpush1.msra.mxu0 0.0
    %1398 = vmatprep.subr.mxu0 0.0
    %1399 = vmatpush1.msra.mxu0 0.0
    %1400 = vmatprep.subr.mxu0 0.0
    %1401 = vmatpush1.msra.mxu0 0.0
    %1402 = vmatprep.subr.mxu0 0.0
    %1403 = vmatpush1.msra.mxu0 0.0
    %1404 = vmatprep.subr.mxu0 0.0
    %1405 = vmatpush1.msra.mxu0 0.0
    %1406 = vmatprep.subr.mxu0 0.0
    %1407 = vmatpush1.msra.mxu0 0.0
    %1408 = vmatprep.subr.mxu0 0.0
    %1409 = vmatpush1.msra.mxu0 0.0
    %1410 = vmatprep.subr.mxu0 0.0
    %1411 = vmatpush1.msra.mxu0 0.0
    %1412 = vmatprep.subr.mxu0 0.0
    %1413 = vmatpush1.msra.mxu0 0.0
    %1414 = vmatprep.subr.mxu0 0.0
    %1415 = vmatpush1.msra.mxu0 0.0
    %1416 = vmatprep.subr.mxu0 0.0
    %1417 = vmatpush1.msra.mxu0 0.0
    %1418 = vmatprep.subr.mxu0 0.0
    %1419 = vmatpush1.msra.mxu0 0.0
    %1420 = vmatprep.subr.mxu0 0.0
    %1421 = vmatpush1.msra.mxu0 0.0
    %1422 = vmatprep.subr.mxu0 0.0
    %1423 = vmatpush1.msra.mxu0 0.0
    %1424 = vmatprep.mubr.f32.mxu0 0.0
    %1425 = vmatmul.mubr.f32.gmra.mrb[0].mxu0 %v1123
    %v1426 = vpop.f32.mrb[0].mxu0
    %v1427 = vadd.f32 0.0, %v1426
    %v1428 = vpop.f32.mrb[0].mxu0
    %1429 = vdwg.mxu0
    %v1431 = vrot.slane %v1427, 4
    %v1433 = vadd.f32 %v402, %v1431
    %v1434 = vxor.u32 %v1433, 2147483648
    %v1435 = vmul.f32 %v1434, 1.442695
    %v1436 = vpow.pop %v1435
    %v1437 = vadd.f32 %v1436, 1.0
    %v1438 = vrcp.pop %v1437
    %v1439 = vmul.f32 1.0, %v1438
    %v1441 = vrot.slane %v1090, 6
    %v1443 = vmul.f32 %v1284, %v1441
    %v1444 = vmul.f32 %v1204, %v1359
    %v1445 = vadd.f32 %v1443, %v1444
    %v1446 = vtanh.pop %v1445
    %v1447 = vmul.f32 %v1439, %v1446
    %v1449 = vcombine.high %v1447, %v1447
    %v1451 = vunpack.c.l.s4 1966171168
    %v1452 = vunpack.c.0.s8 %v1451
    %v1453 = vlaneseq
    %v1454 = vshrl.u32 %v1453, 7
    %v1455 = vsub.s32 %v1452, %v1454
    %v1456 = vrot.slane %v1449, %v1455
    %v1457 = vcombine.high %v1456, %v1456
    %v1459 = vunpack.c.l.s4 1966171168
    %v1460 = vunpack.c.0.s8 %v1459
    %v1461 = vlaneseq
    %v1462 = vshrl.u32 %v1461, 7
    %v1463 = vsub.s32 %v1460, %v1462
    %v1464 = vrot.slane %v1456, %v1463
    %v1466 = vunpack.c.l.s4 1966171168
    %v1467 = vunpack.c.0.s8 %v1466
    %v1468 = vlaneseq
    %v1469 = vshrl.u32 %v1468, 7
    %v1470 = vsub.s32 %v1467, %v1469
    %v1471 = vrot.slane %v1457, %v1470
    %1474 = vst.msk [vmem:[#allocation2 + $0x2] sm:$0x1] %vm765, %v1464
    %1475 = vst.msk [vmem:[#allocation2 + $0xa] sm:$0x1] %vm765, %v1471
    %v1476 = vrot.slane %v1447, 4
    %v1477 = vsel %vm64, %v1476, 0
    %1479 = vmatprep.subr.mxu0 0.0
    %1480 = vmatpush1.msra.mxu0 %v410
    %1481 = vmatprep.subr.mxu0 0.0
    %1482 = vmatpush1.msra.mxu0 %v411
    %1483 = vmatprep.subr.mxu0 0.0
    %1484 = vmatpush1.msra.mxu0 %v412
    %1485 = vmatprep.subr.mxu0 0.0
    %1486 = vmatpush1.msra.mxu0 %v413
    %1487 = vmatprep.subr.mxu0 0.0
    %1488 = vmatpush1.msra.mxu0 0.0
    %1489 = vmatprep.subr.mxu0 0.0
    %1490 = vmatpush1.msra.mxu0 0.0
    %1491 = vmatprep.subr.mxu0 0.0
    %1492 = vmatpush1.msra.mxu0 0.0
    %1493 = vmatprep.subr.mxu0 0.0
    %1494 = vmatpush1.msra.mxu0 0.0
    %1495 = vmatprep.subr.mxu0 0.0
    %1496 = vmatpush1.msra.mxu0 0.0
    %1497 = vmatprep.subr.mxu0 0.0
    %1498 = vmatpush1.msra.mxu0 0.0
    %1499 = vmatprep.subr.mxu0 0.0
    %1500 = vmatpush1.msra.mxu0 0.0
    %1501 = vmatprep.subr.mxu0 0.0
    %1502 = vmatpush1.msra.mxu0 0.0
    %1503 = vmatprep.subr.mxu0 0.0
    %1504 = vmatpush1.msra.mxu0 0.0
    %1505 = vmatprep.subr.mxu0 0.0
    %1506 = vmatpush1.msra.mxu0 0.0
    %1507 = vmatprep.subr.mxu0 0.0
    %1508 = vmatpush1.msra.mxu0 0.0
    %1509 = vmatprep.subr.mxu0 0.0
    %1510 = vmatpush1.msra.mxu0 0.0
    %1511 = vmatprep.subr.mxu0 0.0
    %1512 = vmatpush1.msra.mxu0 0.0
    %1513 = vmatprep.subr.mxu0 0.0
    %1514 = vmatpush1.msra.mxu0 0.0
    %1515 = vmatprep.subr.mxu0 0.0
    %1516 = vmatpush1.msra.mxu0 0.0
    %1517 = vmatprep.subr.mxu0 0.0
    %1518 = vmatpush1.msra.mxu0 0.0
    %1519 = vmatprep.subr.mxu0 0.0
    %1520 = vmatpush1.msra.mxu0 0.0
    %1521 = vmatprep.subr.mxu0 0.0
    %1522 = vmatpush1.msra.mxu0 0.0
    %1523 = vmatprep.subr.mxu0 0.0
    %1524 = vmatpush1.msra.mxu0 0.0
    %1525 = vmatprep.subr.mxu0 0.0
    %1526 = vmatpush1.msra.mxu0 0.0
    %1527 = vmatprep.subr.mxu0 0.0
    %1528 = vmatpush1.msra.mxu0 0.0
    %1529 = vmatprep.subr.mxu0 0.0
    %1530 = vmatpush1.msra.mxu0 0.0
    %1531 = vmatprep.subr.mxu0 0.0
    %1532 = vmatpush1.msra.mxu0 0.0
    %1533 = vmatprep.subr.mxu0 0.0
    %1534 = vmatpush1.msra.mxu0 0.0
    %1535 = vmatprep.subr.mxu0 0.0
    %1536 = vmatpush1.msra.mxu0 0.0
    %1537 = vmatprep.subr.mxu0 0.0
    %1538 = vmatpush1.msra.mxu0 0.0
    %1539 = vmatprep.subr.mxu0 0.0
    %1540 = vmatpush1.msra.mxu0 0.0
    %1541 = vmatprep.subr.mxu0 0.0
    %1542 = vmatpush1.msra.mxu0 0.0
    %1543 = vmatprep.mubr.f32.mxu0 0.0
    %1544 = vmatmul.mubr.f32.gmra.mrb[0].mxu0 %v1477
    %v1545 = vpop.f32.mrb[0].mxu0
    %v1546 = vadd.f32 0.0, %v1545
    %v1547 = vpop.f32.mrb[0].mxu0
    %1548 = vdwg.mxu0
    %v1550 = vrot.slane %v1546, 2
    %v1552 = vadd.f32 %v138, %v1550
    %v1553 = vxor.u32 %v1552, 2147483648
    %v1554 = vmul.f32 %v1553, 1.442695
    %v1555 = vpow.pop %v1554
    %v1556 = vadd.f32 %v1555, 1.0
    %v1557 = vrcp.pop %v1556
    %v1558 = vmul.f32 1.0, %v1557
    %1559 = vmatprep.subr.mxu0 0.0
    %1560 = vmatpush1.msra.mxu0 %v415
    %1561 = vmatprep.subr.mxu0 0.0
    %1562 = vmatpush1.msra.mxu0 %v416
    %1563 = vmatprep.subr.mxu0 0.0
    %1564 = vmatpush1.msra.mxu0 %v417
    %1565 = vmatprep.subr.mxu0 0.0
    %1566 = vmatpush1.msra.mxu0 %v418
    %1567 = vmatprep.subr.mxu0 0.0
    %1568 = vmatpush1.msra.mxu0 0.0
    %1569 = vmatprep.subr.mxu0 0.0
    %1570 = vmatpush1.msra.mxu0 0.0
    %1571 = vmatprep.subr.mxu0 0.0
    %1572 = vmatpush1.msra.mxu0 0.0
    %1573 = vmatprep.subr.mxu0 0.0
    %1574 = vmatpush1.msra.mxu0 0.0
    %1575 = vmatprep.subr.mxu0 0.0
    %1576 = vmatpush1.msra.mxu0 0.0
    %1577 = vmatprep.subr.mxu0 0.0
    %1578 = vmatpush1.msra.mxu0 0.0
    %1579 = vmatprep.subr.mxu0 0.0
    %1580 = vmatpush1.msra.mxu0 0.0
    %1581 = vmatprep.subr.mxu0 0.0
    %1582 = vmatpush1.msra.mxu0 0.0
    %1583 = vmatprep.subr.mxu0 0.0
    %1584 = vmatpush1.msra.mxu0 0.0
    %1585 = vmatprep.subr.mxu0 0.0
    %1586 = vmatpush1.msra.mxu0 0.0
    %1587 = vmatprep.subr.mxu0 0.0
    %1588 = vmatpush1.msra.mxu0 0.0
    %1589 = vmatprep.subr.mxu0 0.0
    %1590 = vmatpush1.msra.mxu0 0.0
    %1591 = vmatprep.subr.mxu0 0.0
    %1592 = vmatpush1.msra.mxu0 0.0
    %1593 = vmatprep.subr.mxu0 0.0
    %1594 = vmatpush1.msra.mxu0 0.0
    %1595 = vmatprep.subr.mxu0 0.0
    %1596 = vmatpush1.msra.mxu0 0.0
    %1597 = vmatprep.subr.mxu0 0.0
    %1598 = vmatpush1.msra.mxu0 0.0
    %1599 = vmatprep.subr.mxu0 0.0
    %1600 = vmatpush1.msra.mxu0 0.0
    %1601 = vmatprep.subr.mxu0 0.0
    %1602 = vmatpush1.msra.mxu0 0.0
    %1603 = vmatprep.subr.mxu0 0.0
    %1604 = vmatpush1.msra.mxu0 0.0
    %1605 = vmatprep.subr.mxu0 0.0
    %1606 = vmatpush1.msra.mxu0 0.0
    %1607 = vmatprep.subr.mxu0 0.0
    %1608 = vmatpush1.msra.mxu0 0.0
    %1609 = vmatprep.subr.mxu0 0.0
    %1610 = vmatpush1.msra.mxu0 0.0
    %1611 = vmatprep.subr.mxu0 0.0
    %1612 = vmatpush1.msra.mxu0 0.0
    %1613 = vmatprep.subr.mxu0 0.0
    %1614 = vmatpush1.msra.mxu0 0.0
    %1615 = vmatprep.subr.mxu0 0.0
    %1616 = vmatpush1.msra.mxu0 0.0
    %1617 = vmatprep.subr.mxu0 0.0
    %1618 = vmatpush1.msra.mxu0 0.0
    %1619 = vmatprep.subr.mxu0 0.0
    %1620 = vmatpush1.msra.mxu0 0.0
    %1621 = vmatprep.subr.mxu0 0.0
    %1622 = vmatpush1.msra.mxu0 0.0
    %1623 = vmatprep.mubr.f32.mxu0 0.0
    %1624 = vmatmul.mubr.f32.gmra.mrb[0].mxu0 %v1477
    %v1625 = vpop.f32.mrb[0].mxu0
    %v1626 = vadd.f32 0.0, %v1625
    %v1627 = vpop.f32.mrb[0].mxu0
    %1628 = vdwg.mxu0
    %v1630 = vrot.slane %v1626, 2
    %v1632 = vadd.f32 %v226, %v1630
    %v1633 = vxor.u32 %v1632, 2147483648
    %v1634 = vmul.f32 %v1633, 1.442695
    %v1635 = vpow.pop %v1634
    %v1636 = vadd.f32 %v1635, 1.0
    %v1637 = vrcp.pop %v1636
    %v1638 = vmul.f32 1.0, %v1637
    %1639 = vmatprep.subr.mxu0 0.0
    %1640 = vmatpush1.msra.mxu0 %v420
    %1641 = vmatprep.subr.mxu0 0.0
    %1642 = vmatpush1.msra.mxu0 %v421
    %1643 = vmatprep.subr.mxu0 0.0
    %1644 = vmatpush1.msra.mxu0 %v422
    %1645 = vmatprep.subr.mxu0 0.0
    %1646 = vmatpush1.msra.mxu0 %v423
    %1647 = vmatprep.subr.mxu0 0.0
    %1648 = vmatpush1.msra.mxu0 0.0
    %1649 = vmatprep.subr.mxu0 0.0
    %1650 = vmatpush1.msra.mxu0 0.0
    %1651 = vmatprep.subr.mxu0 0.0
    %1652 = vmatpush1.msra.mxu0 0.0
    %1653 = vmatprep.subr.mxu0 0.0
    %1654 = vmatpush1.msra.mxu0 0.0
    %1655 = vmatprep.subr.mxu0 0.0
    %1656 = vmatpush1.msra.mxu0 0.0
    %1657 = vmatprep.subr.mxu0 0.0
    %1658 = vmatpush1.msra.mxu0 0.0
    %1659 = vmatprep.subr.mxu0 0.0
    %1660 = vmatpush1.msra.mxu0 0.0
    %1661 = vmatprep.subr.mxu0 0.0
    %1662 = vmatpush1.msra.mxu0 0.0
    %1663 = vmatprep.subr.mxu0 0.0
    %1664 = vmatpush1.msra.mxu0 0.0
    %1665 = vmatprep.subr.mxu0 0.0
    %1666 = vmatpush1.msra.mxu0 0.0
    %1667 = vmatprep.subr.mxu0 0.0
    %1668 = vmatpush1.msra.mxu0 0.0
    %1669 = vmatprep.subr.mxu0 0.0
    %1670 = vmatpush1.msra.mxu0 0.0
    %1671 = vmatprep.subr.mxu0 0.0
    %1672 = vmatpush1.msra.mxu0 0.0
    %1673 = vmatprep.subr.mxu0 0.0
    %1674 = vmatpush1.msra.mxu0 0.0
    %1675 = vmatprep.subr.mxu0 0.0
    %1676 = vmatpush1.msra.mxu0 0.0
    %1677 = vmatprep.subr.mxu0 0.0
    %1678 = vmatpush1.msra.mxu0 0.0
    %1679 = vmatprep.subr.mxu0 0.0
    %1680 = vmatpush1.msra.mxu0 0.0
    %1681 = vmatprep.subr.mxu0 0.0
    %1682 = vmatpush1.msra.mxu0 0.0
    %1683 = vmatprep.subr.mxu0 0.0
    %1684 = vmatpush1.msra.mxu0 0.0
    %1685 = vmatprep.subr.mxu0 0.0
    %1686 = vmatpush1.msra.mxu0 0.0
    %1687 = vmatprep.subr.mxu0 0.0
    %1688 = vmatpush1.msra.mxu0 0.0
    %1689 = vmatprep.subr.mxu0 0.0
    %1690 = vmatpush1.msra.mxu0 0.0
    %1691 = vmatprep.subr.mxu0 0.0
    %1692 = vmatpush1.msra.mxu0 0.0
    %1693 = vmatprep.subr.mxu0 0.0
    %1694 = vmatpush1.msra.mxu0 0.0
    %1695 = vmatprep.subr.mxu0 0.0
    %1696 = vmatpush1.msra.mxu0 0.0
    %1697 = vmatprep.subr.mxu0 0.0
    %1698 = vmatpush1.msra.mxu0 0.0
    %1699 = vmatprep.subr.mxu0 0.0
    %1700 = vmatpush1.msra.mxu0 0.0
    %1701 = vmatprep.subr.mxu0 0.0
    %1702 = vmatpush1.msra.mxu0 0.0
    %1703 = vmatprep.mubr.f32.mxu0 0.0
    %1704 = vmatmul.mubr.f32.gmra.mrb[0].mxu0 %v1477
    %v1705 = vpop.f32.mrb[0].mxu0
    %v1706 = vadd.f32 0.0, %v1705
    %v1707 = vpop.f32.mrb[0].mxu0
    %1708 = vdwg.mxu0
    %v1710 = vrot.slane %v1706, 2
    %v1712 = vadd.f32 %v314, %v1710
    %v1713 = vtanh.pop %v1712
    %1714 = vmatprep.subr.mxu0 0.0
    %1715 = vmatpush1.msra.mxu0 %v425
    %1716 = vmatprep.subr.mxu0 0.0
    %1717 = vmatpush1.msra.mxu0 %v426
    %1718 = vmatprep.subr.mxu0 0.0
    %1719 = vmatpush1.msra.mxu0 %v427
    %1720 = vmatprep.subr.mxu0 0.0
    %1721 = vmatpush1.msra.mxu0 %v428
    %1722 = vmatprep.subr.mxu0 0.0
    %1723 = vmatpush1.msra.mxu0 0.0
    %1724 = vmatprep.subr.mxu0 0.0
    %1725 = vmatpush1.msra.mxu0 0.0
    %1726 = vmatprep.subr.mxu0 0.0
    %1727 = vmatpush1.msra.mxu0 0.0
    %1728 = vmatprep.subr.mxu0 0.0
    %1729 = vmatpush1.msra.mxu0 0.0
    %1730 = vmatprep.subr.mxu0 0.0
    %1731 = vmatpush1.msra.mxu0 0.0
    %1732 = vmatprep.subr.mxu0 0.0
    %1733 = vmatpush1.msra.mxu0 0.0
    %1734 = vmatprep.subr.mxu0 0.0
    %1735 = vmatpush1.msra.mxu0 0.0
    %1736 = vmatprep.subr.mxu0 0.0
    %1737 = vmatpush1.msra.mxu0 0.0
    %1738 = vmatprep.subr.mxu0 0.0
    %1739 = vmatpush1.msra.mxu0 0.0
    %1740 = vmatprep.subr.mxu0 0.0
    %1741 = vmatpush1.msra.mxu0 0.0
    %1742 = vmatprep.subr.mxu0 0.0
    %1743 = vmatpush1.msra.mxu0 0.0
    %1744 = vmatprep.subr.mxu0 0.0
    %1745 = vmatpush1.msra.mxu0 0.0
    %1746 = vmatprep.subr.mxu0 0.0
    %1747 = vmatpush1.msra.mxu0 0.0
    %1748 = vmatprep.subr.mxu0 0.0
    %1749 = vmatpush1.msra.mxu0 0.0
    %1750 = vmatprep.subr.mxu0 0.0
    %1751 = vmatpush1.msra.mxu0 0.0
    %1752 = vmatprep.subr.mxu0 0.0
    %1753 = vmatpush1.msra.mxu0 0.0
    %1754 = vmatprep.subr.mxu0 0.0
    %1755 = vmatpush1.msra.mxu0 0.0
    %1756 = vmatprep.subr.mxu0 0.0
    %1757 = vmatpush1.msra.mxu0 0.0
    %1758 = vmatprep.subr.mxu0 0.0
    %1759 = vmatpush1.msra.mxu0 0.0
    %1760 = vmatprep.subr.mxu0 0.0
    %1761 = vmatpush1.msra.mxu0 0.0
    %1762 = vmatprep.subr.mxu0 0.0
    %1763 = vmatpush1.msra.mxu0 0.0
    %1764 = vmatprep.subr.mxu0 0.0
    %1765 = vmatpush1.msra.mxu0 0.0
    %1766 = vmatprep.subr.mxu0 0.0
    %1767 = vmatpush1.msra.mxu0 0.0
    %1768 = vmatprep.subr.mxu0 0.0
    %1769 = vmatpush1.msra.mxu0 0.0
    %1770 = vmatprep.subr.mxu0 0.0
    %1771 = vmatpush1.msra.mxu0 0.0
    %1772 = vmatprep.subr.mxu0 0.0
    %1773 = vmatpush1.msra.mxu0 0.0
    %1774 = vmatprep.subr.mxu0 0.0
    %1775 = vmatpush1.msra.mxu0 0.0
    %1776 = vmatprep.subr.mxu0 0.0
    %1777 = vmatpush1.msra.mxu0 0.0
    %1778 = vmatprep.mubr.f32.mxu0 0.0
    %1779 = vmatmul.mubr.f32.gmra.mrb[0].mxu0 %v1477
    %v1780 = vpop.f32.mrb[0].mxu0
    %v1781 = vadd.f32 0.0, %v1780
    %v1782 = vpop.f32.mrb[0].mxu0
    %1783 = vdwg.mxu0
    %v1785 = vrot.slane %v1781, 2
    %v1787 = vadd.f32 %v402, %v1785
    %v1788 = vxor.u32 %v1787, 2147483648
    %v1789 = vmul.f32 %v1788, 1.442695
    %v1790 = vpow.pop %v1789
    %v1791 = vadd.f32 %v1790, 1.0
    %v1792 = vrcp.pop %v1791
    %v1793 = vmul.f32 1.0, %v1792
    %v1795 = vrot.slane %v1445, 6
    %v1797 = vmul.f32 %v1638, %v1795
    %v1798 = vmul.f32 %v1558, %v1713
    %v1799 = vadd.f32 %v1797, %v1798
    %v1800 = vtanh.pop %v1799
    %v1801 = vmul.f32 %v1793, %v1800
    %v1803 = vcombine.high %v1801, %v1801
    %v1805 = vunpack.c.l.s4 1966171168
    %v1806 = vunpack.c.0.s8 %v1805
    %v1807 = vlaneseq
    %v1808 = vshrl.u32 %v1807, 7
    %v1809 = vsub.s32 %v1806, %v1808
    %v1810 = vrot.slane %v1803, %v1809
    %v1811 = vcombine.high %v1810, %v1810
    %v1813 = vunpack.c.l.s4 1966171168
    %v1814 = vunpack.c.0.s8 %v1813
    %v1815 = vlaneseq
    %v1816 = vshrl.u32 %v1815, 7
    %v1817 = vsub.s32 %v1814, %v1816
    %v1818 = vrot.slane %v1810, %v1817
    %v1820 = vunpack.c.l.s4 1966171168
    %v1821 = vunpack.c.0.s8 %v1820
    %v1822 = vlaneseq
    %v1823 = vshrl.u32 %v1822, 7
    %v1824 = vsub.s32 %v1821, %v1823
    %v1825 = vrot.slane %v1811, %v1824
    %v1826 = vcombine.high %v1818, %v1818
    %v1827 = vcombine.high %v1825, %v1825
    %1830 = vst.msk [vmem:[#allocation2 + $0x3] sm:$0x1] %vm765, %v1826
    %1831 = vst.msk [vmem:[#allocation2 + $0xb] sm:$0x1] %vm765, %v1827
    %v1832 = vrot.slane %v1801, 6
    %v1833 = vsel %vm64, %v1832, 0
    %1835 = vmatprep.subr.mxu0 0.0
    %1836 = vmatpush1.msra.mxu0 %v410
    %1837 = vmatprep.subr.mxu0 0.0
    %1838 = vmatpush1.msra.mxu0 %v411
    %1839 = vmatprep.subr.mxu0 0.0
    %1840 = vmatpush1.msra.mxu0 %v412
    %1841 = vmatprep.subr.mxu0 0.0
    %1842 = vmatpush1.msra.mxu0 %v413
    %1843 = vmatprep.subr.mxu0 0.0
    %1844 = vmatpush1.msra.mxu0 0.0
    %1845 = vmatprep.subr.mxu0 0.0
    %1846 = vmatpush1.msra.mxu0 0.0
    %1847 = vmatprep.subr.mxu0 0.0
    %1848 = vmatpush1.msra.mxu0 0.0
    %1849 = vmatprep.subr.mxu0 0.0
    %1850 = vmatpush1.msra.mxu0 0.0
    %1851 = vmatprep.subr.mxu0 0.0
    %1852 = vmatpush1.msra.mxu0 0.0
    %1853 = vmatprep.subr.mxu0 0.0
    %1854 = vmatpush1.msra.mxu0 0.0
    %1855 = vmatprep.subr.mxu0 0.0
    %1856 = vmatpush1.msra.mxu0 0.0
    %1857 = vmatprep.subr.mxu0 0.0
    %1858 = vmatpush1.msra.mxu0 0.0
    %1859 = vmatprep.subr.mxu0 0.0
    %1860 = vmatpush1.msra.mxu0 0.0
    %1861 = vmatprep.subr.mxu0 0.0
    %1862 = vmatpush1.msra.mxu0 0.0
    %1863 = vmatprep.subr.mxu0 0.0
    %1864 = vmatpush1.msra.mxu0 0.0
    %1865 = vmatprep.subr.mxu0 0.0
    %1866 = vmatpush1.msra.mxu0 0.0
    %1867 = vmatprep.subr.mxu0 0.0
    %1868 = vmatpush1.msra.mxu0 0.0
    %1869 = vmatprep.subr.mxu0 0.0
    %1870 = vmatpush1.msra.mxu0 0.0
    %1871 = vmatprep.subr.mxu0 0.0
    %1872 = vmatpush1.msra.mxu0 0.0
    %1873 = vmatprep.subr.mxu0 0.0
    %1874 = vmatpush1.msra.mxu0 0.0
    %1875 = vmatprep.subr.mxu0 0.0
    %1876 = vmatpush1.msra.mxu0 0.0
    %1877 = vmatprep.subr.mxu0 0.0
    %1878 = vmatpush1.msra.mxu0 0.0
    %1879 = vmatprep.subr.mxu0 0.0
    %1880 = vmatpush1.msra.mxu0 0.0
    %1881 = vmatprep.subr.mxu0 0.0
    %1882 = vmatpush1.msra.mxu0 0.0
    %1883 = vmatprep.subr.mxu0 0.0
    %1884 = vmatpush1.msra.mxu0 0.0
    %1885 = vmatprep.subr.mxu0 0.0
    %1886 = vmatpush1.msra.mxu0 0.0
    %1887 = vmatprep.subr.mxu0 0.0
    %1888 = vmatpush1.msra.mxu0 0.0
    %1889 = vmatprep.subr.mxu0 0.0
    %1890 = vmatpush1.msra.mxu0 0.0
    %1891 = vmatprep.subr.mxu0 0.0
    %1892 = vmatpush1.msra.mxu0 0.0
    %1893 = vmatprep.subr.mxu0 0.0
    %1894 = vmatpush1.msra.mxu0 0.0
    %1895 = vmatprep.subr.mxu0 0.0
    %1896 = vmatpush1.msra.mxu0 0.0
    %1897 = vmatprep.subr.mxu0 0.0
    %1898 = vmatpush1.msra.mxu0 0.0
    %1899 = vmatprep.mubr.f32.mxu0 0.0
    %1900 = vmatmul.mubr.f32.gmra.mrb[0].mxu0 %v1833
    %v1901 = vpop.f32.mrb[0].mxu0
    %v1902 = vadd.f32 0.0, %v1901
    %v1903 = vpop.f32.mrb[0].mxu0
    %1904 = vdwg.mxu0
    %v1905 = vadd.f32 %v143, %v1902
    %v1906 = vxor.u32 %v1905, 2147483648
    %v1907 = vmul.f32 %v1906, 1.442695
    %v1908 = vpow.pop %v1907
    %v1909 = vadd.f32 %v1908, 1.0
    %v1910 = vrcp.pop %v1909
    %v1911 = vmul.f32 1.0, %v1910
    %1912 = vmatprep.subr.mxu0 0.0
    %1913 = vmatpush1.msra.mxu0 %v415
    %1914 = vmatprep.subr.mxu0 0.0
    %1915 = vmatpush1.msra.mxu0 %v416
    %1916 = vmatprep.subr.mxu0 0.0
    %1917 = vmatpush1.msra.mxu0 %v417
    %1918 = vmatprep.subr.mxu0 0.0
    %1919 = vmatpush1.msra.mxu0 %v418
    %1920 = vmatprep.subr.mxu0 0.0
    %1921 = vmatpush1.msra.mxu0 0.0
    %1922 = vmatprep.subr.mxu0 0.0
    %1923 = vmatpush1.msra.mxu0 0.0
    %1924 = vmatprep.subr.mxu0 0.0
    %1925 = vmatpush1.msra.mxu0 0.0
    %1926 = vmatprep.subr.mxu0 0.0
    %1927 = vmatpush1.msra.mxu0 0.0
    %1928 = vmatprep.subr.mxu0 0.0
    %1929 = vmatpush1.msra.mxu0 0.0
    %1930 = vmatprep.subr.mxu0 0.0
    %1931 = vmatpush1.msra.mxu0 0.0
    %1932 = vmatprep.subr.mxu0 0.0
    %1933 = vmatpush1.msra.mxu0 0.0
    %1934 = vmatprep.subr.mxu0 0.0
    %1935 = vmatpush1.msra.mxu0 0.0
    %1936 = vmatprep.subr.mxu0 0.0
    %1937 = vmatpush1.msra.mxu0 0.0
    %1938 = vmatprep.subr.mxu0 0.0
    %1939 = vmatpush1.msra.mxu0 0.0
    %1940 = vmatprep.subr.mxu0 0.0
    %1941 = vmatpush1.msra.mxu0 0.0
    %1942 = vmatprep.subr.mxu0 0.0
    %1943 = vmatpush1.msra.mxu0 0.0
    %1944 = vmatprep.subr.mxu0 0.0
    %1945 = vmatpush1.msra.mxu0 0.0
    %1946 = vmatprep.subr.mxu0 0.0
    %1947 = vmatpush1.msra.mxu0 0.0
    %1948 = vmatprep.subr.mxu0 0.0
    %1949 = vmatpush1.msra.mxu0 0.0
    %1950 = vmatprep.subr.mxu0 0.0
    %1951 = vmatpush1.msra.mxu0 0.0
    %1952 = vmatprep.subr.mxu0 0.0
    %1953 = vmatpush1.msra.mxu0 0.0
    %1954 = vmatprep.subr.mxu0 0.0
    %1955 = vmatpush1.msra.mxu0 0.0
    %1956 = vmatprep.subr.mxu0 0.0
    %1957 = vmatpush1.msra.mxu0 0.0
    %1958 = vmatprep.subr.mxu0 0.0
    %1959 = vmatpush1.msra.mxu0 0.0
    %1960 = vmatprep.subr.mxu0 0.0
    %1961 = vmatpush1.msra.mxu0 0.0
    %1962 = vmatprep.subr.mxu0 0.0
    %1963 = vmatpush1.msra.mxu0 0.0
    %1964 = vmatprep.subr.mxu0 0.0
    %1965 = vmatpush1.msra.mxu0 0.0
    %1966 = vmatprep.subr.mxu0 0.0
    %1967 = vmatpush1.msra.mxu0 0.0
    %1968 = vmatprep.subr.mxu0 0.0
    %1969 = vmatpush1.msra.mxu0 0.0
    %1970 = vmatprep.subr.mxu0 0.0
    %1971 = vmatpush1.msra.mxu0 0.0
    %1972 = vmatprep.subr.mxu0 0.0
    %1973 = vmatpush1.msra.mxu0 0.0
    %1974 = vmatprep.subr.mxu0 0.0
    %1975 = vmatpush1.msra.mxu0 0.0
    %1976 = vmatprep.mubr.f32.mxu0 0.0
    %1977 = vmatmul.mubr.f32.gmra.mrb[0].mxu0 %v1833
    %v1978 = vpop.f32.mrb[0].mxu0
    %v1979 = vadd.f32 0.0, %v1978
    %v1980 = vpop.f32.mrb[0].mxu0
    %1981 = vdwg.mxu0
    %v1982 = vadd.f32 %v231, %v1979
    %v1983 = vxor.u32 %v1982, 2147483648
    %v1984 = vmul.f32 %v1983, 1.442695
    %v1985 = vpow.pop %v1984
    %v1986 = vadd.f32 %v1985, 1.0
    %v1987 = vrcp.pop %v1986
    %v1988 = vmul.f32 1.0, %v1987
    %1989 = vmatprep.subr.mxu0 0.0
    %1990 = vmatpush1.msra.mxu0 %v420
    %1991 = vmatprep.subr.mxu0 0.0
    %1992 = vmatpush1.msra.mxu0 %v421
    %1993 = vmatprep.subr.mxu0 0.0
    %1994 = vmatpush1.msra.mxu0 %v422
    %1995 = vmatprep.subr.mxu0 0.0
    %1996 = vmatpush1.msra.mxu0 %v423
    %1997 = vmatprep.subr.mxu0 0.0
    %1998 = vmatpush1.msra.mxu0 0.0
    %1999 = vmatprep.subr.mxu0 0.0
    %2000 = vmatpush1.msra.mxu0 0.0
    %2001 = vmatprep.subr.mxu0 0.0
    %2002 = vmatpush1.msra.mxu0 0.0
    %2003 = vmatprep.subr.mxu0 0.0
    %2004 = vmatpush1.msra.mxu0 0.0
    %2005 = vmatprep.subr.mxu0 0.0
    %2006 = vmatpush1.msra.mxu0 0.0
    %2007 = vmatprep.subr.mxu0 0.0
    %2008 = vmatpush1.msra.mxu0 0.0
    %2009 = vmatprep.subr.mxu0 0.0
    %2010 = vmatpush1.msra.mxu0 0.0
    %2011 = vmatprep.subr.mxu0 0.0
    %2012 = vmatpush1.msra.mxu0 0.0
    %2013 = vmatprep.subr.mxu0 0.0
    %2014 = vmatpush1.msra.mxu0 0.0
    %2015 = vmatprep.subr.mxu0 0.0
    %2016 = vmatpush1.msra.mxu0 0.0
    %2017 = vmatprep.subr.mxu0 0.0
    %2018 = vmatpush1.msra.mxu0 0.0
    %2019 = vmatprep.subr.mxu0 0.0
    %2020 = vmatpush1.msra.mxu0 0.0
    %2021 = vmatprep.subr.mxu0 0.0
    %2022 = vmatpush1.msra.mxu0 0.0
    %2023 = vmatprep.subr.mxu0 0.0
    %2024 = vmatpush1.msra.mxu0 0.0
    %2025 = vmatprep.subr.mxu0 0.0
    %2026 = vmatpush1.msra.mxu0 0.0
    %2027 = vmatprep.subr.mxu0 0.0
    %2028 = vmatpush1.msra.mxu0 0.0
    %2029 = vmatprep.subr.mxu0 0.0
    %2030 = vmatpush1.msra.mxu0 0.0
    %2031 = vmatprep.subr.mxu0 0.0
    %2032 = vmatpush1.msra.mxu0 0.0
    %2033 = vmatprep.subr.mxu0 0.0
    %2034 = vmatpush1.msra.mxu0 0.0
    %2035 = vmatprep.subr.mxu0 0.0
    %2036 = vmatpush1.msra.mxu0 0.0
    %2037 = vmatprep.subr.mxu0 0.0
    %2038 = vmatpush1.msra.mxu0 0.0
    %2039 = vmatprep.subr.mxu0 0.0
    %2040 = vmatpush1.msra.mxu0 0.0
    %2041 = vmatprep.subr.mxu0 0.0
    %2042 = vmatpush1.msra.mxu0 0.0
    %2043 = vmatprep.subr.mxu0 0.0
    %2044 = vmatpush1.msra.mxu0 0.0
    %2045 = vmatprep.subr.mxu0 0.0
    %2046 = vmatpush1.msra.mxu0 0.0
    %2047 = vmatprep.subr.mxu0 0.0
    %2048 = vmatpush1.msra.mxu0 0.0
    %2049 = vmatprep.subr.mxu0 0.0
    %2050 = vmatpush1.msra.mxu0 0.0
    %2051 = vmatprep.subr.mxu0 0.0
    %2052 = vmatpush1.msra.mxu0 0.0
    %2053 = vmatprep.mubr.f32.mxu0 0.0
    %2054 = vmatmul.mubr.f32.gmra.mrb[0].mxu0 %v1833
    %v2055 = vpop.f32.mrb[0].mxu0
    %v2056 = vadd.f32 0.0, %v2055
    %v2057 = vpop.f32.mrb[0].mxu0
    %2058 = vdwg.mxu0
    %v2059 = vadd.f32 %v319, %v2056
    %v2060 = vtanh.pop %v2059
    %2061 = vmatprep.subr.mxu0 0.0
    %2062 = vmatpush1.msra.mxu0 %v425
    %2063 = vmatprep.subr.mxu0 0.0
    %2064 = vmatpush1.msra.mxu0 %v426
    %2065 = vmatprep.subr.mxu0 0.0
    %2066 = vmatpush1.msra.mxu0 %v427
    %2067 = vmatprep.subr.mxu0 0.0
    %2068 = vmatpush1.msra.mxu0 %v428
    %2069 = vmatprep.subr.mxu0 0.0
    %2070 = vmatpush1.msra.mxu0 0.0
    %2071 = vmatprep.subr.mxu0 0.0
    %2072 = vmatpush1.msra.mxu0 0.0
    %2073 = vmatprep.subr.mxu0 0.0
    %2074 = vmatpush1.msra.mxu0 0.0
    %2075 = vmatprep.subr.mxu0 0.0
    %2076 = vmatpush1.msra.mxu0 0.0
    %2077 = vmatprep.subr.mxu0 0.0
    %2078 = vmatpush1.msra.mxu0 0.0
    %2079 = vmatprep.subr.mxu0 0.0
    %2080 = vmatpush1.msra.mxu0 0.0
    %2081 = vmatprep.subr.mxu0 0.0
    %2082 = vmatpush1.msra.mxu0 0.0
    %2083 = vmatprep.subr.mxu0 0.0
    %2084 = vmatpush1.msra.mxu0 0.0
    %2085 = vmatprep.subr.mxu0 0.0
    %2086 = vmatpush1.msra.mxu0 0.0
    %2087 = vmatprep.subr.mxu0 0.0
    %2088 = vmatpush1.msra.mxu0 0.0
    %2089 = vmatprep.subr.mxu0 0.0
    %2090 = vmatpush1.msra.mxu0 0.0
    %2091 = vmatprep.subr.mxu0 0.0
    %2092 = vmatpush1.msra.mxu0 0.0
    %2093 = vmatprep.subr.mxu0 0.0
    %2094 = vmatpush1.msra.mxu0 0.0
    %2095 = vmatprep.subr.mxu0 0.0
    %2096 = vmatpush1.msra.mxu0 0.0
    %2097 = vmatprep.subr.mxu0 0.0
    %2098 = vmatpush1.msra.mxu0 0.0
    %2099 = vmatprep.subr.mxu0 0.0
    %2100 = vmatpush1.msra.mxu0 0.0
    %2101 = vmatprep.subr.mxu0 0.0
    %2102 = vmatpush1.msra.mxu0 0.0
    %2103 = vmatprep.subr.mxu0 0.0
    %2104 = vmatpush1.msra.mxu0 0.0
    %2105 = vmatprep.subr.mxu0 0.0
    %2106 = vmatpush1.msra.mxu0 0.0
    %2107 = vmatprep.subr.mxu0 0.0
    %2108 = vmatpush1.msra.mxu0 0.0
    %2109 = vmatprep.subr.mxu0 0.0
    %2110 = vmatpush1.msra.mxu0 0.0
    %2111 = vmatprep.subr.mxu0 0.0
    %2112 = vmatpush1.msra.mxu0 0.0
    %2113 = vmatprep.subr.mxu0 0.0
    %2114 = vmatpush1.msra.mxu0 0.0
    %2115 = vmatprep.subr.mxu0 0.0
    %2116 = vmatpush1.msra.mxu0 0.0
    %2117 = vmatprep.subr.mxu0 0.0
    %2118 = vmatpush1.msra.mxu0 0.0
    %2119 = vmatprep.subr.mxu0 0.0
    %2120 = vmatpush1.msra.mxu0 0.0
    %2121 = vmatprep.subr.mxu0 0.0
    %2122 = vmatpush1.msra.mxu0 0.0
    %2123 = vmatprep.subr.mxu0 0.0
    %2124 = vmatpush1.msra.mxu0 0.0
    %2125 = vmatprep.mubr.f32.mxu0 0.0
    %2126 = vmatmul.mubr.f32.gmra.mrb[0].mxu0 %v1833
    %v2127 = vpop.f32.mrb[0].mxu0
    %v2128 = vadd.f32 0.0, %v2127
    %v2129 = vpop.f32.mrb[0].mxu0
    %2130 = vdwg.mxu0
    %v2131 = vadd.f32 %v407, %v2128
    %v2132 = vxor.u32 %v2131, 2147483648
    %v2133 = vmul.f32 %v2132, 1.442695
    %v2134 = vpow.pop %v2133
    %v2135 = vadd.f32 %v2134, 1.0
    %v2136 = vrcp.pop %v2135
    %v2137 = vmul.f32 1.0, %v2136
    %v2139 = vrot.slane %v1799, 6
    %v2141 = vmul.f32 %v1988, %v2139
    %v2142 = vmul.f32 %v1911, %v2060
    %v2143 = vadd.f32 %v2141, %v2142
    %v2144 = vtanh.pop %v2143
    %v2145 = vmul.f32 %v2137, %v2144
    %v2148 = vunpack.c.l.s4 1966171168
    %v2149 = vunpack.c.0.s8 %v2148
    %v2150 = vlaneseq
    %v2151 = vshrl.u32 %v2150, 7
    %v2152 = vsub.s32 %v2149, %v2151
    %v2153 = vrot.slane %v2145, %v2152
    %v2154 = vcombine.high %v2153, %v2153
    %v2156 = vunpack.c.l.s4 1966171168
    %v2157 = vunpack.c.0.s8 %v2156
    %v2158 = vlaneseq
    %v2159 = vshrl.u32 %v2158, 7
    %v2160 = vsub.s32 %v2157, %v2159
    %v2161 = vrot.slane %v2153, %v2160
    %v2163 = vunpack.c.l.s4 1966171168
    %v2164 = vunpack.c.0.s8 %v2163
    %v2165 = vlaneseq
    %v2166 = vshrl.u32 %v2165, 7
    %v2167 = vsub.s32 %v2164, %v2166
    %v2168 = vrot.slane %v2154, %v2167
    %2171 = vst.msk [vmem:[#allocation2 + $0x4] sm:$0x1] %vm765, %v2161
    %2172 = vst.msk [vmem:[#allocation2 + $0xc] sm:$0x1] %vm765, %v2168
    %v2173 = vsel %vm64, %v2145, 0
    %2175 = vmatprep.subr.mxu0 0.0
    %2176 = vmatpush1.msra.mxu0 %v410
    %2177 = vmatprep.subr.mxu0 0.0
    %2178 = vmatpush1.msra.mxu0 %v411
    %2179 = vmatprep.subr.mxu0 0.0
    %2180 = vmatpush1.msra.mxu0 %v412
    %2181 = vmatprep.subr.mxu0 0.0
    %2182 = vmatpush1.msra.mxu0 %v413
    %2183 = vmatprep.subr.mxu0 0.0
    %2184 = vmatpush1.msra.mxu0 0.0
    %2185 = vmatprep.subr.mxu0 0.0
    %2186 = vmatpush1.msra.mxu0 0.0
    %2187 = vmatprep.subr.mxu0 0.0
    %2188 = vmatpush1.msra.mxu0 0.0
    %2189 = vmatprep.subr.mxu0 0.0
    %2190 = vmatpush1.msra.mxu0 0.0
    %2191 = vmatprep.subr.mxu0 0.0
    %2192 = vmatpush1.msra.mxu0 0.0
    %2193 = vmatprep.subr.mxu0 0.0
    %2194 = vmatpush1.msra.mxu0 0.0
    %2195 = vmatprep.subr.mxu0 0.0
    %2196 = vmatpush1.msra.mxu0 0.0
    %2197 = vmatprep.subr.mxu0 0.0
    %2198 = vmatpush1.msra.mxu0 0.0
    %2199 = vmatprep.subr.mxu0 0.0
    %2200 = vmatpush1.msra.mxu0 0.0
    %2201 = vmatprep.subr.mxu0 0.0
    %2202 = vmatpush1.msra.mxu0 0.0
    %2203 = vmatprep.subr.mxu0 0.0
    %2204 = vmatpush1.msra.mxu0 0.0
    %2205 = vmatprep.subr.mxu0 0.0
    %2206 = vmatpush1.msra.mxu0 0.0
    %2207 = vmatprep.subr.mxu0 0.0
    %2208 = vmatpush1.msra.mxu0 0.0
    %2209 = vmatprep.subr.mxu0 0.0
    %2210 = vmatpush1.msra.mxu0 0.0
    %2211 = vmatprep.subr.mxu0 0.0
    %2212 = vmatpush1.msra.mxu0 0.0
    %2213 = vmatprep.subr.mxu0 0.0
    %2214 = vmatpush1.msra.mxu0 0.0
    %2215 = vmatprep.subr.mxu0 0.0
    %2216 = vmatpush1.msra.mxu0 0.0
    %2217 = vmatprep.subr.mxu0 0.0
    %2218 = vmatpush1.msra.mxu0 0.0
    %2219 = vmatprep.subr.mxu0 0.0
    %2220 = vmatpush1.msra.mxu0 0.0
    %2221 = vmatprep.subr.mxu0 0.0
    %2222 = vmatpush1.msra.mxu0 0.0
    %2223 = vmatprep.subr.mxu0 0.0
    %2224 = vmatpush1.msra.mxu0 0.0
    %2225 = vmatprep.subr.mxu0 0.0
    %2226 = vmatpush1.msra.mxu0 0.0
    %2227 = vmatprep.subr.mxu0 0.0
    %2228 = vmatpush1.msra.mxu0 0.0
    %2229 = vmatprep.subr.mxu0 0.0
    %2230 = vmatpush1.msra.mxu0 0.0
    %2231 = vmatprep.subr.mxu0 0.0
    %2232 = vmatpush1.msra.mxu0 0.0
    %2233 = vmatprep.subr.mxu0 0.0
    %2234 = vmatpush1.msra.mxu0 0.0
    %2235 = vmatprep.subr.mxu0 0.0
    %2236 = vmatpush1.msra.mxu0 0.0
    %2237 = vmatprep.subr.mxu0 0.0
    %2238 = vmatpush1.msra.mxu0 0.0
    %2239 = vmatprep.mubr.f32.mxu0 0.0
    %2240 = vmatmul.mubr.f32.gmra.mrb[0].mxu0 %v2173
    %v2241 = vpop.f32.mrb[0].mxu0
    %v2242 = vadd.f32 0.0, %v2241
    %v2243 = vpop.f32.mrb[0].mxu0
    %2244 = vdwg.mxu0
    %v2246 = vrot.slane %v2242, 6
    %v2248 = vadd.f32 %v143, %v2246
    %v2249 = vxor.u32 %v2248, 2147483648
    %v2250 = vmul.f32 %v2249, 1.442695
    %v2251 = vpow.pop %v2250
    %v2252 = vadd.f32 %v2251, 1.0
    %v2253 = vrcp.pop %v2252
    %v2254 = vmul.f32 1.0, %v2253
    %2255 = vmatprep.subr.mxu0 0.0
    %2256 = vmatpush1.msra.mxu0 %v415
    %2257 = vmatprep.subr.mxu0 0.0
    %2258 = vmatpush1.msra.mxu0 %v416
    %2259 = vmatprep.subr.mxu0 0.0
    %2260 = vmatpush1.msra.mxu0 %v417
    %2261 = vmatprep.subr.mxu0 0.0
    %2262 = vmatpush1.msra.mxu0 %v418
    %2263 = vmatprep.subr.mxu0 0.0
    %2264 = vmatpush1.msra.mxu0 0.0
    %2265 = vmatprep.subr.mxu0 0.0
    %2266 = vmatpush1.msra.mxu0 0.0
    %2267 = vmatprep.subr.mxu0 0.0
    %2268 = vmatpush1.msra.mxu0 0.0
    %2269 = vmatprep.subr.mxu0 0.0
    %2270 = vmatpush1.msra.mxu0 0.0
    %2271 = vmatprep.subr.mxu0 0.0
    %2272 = vmatpush1.msra.mxu0 0.0
    %2273 = vmatprep.subr.mxu0 0.0
    %2274 = vmatpush1.msra.mxu0 0.0
    %2275 = vmatprep.subr.mxu0 0.0
    %2276 = vmatpush1.msra.mxu0 0.0
    %2277 = vmatprep.subr.mxu0 0.0
    %2278 = vmatpush1.msra.mxu0 0.0
    %2279 = vmatprep.subr.mxu0 0.0
    %2280 = vmatpush1.msra.mxu0 0.0
    %2281 = vmatprep.subr.mxu0 0.0
    %2282 = vmatpush1.msra.mxu0 0.0
    %2283 = vmatprep.subr.mxu0 0.0
    %2284 = vmatpush1.msra.mxu0 0.0
    %2285 = vmatprep.subr.mxu0 0.0
    %2286 = vmatpush1.msra.mxu0 0.0
    %2287 = vmatprep.subr.mxu0 0.0
    %2288 = vmatpush1.msra.mxu0 0.0
    %2289 = vmatprep.subr.mxu0 0.0
    %2290 = vmatpush1.msra.mxu0 0.0
    %2291 = vmatprep.subr.mxu0 0.0
    %2292 = vmatpush1.msra.mxu0 0.0
    %2293 = vmatprep.subr.mxu0 0.0
    %2294 = vmatpush1.msra.mxu0 0.0
    %2295 = vmatprep.subr.mxu0 0.0
    %2296 = vmatpush1.msra.mxu0 0.0
    %2297 = vmatprep.subr.mxu0 0.0
    %2298 = vmatpush1.msra.mxu0 0.0
    %2299 = vmatprep.subr.mxu0 0.0
    %2300 = vmatpush1.msra.mxu0 0.0
    %2301 = vmatprep.subr.mxu0 0.0
    %2302 = vmatpush1.msra.mxu0 0.0
    %2303 = vmatprep.subr.mxu0 0.0
    %2304 = vmatpush1.msra.mxu0 0.0
    %2305 = vmatprep.subr.mxu0 0.0
    %2306 = vmatpush1.msra.mxu0 0.0
    %2307 = vmatprep.subr.mxu0 0.0
    %2308 = vmatpush1.msra.mxu0 0.0
    %2309 = vmatprep.subr.mxu0 0.0
    %2310 = vmatpush1.msra.mxu0 0.0
    %2311 = vmatprep.subr.mxu0 0.0
    %2312 = vmatpush1.msra.mxu0 0.0
    %2313 = vmatprep.subr.mxu0 0.0
    %2314 = vmatpush1.msra.mxu0 0.0
    %2315 = vmatprep.subr.mxu0 0.0
    %2316 = vmatpush1.msra.mxu0 0.0
    %2317 = vmatprep.subr.mxu0 0.0
    %2318 = vmatpush1.msra.mxu0 0.0
    %2319 = vmatprep.mubr.f32.mxu0 0.0
    %2320 = vmatmul.mubr.f32.gmra.mrb[0].mxu0 %v2173
    %v2321 = vpop.f32.mrb[0].mxu0
    %v2322 = vadd.f32 0.0, %v2321
    %v2323 = vpop.f32.mrb[0].mxu0
    %2324 = vdwg.mxu0
    %v2326 = vrot.slane %v2322, 6
    %v2328 = vadd.f32 %v231, %v2326
    %v2329 = vxor.u32 %v2328, 2147483648
    %v2330 = vmul.f32 %v2329, 1.442695
    %v2331 = vpow.pop %v2330
    %v2332 = vadd.f32 %v2331, 1.0
    %v2333 = vrcp.pop %v2332
    %v2334 = vmul.f32 1.0, %v2333
    %2335 = vmatprep.subr.mxu0 0.0
    %2336 = vmatpush1.msra.mxu0 %v420
    %2337 = vmatprep.subr.mxu0 0.0
    %2338 = vmatpush1.msra.mxu0 %v421
    %2339 = vmatprep.subr.mxu0 0.0
    %2340 = vmatpush1.msra.mxu0 %v422
    %2341 = vmatprep.subr.mxu0 0.0
    %2342 = vmatpush1.msra.mxu0 %v423
    %2343 = vmatprep.subr.mxu0 0.0
    %2344 = vmatpush1.msra.mxu0 0.0
    %2345 = vmatprep.subr.mxu0 0.0
    %2346 = vmatpush1.msra.mxu0 0.0
    %2347 = vmatprep.subr.mxu0 0.0
    %2348 = vmatpush1.msra.mxu0 0.0
    %2349 = vmatprep.subr.mxu0 0.0
    %2350 = vmatpush1.msra.mxu0 0.0
    %2351 = vmatprep.subr.mxu0 0.0
    %2352 = vmatpush1.msra.mxu0 0.0
    %2353 = vmatprep.subr.mxu0 0.0
    %2354 = vmatpush1.msra.mxu0 0.0
    %2355 = vmatprep.subr.mxu0 0.0
    %2356 = vmatpush1.msra.mxu0 0.0
    %2357 = vmatprep.subr.mxu0 0.0
    %2358 = vmatpush1.msra.mxu0 0.0
    %2359 = vmatprep.subr.mxu0 0.0
    %2360 = vmatpush1.msra.mxu0 0.0
    %2361 = vmatprep.subr.mxu0 0.0
    %2362 = vmatpush1.msra.mxu0 0.0
    %2363 = vmatprep.subr.mxu0 0.0
    %2364 = vmatpush1.msra.mxu0 0.0
    %2365 = vmatprep.subr.mxu0 0.0
    %2366 = vmatpush1.msra.mxu0 0.0
    %2367 = vmatprep.subr.mxu0 0.0
    %2368 = vmatpush1.msra.mxu0 0.0
    %2369 = vmatprep.subr.mxu0 0.0
    %2370 = vmatpush1.msra.mxu0 0.0
    %2371 = vmatprep.subr.mxu0 0.0
    %2372 = vmatpush1.msra.mxu0 0.0
    %2373 = vmatprep.subr.mxu0 0.0
    %2374 = vmatpush1.msra.mxu0 0.0
    %2375 = vmatprep.subr.mxu0 0.0
    %2376 = vmatpush1.msra.mxu0 0.0
    %2377 = vmatprep.subr.mxu0 0.0
    %2378 = vmatpush1.msra.mxu0 0.0
    %2379 = vmatprep.subr.mxu0 0.0
    %2380 = vmatpush1.msra.mxu0 0.0
    %2381 = vmatprep.subr.mxu0 0.0
    %2382 = vmatpush1.msra.mxu0 0.0
    %2383 = vmatprep.subr.mxu0 0.0
    %2384 = vmatpush1.msra.mxu0 0.0
    %2385 = vmatprep.subr.mxu0 0.0
    %2386 = vmatpush1.msra.mxu0 0.0
    %2387 = vmatprep.subr.mxu0 0.0
    %2388 = vmatpush1.msra.mxu0 0.0
    %2389 = vmatprep.subr.mxu0 0.0
    %2390 = vmatpush1.msra.mxu0 0.0
    %2391 = vmatprep.subr.mxu0 0.0
    %2392 = vmatpush1.msra.mxu0 0.0
    %2393 = vmatprep.subr.mxu0 0.0
    %2394 = vmatpush1.msra.mxu0 0.0
    %2395 = vmatprep.subr.mxu0 0.0
    %2396 = vmatpush1.msra.mxu0 0.0
    %2397 = vmatprep.subr.mxu0 0.0
    %2398 = vmatpush1.msra.mxu0 0.0
    %2399 = vmatprep.mubr.f32.mxu0 0.0
    %2400 = vmatmul.mubr.f32.gmra.mrb[0].mxu0 %v2173
    %v2401 = vpop.f32.mrb[0].mxu0
    %v2402 = vadd.f32 0.0, %v2401
    %v2403 = vpop.f32.mrb[0].mxu0
    %2404 = vdwg.mxu0
    %v2406 = vrot.slane %v2402, 6
    %v2408 = vadd.f32 %v319, %v2406
    %v2409 = vtanh.pop %v2408
    %2410 = vmatprep.subr.mxu0 0.0
    %2411 = vmatpush1.msra.mxu0 %v425
    %2412 = vmatprep.subr.mxu0 0.0
    %2413 = vmatpush1.msra.mxu0 %v426
    %2414 = vmatprep.subr.mxu0 0.0
    %2415 = vmatpush1.msra.mxu0 %v427
    %2416 = vmatprep.subr.mxu0 0.0
    %2417 = vmatpush1.msra.mxu0 %v428
    %2418 = vmatprep.subr.mxu0 0.0
    %2419 = vmatpush1.msra.mxu0 0.0
    %2420 = vmatprep.subr.mxu0 0.0
    %2421 = vmatpush1.msra.mxu0 0.0
    %2422 = vmatprep.subr.mxu0 0.0
    %2423 = vmatpush1.msra.mxu0 0.0
    %2424 = vmatprep.subr.mxu0 0.0
    %2425 = vmatpush1.msra.mxu0 0.0
    %2426 = vmatprep.subr.mxu0 0.0
    %2427 = vmatpush1.msra.mxu0 0.0
    %2428 = vmatprep.subr.mxu0 0.0
    %2429 = vmatpush1.msra.mxu0 0.0
    %2430 = vmatprep.subr.mxu0 0.0
    %2431 = vmatpush1.msra.mxu0 0.0
    %2432 = vmatprep.subr.mxu0 0.0
    %2433 = vmatpush1.msra.mxu0 0.0
    %2434 = vmatprep.subr.mxu0 0.0
    %2435 = vmatpush1.msra.mxu0 0.0
    %2436 = vmatprep.subr.mxu0 0.0
    %2437 = vmatpush1.msra.mxu0 0.0
    %2438 = vmatprep.subr.mxu0 0.0
    %2439 = vmatpush1.msra.mxu0 0.0
    %2440 = vmatprep.subr.mxu0 0.0
    %2441 = vmatpush1.msra.mxu0 0.0
    %2442 = vmatprep.subr.mxu0 0.0
    %2443 = vmatpush1.msra.mxu0 0.0
    %2444 = vmatprep.subr.mxu0 0.0
    %2445 = vmatpush1.msra.mxu0 0.0
    %2446 = vmatprep.subr.mxu0 0.0
    %2447 = vmatpush1.msra.mxu0 0.0
    %2448 = vmatprep.subr.mxu0 0.0
    %2449 = vmatpush1.msra.mxu0 0.0
    %2450 = vmatprep.subr.mxu0 0.0
    %2451 = vmatpush1.msra.mxu0 0.0
    %2452 = vmatprep.subr.mxu0 0.0
    %2453 = vmatpush1.msra.mxu0 0.0
    %2454 = vmatprep.subr.mxu0 0.0
    %2455 = vmatpush1.msra.mxu0 0.0
    %2456 = vmatprep.subr.mxu0 0.0
    %2457 = vmatpush1.msra.mxu0 0.0
    %2458 = vmatprep.subr.mxu0 0.0
    %2459 = vmatpush1.msra.mxu0 0.0
    %2460 = vmatprep.subr.mxu0 0.0
    %2461 = vmatpush1.msra.mxu0 0.0
    %2462 = vmatprep.subr.mxu0 0.0
    %2463 = vmatpush1.msra.mxu0 0.0
    %2464 = vmatprep.subr.mxu0 0.0
    %2465 = vmatpush1.msra.mxu0 0.0
    %2466 = vmatprep.subr.mxu0 0.0
    %2467 = vmatpush1.msra.mxu0 0.0
    %2468 = vmatprep.subr.mxu0 0.0
    %2469 = vmatpush1.msra.mxu0 0.0
    %2470 = vmatprep.subr.mxu0 0.0
    %2471 = vmatpush1.msra.mxu0 0.0
    %2472 = vmatprep.subr.mxu0 0.0
    %2473 = vmatpush1.msra.mxu0 0.0
    %2474 = vmatprep.mubr.f32.mxu0 0.0
    %2475 = vmatmul.mubr.f32.gmra.mrb[0].mxu0 %v2173
    %v2476 = vpop.f32.mrb[0].mxu0
    %v2477 = vadd.f32 0.0, %v2476
    %v2478 = vpop.f32.mrb[0].mxu0
    %2479 = vdwg.mxu0
    %v2481 = vrot.slane %v2477, 6
    %v2483 = vadd.f32 %v407, %v2481
    %v2484 = vxor.u32 %v2483, 2147483648
    %v2485 = vmul.f32 %v2484, 1.442695
    %v2486 = vpow.pop %v2485
    %v2487 = vadd.f32 %v2486, 1.0
    %v2488 = vrcp.pop %v2487
    %v2489 = vmul.f32 1.0, %v2488
    %v2491 = vrot.slane %v2143, 6
    %v2493 = vmul.f32 %v2334, %v2491
    %v2494 = vmul.f32 %v2254, %v2409
    %v2495 = vadd.f32 %v2493, %v2494
    %v2496 = vtanh.pop %v2495
    %v2497 = vmul.f32 %v2489, %v2496
    %v2500 = vunpack.c.l.s4 1966171168
    %v2501 = vunpack.c.0.s8 %v2500
    %v2502 = vlaneseq
    %v2503 = vshrl.u32 %v2502, 7
    %v2504 = vsub.s32 %v2501, %v2503
    %v2505 = vrot.slane %v2497, %v2504
    %v2506 = vcombine.high %v2505, %v2505
    %v2508 = vunpack.c.l.s4 1966171168
    %v2509 = vunpack.c.0.s8 %v2508
    %v2510 = vlaneseq
    %v2511 = vshrl.u32 %v2510, 7
    %v2512 = vsub.s32 %v2509, %v2511
    %v2513 = vrot.slane %v2505, %v2512
    %v2515 = vunpack.c.l.s4 1966171168
    %v2516 = vunpack.c.0.s8 %v2515
    %v2517 = vlaneseq
    %v2518 = vshrl.u32 %v2517, 7
    %v2519 = vsub.s32 %v2516, %v2518
    %v2520 = vrot.slane %v2506, %v2519
    %v2521 = vcombine.high %v2513, %v2513
    %v2522 = vcombine.high %v2520, %v2520
    %2525 = vst.msk [vmem:[#allocation2 + $0x5] sm:$0x1] %vm765, %v2521
    %2526 = vst.msk [vmem:[#allocation2 + $0xd] sm:$0x1] %vm765, %v2522
    %v2527 = vrot.slane %v2497, 2
    %v2528 = vsel %vm64, %v2527, 0
    %2530 = vmatprep.subr.mxu0 0.0
    %2531 = vmatpush1.msra.mxu0 %v410
    %2532 = vmatprep.subr.mxu0 0.0
    %2533 = vmatpush1.msra.mxu0 %v411
    %2534 = vmatprep.subr.mxu0 0.0
    %2535 = vmatpush1.msra.mxu0 %v412
    %2536 = vmatprep.subr.mxu0 0.0
    %2537 = vmatpush1.msra.mxu0 %v413
    %2538 = vmatprep.subr.mxu0 0.0
    %2539 = vmatpush1.msra.mxu0 0.0
    %2540 = vmatprep.subr.mxu0 0.0
    %2541 = vmatpush1.msra.mxu0 0.0
    %2542 = vmatprep.subr.mxu0 0.0
    %2543 = vmatpush1.msra.mxu0 0.0
    %2544 = vmatprep.subr.mxu0 0.0
    %2545 = vmatpush1.msra.mxu0 0.0
    %2546 = vmatprep.subr.mxu0 0.0
    %2547 = vmatpush1.msra.mxu0 0.0
    %2548 = vmatprep.subr.mxu0 0.0
    %2549 = vmatpush1.msra.mxu0 0.0
    %2550 = vmatprep.subr.mxu0 0.0
    %2551 = vmatpush1.msra.mxu0 0.0
    %2552 = vmatprep.subr.mxu0 0.0
    %2553 = vmatpush1.msra.mxu0 0.0
    %2554 = vmatprep.subr.mxu0 0.0
    %2555 = vmatpush1.msra.mxu0 0.0
    %2556 = vmatprep.subr.mxu0 0.0
    %2557 = vmatpush1.msra.mxu0 0.0
    %2558 = vmatprep.subr.mxu0 0.0
    %2559 = vmatpush1.msra.mxu0 0.0
    %2560 = vmatprep.subr.mxu0 0.0
    %2561 = vmatpush1.msra.mxu0 0.0
    %2562 = vmatprep.subr.mxu0 0.0
    %2563 = vmatpush1.msra.mxu0 0.0
    %2564 = vmatprep.subr.mxu0 0.0
    %2565 = vmatpush1.msra.mxu0 0.0
    %2566 = vmatprep.subr.mxu0 0.0
    %2567 = vmatpush1.msra.mxu0 0.0
    %2568 = vmatprep.subr.mxu0 0.0
    %2569 = vmatpush1.msra.mxu0 0.0
    %2570 = vmatprep.subr.mxu0 0.0
    %2571 = vmatpush1.msra.mxu0 0.0
    %2572 = vmatprep.subr.mxu0 0.0
    %2573 = vmatpush1.msra.mxu0 0.0
    %2574 = vmatprep.subr.mxu0 0.0
    %2575 = vmatpush1.msra.mxu0 0.0
    %2576 = vmatprep.subr.mxu0 0.0
    %2577 = vmatpush1.msra.mxu0 0.0
    %2578 = vmatprep.subr.mxu0 0.0
    %2579 = vmatpush1.msra.mxu0 0.0
    %2580 = vmatprep.subr.mxu0 0.0
    %2581 = vmatpush1.msra.mxu0 0.0
    %2582 = vmatprep.subr.mxu0 0.0
    %2583 = vmatpush1.msra.mxu0 0.0
    %2584 = vmatprep.subr.mxu0 0.0
    %2585 = vmatpush1.msra.mxu0 0.0
    %2586 = vmatprep.subr.mxu0 0.0
    %2587 = vmatpush1.msra.mxu0 0.0
    %2588 = vmatprep.subr.mxu0 0.0
    %2589 = vmatpush1.msra.mxu0 0.0
    %2590 = vmatprep.subr.mxu0 0.0
    %2591 = vmatpush1.msra.mxu0 0.0
    %2592 = vmatprep.subr.mxu0 0.0
    %2593 = vmatpush1.msra.mxu0 0.0
    %2594 = vmatprep.mubr.f32.mxu0 0.0
    %2595 = vmatmul.mubr.f32.gmra.mrb[0].mxu0 %v2528
    %v2596 = vpop.f32.mrb[0].mxu0
    %v2597 = vadd.f32 0.0, %v2596
    %v2598 = vpop.f32.mrb[0].mxu0
    %2599 = vdwg.mxu0
    %v2601 = vrot.slane %v2597, 4
    %v2603 = vadd.f32 %v143, %v2601
    %v2604 = vxor.u32 %v2603, 2147483648
    %v2605 = vmul.f32 %v2604, 1.442695
    %v2606 = vpow.pop %v2605
    %v2607 = vadd.f32 %v2606, 1.0
    %v2608 = vrcp.pop %v2607
    %v2609 = vmul.f32 1.0, %v2608
    %2610 = vmatprep.subr.mxu0 0.0
    %2611 = vmatpush1.msra.mxu0 %v415
    %2612 = vmatprep.subr.mxu0 0.0
    %2613 = vmatpush1.msra.mxu0 %v416
    %2614 = vmatprep.subr.mxu0 0.0
    %2615 = vmatpush1.msra.mxu0 %v417
    %2616 = vmatprep.subr.mxu0 0.0
    %2617 = vmatpush1.msra.mxu0 %v418
    %2618 = vmatprep.subr.mxu0 0.0
    %2619 = vmatpush1.msra.mxu0 0.0
    %2620 = vmatprep.subr.mxu0 0.0
    %2621 = vmatpush1.msra.mxu0 0.0
    %2622 = vmatprep.subr.mxu0 0.0
    %2623 = vmatpush1.msra.mxu0 0.0
    %2624 = vmatprep.subr.mxu0 0.0
    %2625 = vmatpush1.msra.mxu0 0.0
    %2626 = vmatprep.subr.mxu0 0.0
    %2627 = vmatpush1.msra.mxu0 0.0
    %2628 = vmatprep.subr.mxu0 0.0
    %2629 = vmatpush1.msra.mxu0 0.0
    %2630 = vmatprep.subr.mxu0 0.0
    %2631 = vmatpush1.msra.mxu0 0.0
    %2632 = vmatprep.subr.mxu0 0.0
    %2633 = vmatpush1.msra.mxu0 0.0
    %2634 = vmatprep.subr.mxu0 0.0
    %2635 = vmatpush1.msra.mxu0 0.0
    %2636 = vmatprep.subr.mxu0 0.0
    %2637 = vmatpush1.msra.mxu0 0.0
    %2638 = vmatprep.subr.mxu0 0.0
    %2639 = vmatpush1.msra.mxu0 0.0
    %2640 = vmatprep.subr.mxu0 0.0
    %2641 = vmatpush1.msra.mxu0 0.0
    %2642 = vmatprep.subr.mxu0 0.0
    %2643 = vmatpush1.msra.mxu0 0.0
    %2644 = vmatprep.subr.mxu0 0.0
    %2645 = vmatpush1.msra.mxu0 0.0
    %2646 = vmatprep.subr.mxu0 0.0
    %2647 = vmatpush1.msra.mxu0 0.0
    %2648 = vmatprep.subr.mxu0 0.0
    %2649 = vmatpush1.msra.mxu0 0.0
    %2650 = vmatprep.subr.mxu0 0.0
    %2651 = vmatpush1.msra.mxu0 0.0
    %2652 = vmatprep.subr.mxu0 0.0
    %2653 = vmatpush1.msra.mxu0 0.0
    %2654 = vmatprep.subr.mxu0 0.0
    %2655 = vmatpush1.msra.mxu0 0.0
    %2656 = vmatprep.subr.mxu0 0.0
    %2657 = vmatpush1.msra.mxu0 0.0
    %2658 = vmatprep.subr.mxu0 0.0
    %2659 = vmatpush1.msra.mxu0 0.0
    %2660 = vmatprep.subr.mxu0 0.0
    %2661 = vmatpush1.msra.mxu0 0.0
    %2662 = vmatprep.subr.mxu0 0.0
    %2663 = vmatpush1.msra.mxu0 0.0
    %2664 = vmatprep.subr.mxu0 0.0
    %2665 = vmatpush1.msra.mxu0 0.0
    %2666 = vmatprep.subr.mxu0 0.0
    %2667 = vmatpush1.msra.mxu0 0.0
    %2668 = vmatprep.subr.mxu0 0.0
    %2669 = vmatpush1.msra.mxu0 0.0
    %2670 = vmatprep.subr.mxu0 0.0
    %2671 = vmatpush1.msra.mxu0 0.0
    %2672 = vmatprep.subr.mxu0 0.0
    %2673 = vmatpush1.msra.mxu0 0.0
    %2674 = vmatprep.mubr.f32.mxu0 0.0
    %2675 = vmatmul.mubr.f32.gmra.mrb[0].mxu0 %v2528
    %v2676 = vpop.f32.mrb[0].mxu0
    %v2677 = vadd.f32 0.0, %v2676
    %v2678 = vpop.f32.mrb[0].mxu0
    %2679 = vdwg.mxu0
    %v2681 = vrot.slane %v2677, 4
    %v2683 = vadd.f32 %v231, %v2681
    %v2684 = vxor.u32 %v2683, 2147483648
    %v2685 = vmul.f32 %v2684, 1.442695
    %v2686 = vpow.pop %v2685
    %v2687 = vadd.f32 %v2686, 1.0
    %v2688 = vrcp.pop %v2687
    %v2689 = vmul.f32 1.0, %v2688
    %2690 = vmatprep.subr.mxu0 0.0
    %2691 = vmatpush1.msra.mxu0 %v420
    %2692 = vmatprep.subr.mxu0 0.0
    %2693 = vmatpush1.msra.mxu0 %v421
    %2694 = vmatprep.subr.mxu0 0.0
    %2695 = vmatpush1.msra.mxu0 %v422
    %2696 = vmatprep.subr.mxu0 0.0
    %2697 = vmatpush1.msra.mxu0 %v423
    %2698 = vmatprep.subr.mxu0 0.0
    %2699 = vmatpush1.msra.mxu0 0.0
    %2700 = vmatprep.subr.mxu0 0.0
    %2701 = vmatpush1.msra.mxu0 0.0
    %2702 = vmatprep.subr.mxu0 0.0
    %2703 = vmatpush1.msra.mxu0 0.0
    %2704 = vmatprep.subr.mxu0 0.0
    %2705 = vmatpush1.msra.mxu0 0.0
    %2706 = vmatprep.subr.mxu0 0.0
    %2707 = vmatpush1.msra.mxu0 0.0
    %2708 = vmatprep.subr.mxu0 0.0
    %2709 = vmatpush1.msra.mxu0 0.0
    %2710 = vmatprep.subr.mxu0 0.0
    %2711 = vmatpush1.msra.mxu0 0.0
    %2712 = vmatprep.subr.mxu0 0.0
    %2713 = vmatpush1.msra.mxu0 0.0
    %2714 = vmatprep.subr.mxu0 0.0
    %2715 = vmatpush1.msra.mxu0 0.0
    %2716 = vmatprep.subr.mxu0 0.0
    %2717 = vmatpush1.msra.mxu0 0.0
    %2718 = vmatprep.subr.mxu0 0.0
    %2719 = vmatpush1.msra.mxu0 0.0
    %2720 = vmatprep.subr.mxu0 0.0
    %2721 = vmatpush1.msra.mxu0 0.0
    %2722 = vmatprep.subr.mxu0 0.0
    %2723 = vmatpush1.msra.mxu0 0.0
    %2724 = vmatprep.subr.mxu0 0.0
    %2725 = vmatpush1.msra.mxu0 0.0
    %2726 = vmatprep.subr.mxu0 0.0
    %2727 = vmatpush1.msra.mxu0 0.0
    %2728 = vmatprep.subr.mxu0 0.0
    %2729 = vmatpush1.msra.mxu0 0.0
    %2730 = vmatprep.subr.mxu0 0.0
    %2731 = vmatpush1.msra.mxu0 0.0
    %2732 = vmatprep.subr.mxu0 0.0
    %2733 = vmatpush1.msra.mxu0 0.0
    %2734 = vmatprep.subr.mxu0 0.0
    %2735 = vmatpush1.msra.mxu0 0.0
    %2736 = vmatprep.subr.mxu0 0.0
    %2737 = vmatpush1.msra.mxu0 0.0
    %2738 = vmatprep.subr.mxu0 0.0
    %2739 = vmatpush1.msra.mxu0 0.0
    %2740 = vmatprep.subr.mxu0 0.0
    %2741 = vmatpush1.msra.mxu0 0.0
    %2742 = vmatprep.subr.mxu0 0.0
    %2743 = vmatpush1.msra.mxu0 0.0
    %2744 = vmatprep.subr.mxu0 0.0
    %2745 = vmatpush1.msra.mxu0 0.0
    %2746 = vmatprep.subr.mxu0 0.0
    %2747 = vmatpush1.msra.mxu0 0.0
    %2748 = vmatprep.subr.mxu0 0.0
    %2749 = vmatpush1.msra.mxu0 0.0
    %2750 = vmatprep.subr.mxu0 0.0
    %2751 = vmatpush1.msra.mxu0 0.0
    %2752 = vmatprep.subr.mxu0 0.0
    %2753 = vmatpush1.msra.mxu0 0.0
    %2754 = vmatprep.mubr.f32.mxu0 0.0
    %2755 = vmatmul.mubr.f32.gmra.mrb[0].mxu0 %v2528
    %v2756 = vpop.f32.mrb[0].mxu0
    %v2757 = vadd.f32 0.0, %v2756
    %v2758 = vpop.f32.mrb[0].mxu0
    %2759 = vdwg.mxu0
    %v2761 = vrot.slane %v2757, 4
    %v2763 = vadd.f32 %v319, %v2761
    %v2764 = vtanh.pop %v2763
    %2765 = vmatprep.subr.mxu0 0.0
    %2766 = vmatpush1.msra.mxu0 %v425
    %2767 = vmatprep.subr.mxu0 0.0
    %2768 = vmatpush1.msra.mxu0 %v426
    %2769 = vmatprep.subr.mxu0 0.0
    %2770 = vmatpush1.msra.mxu0 %v427
    %2771 = vmatprep.subr.mxu0 0.0
    %2772 = vmatpush1.msra.mxu0 %v428
    %2773 = vmatprep.subr.mxu0 0.0
    %2774 = vmatpush1.msra.mxu0 0.0
    %2775 = vmatprep.subr.mxu0 0.0
    %2776 = vmatpush1.msra.mxu0 0.0
    %2777 = vmatprep.subr.mxu0 0.0
    %2778 = vmatpush1.msra.mxu0 0.0
    %2779 = vmatprep.subr.mxu0 0.0
    %2780 = vmatpush1.msra.mxu0 0.0
    %2781 = vmatprep.subr.mxu0 0.0
    %2782 = vmatpush1.msra.mxu0 0.0
    %2783 = vmatprep.subr.mxu0 0.0
    %2784 = vmatpush1.msra.mxu0 0.0
    %2785 = vmatprep.subr.mxu0 0.0
    %2786 = vmatpush1.msra.mxu0 0.0
    %2787 = vmatprep.subr.mxu0 0.0
    %2788 = vmatpush1.msra.mxu0 0.0
    %2789 = vmatprep.subr.mxu0 0.0
    %2790 = vmatpush1.msra.mxu0 0.0
    %2791 = vmatprep.subr.mxu0 0.0
    %2792 = vmatpush1.msra.mxu0 0.0
    %2793 = vmatprep.subr.mxu0 0.0
    %2794 = vmatpush1.msra.mxu0 0.0
    %2795 = vmatprep.subr.mxu0 0.0
    %2796 = vmatpush1.msra.mxu0 0.0
    %2797 = vmatprep.subr.mxu0 0.0
    %2798 = vmatpush1.msra.mxu0 0.0
    %2799 = vmatprep.subr.mxu0 0.0
    %2800 = vmatpush1.msra.mxu0 0.0
    %2801 = vmatprep.subr.mxu0 0.0
    %2802 = vmatpush1.msra.mxu0 0.0
    %2803 = vmatprep.subr.mxu0 0.0
    %2804 = vmatpush1.msra.mxu0 0.0
    %2805 = vmatprep.subr.mxu0 0.0
    %2806 = vmatpush1.msra.mxu0 0.0
    %2807 = vmatprep.subr.mxu0 0.0
    %2808 = vmatpush1.msra.mxu0 0.0
    %2809 = vmatprep.subr.mxu0 0.0
    %2810 = vmatpush1.msra.mxu0 0.0
    %2811 = vmatprep.subr.mxu0 0.0
    %2812 = vmatpush1.msra.mxu0 0.0
    %2813 = vmatprep.subr.mxu0 0.0
    %2814 = vmatpush1.msra.mxu0 0.0
    %2815 = vmatprep.subr.mxu0 0.0
    %2816 = vmatpush1.msra.mxu0 0.0
    %2817 = vmatprep.subr.mxu0 0.0
    %2818 = vmatpush1.msra.mxu0 0.0
    %2819 = vmatprep.subr.mxu0 0.0
    %2820 = vmatpush1.msra.mxu0 0.0
    %2821 = vmatprep.subr.mxu0 0.0
    %2822 = vmatpush1.msra.mxu0 0.0
    %2823 = vmatprep.subr.mxu0 0.0
    %2824 = vmatpush1.msra.mxu0 0.0
    %2825 = vmatprep.subr.mxu0 0.0
    %2826 = vmatpush1.msra.mxu0 0.0
    %2827 = vmatprep.subr.mxu0 0.0
    %2828 = vmatpush1.msra.mxu0 0.0
    %2829 = vmatprep.mubr.f32.mxu0 0.0
    %2830 = vmatmul.mubr.f32.gmra.mrb[0].mxu0 %v2528
    %v2831 = vpop.f32.mrb[0].mxu0
    %v2832 = vadd.f32 0.0, %v2831
    %v2833 = vpop.f32.mrb[0].mxu0
    %2834 = vdwg.mxu0
    %v2836 = vrot.slane %v2832, 4
    %v2838 = vadd.f32 %v407, %v2836
    %v2839 = vxor.u32 %v2838, 2147483648
    %v2840 = vmul.f32 %v2839, 1.442695
    %v2841 = vpow.pop %v2840
    %v2842 = vadd.f32 %v2841, 1.0
    %v2843 = vrcp.pop %v2842
    %v2844 = vmul.f32 1.0, %v2843
    %v2846 = vrot.slane %v2495, 6
    %v2848 = vmul.f32 %v2689, %v2846
    %v2849 = vmul.f32 %v2609, %v2764
    %v2850 = vadd.f32 %v2848, %v2849
    %v2851 = vtanh.pop %v2850
    %v2852 = vmul.f32 %v2844, %v2851
    %v2854 = vcombine.high %v2852, %v2852
    %v2856 = vunpack.c.l.s4 1966171168
    %v2857 = vunpack.c.0.s8 %v2856
    %v2858 = vlaneseq
    %v2859 = vshrl.u32 %v2858, 7
    %v2860 = vsub.s32 %v2857, %v2859
    %v2861 = vrot.slane %v2854, %v2860
    %v2862 = vcombine.high %v2861, %v2861
    %v2864 = vunpack.c.l.s4 1966171168
    %v2865 = vunpack.c.0.s8 %v2864
    %v2866 = vlaneseq
    %v2867 = vshrl.u32 %v2866, 7
    %v2868 = vsub.s32 %v2865, %v2867
    %v2869 = vrot.slane %v2861, %v2868
    %v2871 = vunpack.c.l.s4 1966171168
    %v2872 = vunpack.c.0.s8 %v2871
    %v2873 = vlaneseq
    %v2874 = vshrl.u32 %v2873, 7
    %v2875 = vsub.s32 %v2872, %v2874
    %v2876 = vrot.slane %v2862, %v2875
    %2879 = vst.msk [vmem:[#allocation2 + $0x6] sm:$0x1] %vm765, %v2869
    %2880 = vst.msk [vmem:[#allocation2 + $0xe] sm:$0x1] %vm765, %v2876
    %v2881 = vrot.slane %v2852, 4
    %v2882 = vsel %vm64, %v2881, 0
    %2884 = vmatprep.subr.mxu0 0.0
    %2885 = vmatpush1.msra.mxu0 %v410
    %2886 = vmatprep.subr.mxu0 0.0
    %2887 = vmatpush1.msra.mxu0 %v411
    %2888 = vmatprep.subr.mxu0 0.0
    %2889 = vmatpush1.msra.mxu0 %v412
    %2890 = vmatprep.subr.mxu0 0.0
    %2891 = vmatpush1.msra.mxu0 %v413
    %2892 = vmatprep.subr.mxu0 0.0
    %2893 = vmatpush1.msra.mxu0 0.0
    %2894 = vmatprep.subr.mxu0 0.0
    %2895 = vmatpush1.msra.mxu0 0.0
    %2896 = vmatprep.subr.mxu0 0.0
    %2897 = vmatpush1.msra.mxu0 0.0
    %2898 = vmatprep.subr.mxu0 0.0
    %2899 = vmatpush1.msra.mxu0 0.0
    %2900 = vmatprep.subr.mxu0 0.0
    %2901 = vmatpush1.msra.mxu0 0.0
    %2902 = vmatprep.subr.mxu0 0.0
    %2903 = vmatpush1.msra.mxu0 0.0
    %2904 = vmatprep.subr.mxu0 0.0
    %2905 = vmatpush1.msra.mxu0 0.0
    %2906 = vmatprep.subr.mxu0 0.0
    %2907 = vmatpush1.msra.mxu0 0.0
    %2908 = vmatprep.subr.mxu0 0.0
    %2909 = vmatpush1.msra.mxu0 0.0
    %2910 = vmatprep.subr.mxu0 0.0
    %2911 = vmatpush1.msra.mxu0 0.0
    %2912 = vmatprep.subr.mxu0 0.0
    %2913 = vmatpush1.msra.mxu0 0.0
    %2914 = vmatprep.subr.mxu0 0.0
    %2915 = vmatpush1.msra.mxu0 0.0
    %2916 = vmatprep.subr.mxu0 0.0
    %2917 = vmatpush1.msra.mxu0 0.0
    %2918 = vmatprep.subr.mxu0 0.0
    %2919 = vmatpush1.msra.mxu0 0.0
    %2920 = vmatprep.subr.mxu0 0.0
    %2921 = vmatpush1.msra.mxu0 0.0
    %2922 = vmatprep.subr.mxu0 0.0
    %2923 = vmatpush1.msra.mxu0 0.0
    %2924 = vmatprep.subr.mxu0 0.0
    %2925 = vmatpush1.msra.mxu0 0.0
    %2926 = vmatprep.subr.mxu0 0.0
    %2927 = vmatpush1.msra.mxu0 0.0
    %2928 = vmatprep.subr.mxu0 0.0
    %2929 = vmatpush1.msra.mxu0 0.0
    %2930 = vmatprep.subr.mxu0 0.0
    %2931 = vmatpush1.msra.mxu0 0.0
    %2932 = vmatprep.subr.mxu0 0.0
    %2933 = vmatpush1.msra.mxu0 0.0
    %2934 = vmatprep.subr.mxu0 0.0
    %2935 = vmatpush1.msra.mxu0 0.0
    %2936 = vmatprep.subr.mxu0 0.0
    %2937 = vmatpush1.msra.mxu0 0.0
    %2938 = vmatprep.subr.mxu0 0.0
    %2939 = vmatpush1.msra.mxu0 0.0
    %2940 = vmatprep.subr.mxu0 0.0
    %2941 = vmatpush1.msra.mxu0 0.0
    %2942 = vmatprep.subr.mxu0 0.0
    %2943 = vmatpush1.msra.mxu0 0.0
    %2944 = vmatprep.subr.mxu0 0.0
    %2945 = vmatpush1.msra.mxu0 0.0
    %2946 = vmatprep.subr.mxu0 0.0
    %2947 = vmatpush1.msra.mxu0 0.0
    %2948 = vmatprep.mubr.f32.mxu0 0.0
    %2949 = vmatmul.mubr.f32.gmra.mrb[0].mxu0 %v2882
    %v2950 = vpop.f32.mrb[0].mxu0
    %v2951 = vadd.f32 0.0, %v2950
    %v2952 = vpop.f32.mrb[0].mxu0
    %2953 = vdwg.mxu0
    %v2955 = vrot.slane %v2951, 2
    %v2957 = vadd.f32 %v143, %v2955
    %v2958 = vxor.u32 %v2957, 2147483648
    %v2959 = vmul.f32 %v2958, 1.442695
    %v2960 = vpow.pop %v2959
    %v2961 = vadd.f32 %v2960, 1.0
    %v2962 = vrcp.pop %v2961
    %v2963 = vmul.f32 1.0, %v2962
    %2964 = vmatprep.subr.mxu0 0.0
    %2965 = vmatpush1.msra.mxu0 %v415
    %2966 = vmatprep.subr.mxu0 0.0
    %2967 = vmatpush1.msra.mxu0 %v416
    %2968 = vmatprep.subr.mxu0 0.0
    %2969 = vmatpush1.msra.mxu0 %v417
    %2970 = vmatprep.subr.mxu0 0.0
    %2971 = vmatpush1.msra.mxu0 %v418
    %2972 = vmatprep.subr.mxu0 0.0
    %2973 = vmatpush1.msra.mxu0 0.0
    %2974 = vmatprep.subr.mxu0 0.0
    %2975 = vmatpush1.msra.mxu0 0.0
    %2976 = vmatprep.subr.mxu0 0.0
    %2977 = vmatpush1.msra.mxu0 0.0
    %2978 = vmatprep.subr.mxu0 0.0
    %2979 = vmatpush1.msra.mxu0 0.0
    %2980 = vmatprep.subr.mxu0 0.0
    %2981 = vmatpush1.msra.mxu0 0.0
    %2982 = vmatprep.subr.mxu0 0.0
    %2983 = vmatpush1.msra.mxu0 0.0
    %2984 = vmatprep.subr.mxu0 0.0
    %2985 = vmatpush1.msra.mxu0 0.0
    %2986 = vmatprep.subr.mxu0 0.0
    %2987 = vmatpush1.msra.mxu0 0.0
    %2988 = vmatprep.subr.mxu0 0.0
    %2989 = vmatpush1.msra.mxu0 0.0
    %2990 = vmatprep.subr.mxu0 0.0
    %2991 = vmatpush1.msra.mxu0 0.0
    %2992 = vmatprep.subr.mxu0 0.0
    %2993 = vmatpush1.msra.mxu0 0.0
    %2994 = vmatprep.subr.mxu0 0.0
    %2995 = vmatpush1.msra.mxu0 0.0
    %2996 = vmatprep.subr.mxu0 0.0
    %2997 = vmatpush1.msra.mxu0 0.0
    %2998 = vmatprep.subr.mxu0 0.0
    %2999 = vmatpush1.msra.mxu0 0.0
    %3000 = vmatprep.subr.mxu0 0.0
    %3001 = vmatpush1.msra.mxu0 0.0
    %3002 = vmatprep.subr.mxu0 0.0
    %3003 = vmatpush1.msra.mxu0 0.0
    %3004 = vmatprep.subr.mxu0 0.0
    %3005 = vmatpush1.msra.mxu0 0.0
    %3006 = vmatprep.subr.mxu0 0.0
    %3007 = vmatpush1.msra.mxu0 0.0
    %3008 = vmatprep.subr.mxu0 0.0
    %3009 = vmatpush1.msra.mxu0 0.0
    %3010 = vmatprep.subr.mxu0 0.0
    %3011 = vmatpush1.msra.mxu0 0.0
    %3012 = vmatprep.subr.mxu0 0.0
    %3013 = vmatpush1.msra.mxu0 0.0
    %3014 = vmatprep.subr.mxu0 0.0
    %3015 = vmatpush1.msra.mxu0 0.0
    %3016 = vmatprep.subr.mxu0 0.0
    %3017 = vmatpush1.msra.mxu0 0.0
    %3018 = vmatprep.subr.mxu0 0.0
    %3019 = vmatpush1.msra.mxu0 0.0
    %3020 = vmatprep.subr.mxu0 0.0
    %3021 = vmatpush1.msra.mxu0 0.0
    %3022 = vmatprep.subr.mxu0 0.0
    %3023 = vmatpush1.msra.mxu0 0.0
    %3024 = vmatprep.subr.mxu0 0.0
    %3025 = vmatpush1.msra.mxu0 0.0
    %3026 = vmatprep.subr.mxu0 0.0
    %3027 = vmatpush1.msra.mxu0 0.0
    %3028 = vmatprep.mubr.f32.mxu0 0.0
    %3029 = vmatmul.mubr.f32.gmra.mrb[0].mxu0 %v2882
    %v3030 = vpop.f32.mrb[0].mxu0
    %v3031 = vadd.f32 0.0, %v3030
    %v3032 = vpop.f32.mrb[0].mxu0
    %3033 = vdwg.mxu0
    %v3035 = vrot.slane %v3031, 2
    %v3037 = vadd.f32 %v231, %v3035
    %v3038 = vxor.u32 %v3037, 2147483648
    %v3039 = vmul.f32 %v3038, 1.442695
    %v3040 = vpow.pop %v3039
    %v3041 = vadd.f32 %v3040, 1.0
    %v3042 = vrcp.pop %v3041
    %v3043 = vmul.f32 1.0, %v3042
    %3044 = vmatprep.subr.mxu0 0.0
    %3045 = vmatpush1.msra.mxu0 %v420
    %3046 = vmatprep.subr.mxu0 0.0
    %3047 = vmatpush1.msra.mxu0 %v421
    %3048 = vmatprep.subr.mxu0 0.0
    %3049 = vmatpush1.msra.mxu0 %v422
    %3050 = vmatprep.subr.mxu0 0.0
    %3051 = vmatpush1.msra.mxu0 %v423
    %3052 = vmatprep.subr.mxu0 0.0
    %3053 = vmatpush1.msra.mxu0 0.0
    %3054 = vmatprep.subr.mxu0 0.0
    %3055 = vmatpush1.msra.mxu0 0.0
    %3056 = vmatprep.subr.mxu0 0.0
    %3057 = vmatpush1.msra.mxu0 0.0
    %3058 = vmatprep.subr.mxu0 0.0
    %3059 = vmatpush1.msra.mxu0 0.0
    %3060 = vmatprep.subr.mxu0 0.0
    %3061 = vmatpush1.msra.mxu0 0.0
    %3062 = vmatprep.subr.mxu0 0.0
    %3063 = vmatpush1.msra.mxu0 0.0
    %3064 = vmatprep.subr.mxu0 0.0
    %3065 = vmatpush1.msra.mxu0 0.0
    %3066 = vmatprep.subr.mxu0 0.0
    %3067 = vmatpush1.msra.mxu0 0.0
    %3068 = vmatprep.subr.mxu0 0.0
    %3069 = vmatpush1.msra.mxu0 0.0
    %3070 = vmatprep.subr.mxu0 0.0
    %3071 = vmatpush1.msra.mxu0 0.0
    %3072 = vmatprep.subr.mxu0 0.0
    %3073 = vmatpush1.msra.mxu0 0.0
    %3074 = vmatprep.subr.mxu0 0.0
    %3075 = vmatpush1.msra.mxu0 0.0
    %3076 = vmatprep.subr.mxu0 0.0
    %3077 = vmatpush1.msra.mxu0 0.0
    %3078 = vmatprep.subr.mxu0 0.0
    %3079 = vmatpush1.msra.mxu0 0.0
    %3080 = vmatprep.subr.mxu0 0.0
    %3081 = vmatpush1.msra.mxu0 0.0
    %3082 = vmatprep.subr.mxu0 0.0
    %3083 = vmatpush1.msra.mxu0 0.0
    %3084 = vmatprep.subr.mxu0 0.0
    %3085 = vmatpush1.msra.mxu0 0.0
    %3086 = vmatprep.subr.mxu0 0.0
    %3087 = vmatpush1.msra.mxu0 0.0
    %3088 = vmatprep.subr.mxu0 0.0
    %3089 = vmatpush1.msra.mxu0 0.0
    %3090 = vmatprep.subr.mxu0 0.0
    %3091 = vmatpush1.msra.mxu0 0.0
    %3092 = vmatprep.subr.mxu0 0.0
    %3093 = vmatpush1.msra.mxu0 0.0
    %3094 = vmatprep.subr.mxu0 0.0
    %3095 = vmatpush1.msra.mxu0 0.0
    %3096 = vmatprep.subr.mxu0 0.0
    %3097 = vmatpush1.msra.mxu0 0.0
    %3098 = vmatprep.subr.mxu0 0.0
    %3099 = vmatpush1.msra.mxu0 0.0
    %3100 = vmatprep.subr.mxu0 0.0
    %3101 = vmatpush1.msra.mxu0 0.0
    %3102 = vmatprep.subr.mxu0 0.0
    %3103 = vmatpush1.msra.mxu0 0.0
    %3104 = vmatprep.subr.mxu0 0.0
    %3105 = vmatpush1.msra.mxu0 0.0
    %3106 = vmatprep.subr.mxu0 0.0
    %3107 = vmatpush1.msra.mxu0 0.0
    %3108 = vmatprep.mubr.f32.mxu0 0.0
    %3109 = vmatmul.mubr.f32.gmra.mrb[0].mxu0 %v2882
    %v3110 = vpop.f32.mrb[0].mxu0
    %v3111 = vadd.f32 0.0, %v3110
    %v3112 = vpop.f32.mrb[0].mxu0
    %3113 = vdwg.mxu0
    %v3115 = vrot.slane %v3111, 2
    %v3117 = vadd.f32 %v319, %v3115
    %v3118 = vtanh.pop %v3117
    %3119 = vmatprep.subr.mxu0 0.0
    %3120 = vmatpush1.msra.mxu0 %v425
    %3121 = vmatprep.subr.mxu0 0.0
    %3122 = vmatpush1.msra.mxu0 %v426
    %3123 = vmatprep.subr.mxu0 0.0
    %3124 = vmatpush1.msra.mxu0 %v427
    %3125 = vmatprep.subr.mxu0 0.0
    %3126 = vmatpush1.msra.mxu0 %v428
    %3127 = vmatprep.subr.mxu0 0.0
    %3128 = vmatpush1.msra.mxu0 0.0
    %3129 = vmatprep.subr.mxu0 0.0
    %3130 = vmatpush1.msra.mxu0 0.0
    %3131 = vmatprep.subr.mxu0 0.0
    %3132 = vmatpush1.msra.mxu0 0.0
    %3133 = vmatprep.subr.mxu0 0.0
    %3134 = vmatpush1.msra.mxu0 0.0
    %3135 = vmatprep.subr.mxu0 0.0
    %3136 = vmatpush1.msra.mxu0 0.0
    %3137 = vmatprep.subr.mxu0 0.0
    %3138 = vmatpush1.msra.mxu0 0.0
    %3139 = vmatprep.subr.mxu0 0.0
    %3140 = vmatpush1.msra.mxu0 0.0
    %3141 = vmatprep.subr.mxu0 0.0
    %3142 = vmatpush1.msra.mxu0 0.0
    %3143 = vmatprep.subr.mxu0 0.0
    %3144 = vmatpush1.msra.mxu0 0.0
    %3145 = vmatprep.subr.mxu0 0.0
    %3146 = vmatpush1.msra.mxu0 0.0
    %3147 = vmatprep.subr.mxu0 0.0
    %3148 = vmatpush1.msra.mxu0 0.0
    %3149 = vmatprep.subr.mxu0 0.0
    %3150 = vmatpush1.msra.mxu0 0.0
    %3151 = vmatprep.subr.mxu0 0.0
    %3152 = vmatpush1.msra.mxu0 0.0
    %3153 = vmatprep.subr.mxu0 0.0
    %3154 = vmatpush1.msra.mxu0 0.0
    %3155 = vmatprep.subr.mxu0 0.0
    %3156 = vmatpush1.msra.mxu0 0.0
    %3157 = vmatprep.subr.mxu0 0.0
    %3158 = vmatpush1.msra.mxu0 0.0
    %3159 = vmatprep.subr.mxu0 0.0
    %3160 = vmatpush1.msra.mxu0 0.0
    %3161 = vmatprep.subr.mxu0 0.0
    %3162 = vmatpush1.msra.mxu0 0.0
    %3163 = vmatprep.subr.mxu0 0.0
    %3164 = vmatpush1.msra.mxu0 0.0
    %3165 = vmatprep.subr.mxu0 0.0
    %3166 = vmatpush1.msra.mxu0 0.0
    %3167 = vmatprep.subr.mxu0 0.0
    %3168 = vmatpush1.msra.mxu0 0.0
    %3169 = vmatprep.subr.mxu0 0.0
    %3170 = vmatpush1.msra.mxu0 0.0
    %3171 = vmatprep.subr.mxu0 0.0
    %3172 = vmatpush1.msra.mxu0 0.0
    %3173 = vmatprep.subr.mxu0 0.0
    %3174 = vmatpush1.msra.mxu0 0.0
    %3175 = vmatprep.subr.mxu0 0.0
    %3176 = vmatpush1.msra.mxu0 0.0
    %3177 = vmatprep.subr.mxu0 0.0
    %3178 = vmatpush1.msra.mxu0 0.0
    %3179 = vmatprep.subr.mxu0 0.0
    %3180 = vmatpush1.msra.mxu0 0.0
    %3181 = vmatprep.subr.mxu0 0.0
    %3182 = vmatpush1.msra.mxu0 0.0
    %3183 = vmatprep.mubr.f32.mxu0 0.0
    %3184 = vmatmul.mubr.f32.gmra.mrb[0].mxu0 %v2882
    %v3185 = vpop.f32.mrb[0].mxu0
    %v3186 = vadd.f32 0.0, %v3185
    %v3187 = vpop.f32.mrb[0].mxu0
    %3188 = vdwg.mxu0
    %v3190 = vrot.slane %v3186, 2
    %v3192 = vadd.f32 %v407, %v3190
    %v3193 = vxor.u32 %v3192, 2147483648
    %v3194 = vmul.f32 %v3193, 1.442695
    %v3195 = vpow.pop %v3194
    %v3196 = vadd.f32 %v3195, 1.0
    %v3197 = vrcp.pop %v3196
    %v3198 = vmul.f32 1.0, %v3197
    %v3200 = vrot.slane %v2850, 6
    %v3202 = vmul.f32 %v3043, %v3200
    %v3203 = vmul.f32 %v2963, %v3118
    %v3204 = vadd.f32 %v3202, %v3203
    %v3205 = vtanh.pop %v3204
    %v3206 = vmul.f32 %v3198, %v3205
    %v3208 = vcombine.high %v3206, %v3206
    %v3210 = vunpack.c.l.s4 1966171168
    %v3211 = vunpack.c.0.s8 %v3210
    %v3212 = vlaneseq
    %v3213 = vshrl.u32 %v3212, 7
    %v3214 = vsub.s32 %v3211, %v3213
    %v3215 = vrot.slane %v3208, %v3214
    %v3216 = vcombine.high %v3215, %v3215
    %v3218 = vunpack.c.l.s4 1966171168
    %v3219 = vunpack.c.0.s8 %v3218
    %v3220 = vlaneseq
    %v3221 = vshrl.u32 %v3220, 7
    %v3222 = vsub.s32 %v3219, %v3221
    %v3223 = vrot.slane %v3215, %v3222
    %v3225 = vunpack.c.l.s4 1966171168
    %v3226 = vunpack.c.0.s8 %v3225
    %v3227 = vlaneseq
    %v3228 = vshrl.u32 %v3227, 7
    %v3229 = vsub.s32 %v3226, %v3228
    %v3230 = vrot.slane %v3216, %v3229
    %v3231 = vcombine.high %v3223, %v3223
    %v3232 = vcombine.high %v3230, %v3230
    %3235 = vst.msk [vmem:[#allocation2 + $0x7] sm:$0x1] %vm765, %v3231
    %3236 = vst.msk [vmem:[#allocation2 + $0xf] sm:$0x1] %vm765, %v3232
    %vm3237 = vcmask 261126
    %3238 = vst.msk [vmem:[#allocation6 - $0x6] sm:$0xc0] %vm3237, %v3206
    %3239 = vst.msk [vmem:[#allocation8 - $0x6] sm:$0xc0] %vm3237, %v3204
    %v3240 = vld [vmem:[#allocation2] sm:$0xff]
    %v3241 = vld [vmem:[#allocation2 + $0x8] sm:$0xff]
    %v3242 = vld [vmem:[%s4] sm:$0xff]
    %v3243 = vld [vmem:[%s4 + $0x8] sm:$0xff]
    %v3244 = vld [vmem:[%s4 + $0x10] sm:$0xff]
    %v3245 = vld [vmem:[%s4 + $0x18] sm:$0xff]
    %v3246 = vld [vmem:[%s5] sm:$0x1]
    %v3248 = vlaneseq
    %v3249 = vshrl.u32 %v3248, 7
    %v3250 = vsub.s32 0, %v3249
    %v3251 = vrot.slane %v3246, %v3250
    %v3254 = vsel %vm64, %v3240, 0
    %v3257 = vsel %vm64, %v3241, 0
    %3259 = vmatprep.subr.mxu0 0.0
    %3260 = vmatpush1.msra.mxu0 %v3242
    %3261 = vmatprep.subr.mxu0 0.0
    %3262 = vmatpush1.msra.mxu0 %v3243
    %3263 = vmatprep.subr.mxu0 0.0
    %3264 = vmatpush1.msra.mxu0 %v3244
    %3265 = vmatprep.subr.mxu0 0.0
    %3266 = vmatpush1.msra.mxu0 %v3245
    %3267 = vmatprep.subr.mxu0 0.0
    %3268 = vmatpush1.msra.mxu0 0.0
    %3269 = vmatprep.subr.mxu0 0.0
    %3270 = vmatpush1.msra.mxu0 0.0
    %3271 = vmatprep.subr.mxu0 0.0
    %3272 = vmatpush1.msra.mxu0 0.0
    %3273 = vmatprep.subr.mxu0 0.0
    %3274 = vmatpush1.msra.mxu0 0.0
    %3275 = vmatprep.subr.mxu0 0.0
    %3276 = vmatpush1.msra.mxu0 0.0
    %3277 = vmatprep.subr.mxu0 0.0
    %3278 = vmatpush1.msra.mxu0 0.0
    %3279 = vmatprep.subr.mxu0 0.0
    %3280 = vmatpush1.msra.mxu0 0.0
    %3281 = vmatprep.subr.mxu0 0.0
    %3282 = vmatpush1.msra.mxu0 0.0
    %3283 = vmatprep.subr.mxu0 0.0
    %3284 = vmatpush1.msra.mxu0 0.0
    %3285 = vmatprep.subr.mxu0 0.0
    %3286 = vmatpush1.msra.mxu0 0.0
    %3287 = vmatprep.subr.mxu0 0.0
    %3288 = vmatpush1.msra.mxu0 0.0
    %3289 = vmatprep.subr.mxu0 0.0
    %3290 = vmatpush1.msra.mxu0 0.0
    %3291 = vmatprep.subr.mxu0 0.0
    %3292 = vmatpush1.msra.mxu0 0.0
    %3293 = vmatprep.subr.mxu0 0.0
    %3294 = vmatpush1.msra.mxu0 0.0
    %3295 = vmatprep.subr.mxu0 0.0
    %3296 = vmatpush1.msra.mxu0 0.0
    %3297 = vmatprep.subr.mxu0 0.0
    %3298 = vmatpush1.msra.mxu0 0.0
    %3299 = vmatprep.subr.mxu0 0.0
    %3300 = vmatpush1.msra.mxu0 0.0
    %3301 = vmatprep.subr.mxu0 0.0
    %3302 = vmatpush1.msra.mxu0 0.0
    %3303 = vmatprep.subr.mxu0 0.0
    %3304 = vmatpush1.msra.mxu0 0.0
    %3305 = vmatprep.subr.mxu0 0.0
    %3306 = vmatpush1.msra.mxu0 0.0
    %3307 = vmatprep.subr.mxu0 0.0
    %3308 = vmatpush1.msra.mxu0 0.0
    %3309 = vmatprep.subr.mxu0 0.0
    %3310 = vmatpush1.msra.mxu0 0.0
    %3311 = vmatprep.subr.mxu0 0.0
    %3312 = vmatpush1.msra.mxu0 0.0
    %3313 = vmatprep.subr.mxu0 0.0
    %3314 = vmatpush1.msra.mxu0 0.0
    %3315 = vmatprep.subr.mxu0 0.0
    %3316 = vmatpush1.msra.mxu0 0.0
    %3317 = vmatprep.subr.mxu0 0.0
    %3318 = vmatpush1.msra.mxu0 0.0
    %3319 = vmatprep.subr.mxu0 0.0
    %3320 = vmatpush1.msra.mxu0 0.0
    %3321 = vmatprep.subr.mxu0 0.0
    %3322 = vmatpush1.msra.mxu0 0.0
    %3323 = vmatprep.mubr.f32.mxu0 0.0
    %3324 = vmatmul.mubr.f32.gmra.mrb[0].mxu0 %v3254
    %v3325 = vpop.f32.mrb[0].mxu0
    %v3326 = vadd.f32 %v3251, %v3325
    %v3327 = vpop.f32.mrb[0].mxu0
    %3328 = vmatprep.mubr.f32.mxu0 0.0
    %3329 = vmatmul.mubr.f32.gmra.mrb[0].mxu0 %v3257
    %v3330 = vpop.f32.mrb[0].mxu0
    %v3331 = vadd.f32 %v3251, %v3330
    %v3332 = vpop.f32.mrb[0].mxu0
    %3333 = vdwg.mxu0
    %v3334 = vtanh.pop %v3326
    %v3335 = vtanh.pop %v3331
    %v3336 = vld [vmem:[%s6] sm:$0x1]
    %v3338 = vlaneseq
    %v3339 = vshrl.u32 %v3338, 7
    %v3340 = vsub.s32 0, %v3339
    %v3341 = vrot.slane %v3336, %v3340
    %v3343 = vmul.f32 %v3334, %v3341
    %v3344 = vmul.f32 %v3335, %v3341
    %v3345 = vsel %vm64, %v3343, 0.0
    %3346 = vadd.xlane.f32.xlu0 %v3345
    %v3347 = vpop.xlane.xlu0 %3346
    %v3348 = vsel %vm64, %v3344, 0.0
    %3349 = vadd.xlane.f32.xlu0 %v3348
    %v3350 = vpop.xlane.xlu0 %3349
    %v3351 = vld [vmem:[#allocation3] sm:$0x1]
    %v3353 = vlaneseq
    %v3354 = vshrl.u32 %v3353, 7
    %v3355 = vsub.s32 0, %v3354
    %v3356 = vrot.slane %v3351, %v3355
    %v3358 = vadd.f32 %v3347, %v3356
    %v3359 = vadd.f32 %v3350, %v3356
    %v3360 = vlaneseq
    %v3361 = vshrl.u32 %v3360, 7
    %v3362 = vlaneseq
    %v3363 = vand.u32 %v3362, 127
    %vm3364 = vcmp.le.s32.totalorder %v3363, %v3361
    %v3365 = vsel %vm3364, 1, 0
    %vm3366 = vcmp.eq.s32.totalorder %v3365, 1
    %3369 = vset.pattern.permute.xlu0 0
    %3370 = vperm.xlu0 %3369, %v3358
    %v3371 = vpop.permute.xlu0 %3370
    %3372 = vset.pattern.permute.xlu0 0
    %3373 = vperm.xlu0 %3372, %v3359
    %v3374 = vpop.permute.xlu0 %3373
    %v3375 = vlaneseq
    %v3376 = vshrl.u32 %v3375, 7
    %v3377 = vsub.s32 %v3363, %v3376
    %v3378 = vrot.slane %v3371, %v3377
    %v3379 = vlaneseq
    %v3380 = vshrl.u32 %v3379, 7
    %v3381 = vsub.s32 %v3363, %v3380
    %v3382 = vrot.slane %v3374, %v3381
    %vm3383 = vcmask 1042434
    %v3384 = vsel %vm3383, %v3378, %v3378
    %vm3385 = vcmask 1043459
    %v3386 = vsel %vm3385, %v3378, %v3384
    %vm3387 = vcmask 1044484
    %v3388 = vsel %vm3387, %v3378, %v3386
    %vm3389 = vcmask 1045509
    %v3390 = vsel %vm3389, %v3378, %v3388
    %vm3391 = vcmask 1046534
    %v3392 = vsel %vm3391, %v3378, %v3390
    %vm3393 = vcmask 1047559
    %v3394 = vsel %vm3393, %v3378, %v3392
    %v3395 = vsel %vm3383, %v3382, %v3382
    %v3396 = vsel %vm3385, %v3382, %v3395
    %v3397 = vsel %vm3387, %v3382, %v3396
    %v3398 = vsel %vm3389, %v3382, %v3397
    %v3399 = vsel %vm3391, %v3382, %v3398
    %v3400 = vsel %vm3393, %v3382, %v3399
    %v3403 = vsel %vm3366, %v3394, -1e+30
    %v3404 = vsel %vm3366, %v3400, -1e+30
    %vm3405 = vcmask 64512
    %v3406 = vsel %vm3405, %v3403, -inf
    %3407 = vmax.xlane.f32.xlu0 %v3406
    %v3408 = vpop.xlane.xlu0 %3407
    %v3409 = vsel %vm3405, %v3404, -inf
    %3410 = vmax.xlane.f32.xlu0 %v3409
    %v3411 = vpop.xlane.xlu0 %3410
    %v3412 = vsub.f32 %v3403, %v3408
    %v3413 = vsub.f32 %v3404, %v3411
    %v3414 = vmul.f32 %v3412, 1.442695
    %v3415 = vpow.pop %v3414
    %v3416 = vmul.f32 %v3413, 1.442695
    %v3417 = vpow.pop %v3416
    %v3418 = vsel %vm3405, %v3415, 0.0
    %3419 = vadd.xlane.f32.xlu0 %v3418
    %v3420 = vpop.xlane.xlu0 %3419
    %v3421 = vsel %vm3405, %v3417, 0.0
    %3422 = vadd.xlane.f32.xlu0 %v3421
    %v3423 = vpop.xlane.xlu0 %3422
    %v3424 = vrcp.pop %v3420
    %v3425 = vmul.f32 %v3415, %v3424
    %v3426 = vrcp.pop %v3423
    %v3427 = vmul.f32 %v3417, %v3426
    %v3429 = vsel %vm3405, %v3425, 0
    %3431 = vmatprep.subr.mxu0 0.0
    %3432 = vmatpush1.msra.mxu0 %v3240
    %3433 = vmatprep.subr.mxu0 0.0
    %3434 = vmatpush1.msra.mxu0 0.0
    %3435 = vmatprep.subr.mxu0 0.0
    %3436 = vmatpush1.msra.mxu0 0.0
    %3437 = vmatprep.subr.mxu0 0.0
    %3438 = vmatpush1.msra.mxu0 0.0
    %3439 = vmatprep.subr.mxu0 0.0
    %3440 = vmatpush1.msra.mxu0 0.0
    %3441 = vmatprep.subr.mxu0 0.0
    %3442 = vmatpush1.msra.mxu0 0.0
    %3443 = vmatprep.subr.mxu0 0.0
    %3444 = vmatpush1.msra.mxu0 0.0
    %3445 = vmatprep.subr.mxu0 0.0
    %3446 = vmatpush1.msra.mxu0 0.0
    %3447 = vmatprep.subr.mxu0 0.0
    %3448 = vmatpush1.msra.mxu0 0.0
    %3449 = vmatprep.subr.mxu0 0.0
    %3450 = vmatpush1.msra.mxu0 0.0
    %3451 = vmatprep.subr.mxu0 0.0
    %3452 = vmatpush1.msra.mxu0 0.0
    %3453 = vmatprep.subr.mxu0 0.0
    %3454 = vmatpush1.msra.mxu0 0.0
    %3455 = vmatprep.subr.mxu0 0.0
    %3456 = vmatpush1.msra.mxu0 0.0
    %3457 = vmatprep.subr.mxu0 0.0
    %3458 = vmatpush1.msra.mxu0 0.0
    %3459 = vmatprep.subr.mxu0 0.0
    %3460 = vmatpush1.msra.mxu0 0.0
    %3461 = vmatprep.subr.mxu0 0.0
    %3462 = vmatpush1.msra.mxu0 0.0
    %3463 = vmatprep.subr.mxu0 0.0
    %3464 = vmatpush1.msra.mxu0 0.0
    %3465 = vmatprep.subr.mxu0 0.0
    %3466 = vmatpush1.msra.mxu0 0.0
    %3467 = vmatprep.subr.mxu0 0.0
    %3468 = vmatpush1.msra.mxu0 0.0
    %3469 = vmatprep.subr.mxu0 0.0
    %3470 = vmatpush1.msra.mxu0 0.0
    %3471 = vmatprep.subr.mxu0 0.0
    %3472 = vmatpush1.msra.mxu0 0.0
    %3473 = vmatprep.subr.mxu0 0.0
    %3474 = vmatpush1.msra.mxu0 0.0
    %3475 = vmatprep.subr.mxu0 0.0
    %3476 = vmatpush1.msra.mxu0 0.0
    %3477 = vmatprep.subr.mxu0 0.0
    %3478 = vmatpush1.msra.mxu0 0.0
    %3479 = vmatprep.subr.mxu0 0.0
    %3480 = vmatpush1.msra.mxu0 0.0
    %3481 = vmatprep.subr.mxu0 0.0
    %3482 = vmatpush1.msra.mxu0 0.0
    %3483 = vmatprep.subr.mxu0 0.0
    %3484 = vmatpush1.msra.mxu0 0.0
    %3485 = vmatprep.subr.mxu0 0.0
    %3486 = vmatpush1.msra.mxu0 0.0
    %3487 = vmatprep.subr.mxu0 0.0
    %3488 = vmatpush1.msra.mxu0 0.0
    %3489 = vmatprep.subr.mxu0 0.0
    %3490 = vmatpush1.msra.mxu0 0.0
    %3491 = vmatprep.subr.mxu0 0.0
    %3492 = vmatpush1.msra.mxu0 0.0
    %3493 = vmatprep.subr.mxu0 0.0
    %3494 = vmatpush1.msra.mxu0 0.0
    %3495 = vmatprep.mubr.f32.mxu0 0.0
    %3496 = vmatmul.mubr.f32.gmra.mrb[0].mxu0 %v3429
    %v3497 = vpop.f32.mrb[0].mxu0
    %v3498 = vadd.f32 0.0, %v3497
    %v3499 = vpop.f32.mrb[0].mxu0
    %3500 = vdwg.mxu0
    %v3502 = vsel %vm3405, %v3427, 0
    %3504 = vmatprep.subr.mxu0 0.0
    %3505 = vmatpush1.msra.mxu0 %v3241
    %3506 = vmatprep.subr.mxu0 0.0
    %3507 = vmatpush1.msra.mxu0 0.0
    %3508 = vmatprep.subr.mxu0 0.0
    %3509 = vmatpush1.msra.mxu0 0.0
    %3510 = vmatprep.subr.mxu0 0.0
    %3511 = vmatpush1.msra.mxu0 0.0
    %3512 = vmatprep.subr.mxu0 0.0
    %3513 = vmatpush1.msra.mxu0 0.0
    %3514 = vmatprep.subr.mxu0 0.0
    %3515 = vmatpush1.msra.mxu0 0.0
    %3516 = vmatprep.subr.mxu0 0.0
    %3517 = vmatpush1.msra.mxu0 0.0
    %3518 = vmatprep.subr.mxu0 0.0
    %3519 = vmatpush1.msra.mxu0 0.0
    %3520 = vmatprep.subr.mxu0 0.0
    %3521 = vmatpush1.msra.mxu0 0.0
    %3522 = vmatprep.subr.mxu0 0.0
    %3523 = vmatpush1.msra.mxu0 0.0
    %3524 = vmatprep.subr.mxu0 0.0
    %3525 = vmatpush1.msra.mxu0 0.0
    %3526 = vmatprep.subr.mxu0 0.0
    %3527 = vmatpush1.msra.mxu0 0.0
    %3528 = vmatprep.subr.mxu0 0.0
    %3529 = vmatpush1.msra.mxu0 0.0
    %3530 = vmatprep.subr.mxu0 0.0
    %3531 = vmatpush1.msra.mxu0 0.0
    %3532 = vmatprep.subr.mxu0 0.0
    %3533 = vmatpush1.msra.mxu0 0.0
    %3534 = vmatprep.subr.mxu0 0.0
    %3535 = vmatpush1.msra.mxu0 0.0
    %3536 = vmatprep.subr.mxu0 0.0
    %3537 = vmatpush1.msra.mxu0 0.0
    %3538 = vmatprep.subr.mxu0 0.0
    %3539 = vmatpush1.msra.mxu0 0.0
    %3540 = vmatprep.subr.mxu0 0.0
    %3541 = vmatpush1.msra.mxu0 0.0
    %3542 = vmatprep.subr.mxu0 0.0
    %3543 = vmatpush1.msra.mxu0 0.0
    %3544 = vmatprep.subr.mxu0 0.0
    %3545 = vmatpush1.msra.mxu0 0.0
    %3546 = vmatprep.subr.mxu0 0.0
    %3547 = vmatpush1.msra.mxu0 0.0
    %3548 = vmatprep.subr.mxu0 0.0
    %3549 = vmatpush1.msra.mxu0 0.0
    %3550 = vmatprep.subr.mxu0 0.0
    %3551 = vmatpush1.msra.mxu0 0.0
    %3552 = vmatprep.subr.mxu0 0.0
    %3553 = vmatpush1.msra.mxu0 0.0
    %3554 = vmatprep.subr.mxu0 0.0
    %3555 = vmatpush1.msra.mxu0 0.0
    %3556 = vmatprep.subr.mxu0 0.0
    %3557 = vmatpush1.msra.mxu0 0.0
    %3558 = vmatprep.subr.mxu0 0.0
    %3559 = vmatpush1.msra.mxu0 0.0
    %3560 = vmatprep.subr.mxu0 0.0
    %3561 = vmatpush1.msra.mxu0 0.0
    %3562 = vmatprep.subr.mxu0 0.0
    %3563 = vmatpush1.msra.mxu0 0.0
    %3564 = vmatprep.subr.mxu0 0.0
    %3565 = vmatpush1.msra.mxu0 0.0
    %3566 = vmatprep.subr.mxu0 0.0
    %3567 = vmatpush1.msra.mxu0 0.0
    %3568 = vmatprep.mubr.f32.mxu0 0.0
    %3569 = vmatmul.mubr.f32.gmra.mrb[0].mxu0 %v3502
    %v3570 = vpop.f32.mrb[0].mxu0
    %v3571 = vadd.f32 0.0, %v3570
    %v3572 = vpop.f32.mrb[0].mxu0
    %3573 = vdwg.mxu0
    %v3574 = vld [vmem:[%s8] sm:$0xff]
    %v3575 = vld [vmem:[%s8 + $0x8] sm:$0xff]
    %v3576 = vld [vmem:[%s8 + $0x10] sm:$0xff]
    %v3577 = vld [vmem:[%s8 + $0x18] sm:$0xff]
    %v3578 = vld [vmem:[%s9] sm:$0xff]
    %v3579 = vld [vmem:[%s9 + $0x8] sm:$0xff]
    %v3580 = vld [vmem:[%s9 + $0x10] sm:$0xff]
    %v3581 = vld [vmem:[%s9 + $0x18] sm:$0xff]
    %3582 = vmatprep.subr.mxu0 0.0
    %3583 = vmatpush1.msra.mxu0 %v3578
    %3584 = vmatprep.subr.mxu0 0.0
    %3585 = vmatpush1.msra.mxu0 %v3579
    %3586 = vmatprep.subr.mxu0 0.0
    %3587 = vmatpush1.msra.mxu0 %v3580
    %3588 = vmatprep.subr.mxu0 0.0
    %3589 = vmatpush1.msra.mxu0 %v3581
    %3590 = vmatprep.subr.mxu0 0.0
    %3591 = vmatpush1.msra.mxu0 0.0
    %3592 = vmatprep.subr.mxu0 0.0
    %3593 = vmatpush1.msra.mxu0 0.0
    %3594 = vmatprep.subr.mxu0 0.0
    %3595 = vmatpush1.msra.mxu0 0.0
    %3596 = vmatprep.subr.mxu0 0.0
    %3597 = vmatpush1.msra.mxu0 0.0
    %3598 = vmatprep.subr.mxu0 0.0
    %3599 = vmatpush1.msra.mxu0 0.0
    %3600 = vmatprep.subr.mxu0 0.0
    %3601 = vmatpush1.msra.mxu0 0.0
    %3602 = vmatprep.subr.mxu0 0.0
    %3603 = vmatpush1.msra.mxu0 0.0
    %3604 = vmatprep.subr.mxu0 0.0
    %3605 = vmatpush1.msra.mxu0 0.0
    %3606 = vmatprep.subr.mxu0 0.0
    %3607 = vmatpush1.msra.mxu0 0.0
    %3608 = vmatprep.subr.mxu0 0.0
    %3609 = vmatpush1.msra.mxu0 0.0
    %3610 = vmatprep.subr.mxu0 0.0
    %3611 = vmatpush1.msra.mxu0 0.0
    %3612 = vmatprep.subr.mxu0 0.0
    %3613 = vmatpush1.msra.mxu0 0.0
    %3614 = vmatprep.subr.mxu0 0.0
    %3615 = vmatpush1.msra.mxu0 0.0
    %3616 = vmatprep.subr.mxu0 0.0
    %3617 = vmatpush1.msra.mxu0 0.0
    %3618 = vmatprep.subr.mxu0 0.0
    %3619 = vmatpush1.msra.mxu0 0.0
    %3620 = vmatprep.subr.mxu0 0.0
    %3621 = vmatpush1.msra.mxu0 0.0
    %3622 = vmatprep.subr.mxu0 0.0
    %3623 = vmatpush1.msra.mxu0 0.0
    %3624 = vmatprep.subr.mxu0 0.0
    %3625 = vmatpush1.msra.mxu0 0.0
    %3626 = vmatprep.subr.mxu0 0.0
    %3627 = vmatpush1.msra.mxu0 0.0
    %3628 = vmatprep.subr.mxu0 0.0
    %3629 = vmatpush1.msra.mxu0 0.0
    %3630 = vmatprep.subr.mxu0 0.0
    %3631 = vmatpush1.msra.mxu0 0.0
    %3632 = vmatprep.subr.mxu0 0.0
    %3633 = vmatpush1.msra.mxu0 0.0
    %3634 = vmatprep.subr.mxu0 0.0
    %3635 = vmatpush1.msra.mxu0 0.0
    %3636 = vmatprep.subr.mxu0 0.0
    %3637 = vmatpush1.msra.mxu0 0.0
    %3638 = vmatprep.subr.mxu0 0.0
    %3639 = vmatpush1.msra.mxu0 0.0
    %3640 = vmatprep.subr.mxu0 0.0
    %3641 = vmatpush1.msra.mxu0 0.0
    %3642 = vmatprep.subr.mxu0 0.0
    %3643 = vmatpush1.msra.mxu0 0.0
    %3644 = vmatprep.subr.mxu0 0.0
    %3645 = vmatpush1.msra.mxu0 0.0
    %3646 = vmatprep.mubr.f32.mxu0 0.0
    %3647 = vmatmul.mubr.f32.gmra.mrb[0].mxu0 %v3254
    %v3648 = vpop.f32.mrb[0].mxu0
    %v3649 = vadd.f32 0.0, %v3648
    %v3650 = vpop.f32.mrb[0].mxu0
    %3651 = vmatprep.mubr.f32.mxu0 0.0
    %3652 = vmatmul.mubr.f32.gmra.mrb[0].mxu0 %v3257
    %v3653 = vpop.f32.mrb[0].mxu0
    %v3654 = vadd.f32 0.0, %v3653
    %v3655 = vpop.f32.mrb[0].mxu0
    %3656 = vdwg.mxu0
    %v3658 = vsel %vm64, %v3498, 0
    %v3661 = vsel %vm64, %v3571, 0
    %3663 = vmatprep.subr.mxu0 0.0
    %3664 = vmatpush1.msra.mxu0 %v3574
    %3665 = vmatprep.subr.mxu0 0.0
    %3666 = vmatpush1.msra.mxu0 %v3575
    %3667 = vmatprep.subr.mxu0 0.0
    %3668 = vmatpush1.msra.mxu0 %v3576
    %3669 = vmatprep.subr.mxu0 0.0
    %3670 = vmatpush1.msra.mxu0 %v3577
    %3671 = vmatprep.subr.mxu0 0.0
    %3672 = vmatpush1.msra.mxu0 0.0
    %3673 = vmatprep.subr.mxu0 0.0
    %3674 = vmatpush1.msra.mxu0 0.0
    %3675 = vmatprep.subr.mxu0 0.0
    %3676 = vmatpush1.msra.mxu0 0.0
    %3677 = vmatprep.subr.mxu0 0.0
    %3678 = vmatpush1.msra.mxu0 0.0
    %3679 = vmatprep.subr.mxu0 0.0
    %3680 = vmatpush1.msra.mxu0 0.0
    %3681 = vmatprep.subr.mxu0 0.0
    %3682 = vmatpush1.msra.mxu0 0.0
    %3683 = vmatprep.subr.mxu0 0.0
    %3684 = vmatpush1.msra.mxu0 0.0
    %3685 = vmatprep.subr.mxu0 0.0
    %3686 = vmatpush1.msra.mxu0 0.0
    %3687 = vmatprep.subr.mxu0 0.0
    %3688 = vmatpush1.msra.mxu0 0.0
    %3689 = vmatprep.subr.mxu0 0.0
    %3690 = vmatpush1.msra.mxu0 0.0
    %3691 = vmatprep.subr.mxu0 0.0
    %3692 = vmatpush1.msra.mxu0 0.0
    %3693 = vmatprep.subr.mxu0 0.0
    %3694 = vmatpush1.msra.mxu0 0.0
    %3695 = vmatprep.subr.mxu0 0.0
    %3696 = vmatpush1.msra.mxu0 0.0
    %3697 = vmatprep.subr.mxu0 0.0
    %3698 = vmatpush1.msra.mxu0 0.0
    %3699 = vmatprep.subr.mxu0 0.0
    %3700 = vmatpush1.msra.mxu0 0.0
    %3701 = vmatprep.subr.mxu0 0.0
    %3702 = vmatpush1.msra.mxu0 0.0
    %3703 = vmatprep.subr.mxu0 0.0
    %3704 = vmatpush1.msra.mxu0 0.0
    %3705 = vmatprep.subr.mxu0 0.0
    %3706 = vmatpush1.msra.mxu0 0.0
    %3707 = vmatprep.subr.mxu0 0.0
    %3708 = vmatpush1.msra.mxu0 0.0
    %3709 = vmatprep.subr.mxu0 0.0
    %3710 = vmatpush1.msra.mxu0 0.0
    %3711 = vmatprep.subr.mxu0 0.0
    %3712 = vmatpush1.msra.mxu0 0.0
    %3713 = vmatprep.subr.mxu0 0.0
    %3714 = vmatpush1.msra.mxu0 0.0
    %3715 = vmatprep.subr.mxu0 0.0
    %3716 = vmatpush1.msra.mxu0 0.0
    %3717 = vmatprep.subr.mxu0 0.0
    %3718 = vmatpush1.msra.mxu0 0.0
    %3719 = vmatprep.subr.mxu0 0.0
    %3720 = vmatpush1.msra.mxu0 0.0
    %3721 = vmatprep.subr.mxu0 0.0
    %3722 = vmatpush1.msra.mxu0 0.0
    %3723 = vmatprep.subr.mxu0 0.0
    %3724 = vmatpush1.msra.mxu0 0.0
    %3725 = vmatprep.subr.mxu0 0.0
    %3726 = vmatpush1.msra.mxu0 0.0
    %3727 = vmatprep.mubr.f32.mxu0 0.0
    %3728 = vmatmul.mubr.f32.gmra.mrb[0].mxu0 %v3658
    %v3729 = vpop.f32.mrb[0].mxu0
    %v3730 = vadd.f32 %v3649, %v3729
    %v3731 = vpop.f32.mrb[0].mxu0
    %3732 = vmatprep.mubr.f32.mxu0 0.0
    %3733 = vmatmul.mubr.f32.gmra.mrb[0].mxu0 %v3661
    %v3734 = vpop.f32.mrb[0].mxu0
    %v3735 = vadd.f32 %v3654, %v3734
    %v3736 = vpop.f32.mrb[0].mxu0
    %3737 = vdwg.mxu0
    %v3738 = vld [vmem:[%s10] sm:$0x1]
    %v3740 = vlaneseq
    %v3741 = vshrl.u32 %v3740, 7
    %v3742 = vsub.s32 0, %v3741
    %v3743 = vrot.slane %v3738, %v3742
    %v3745 = vadd.f32 %v3730, %v3743
    %v3746 = vadd.f32 %v3735, %v3743
    %v3747 = vtanh.pop %v3745
    %v3748 = vtanh.pop %v3746
    %v3749 = vld [vmem:[%s11] sm:$0xff]
    %v3750 = vld [vmem:[%s11 + $0x8] sm:$0xff]
    %v3751 = vld [vmem:[%s11 + $0x10] sm:$0xff]
    %v3752 = vld [vmem:[%s11 + $0x18] sm:$0xff]
    %v3753 = vld [vmem:[%s12] sm:$0x1]
    %v3755 = vlaneseq
    %v3756 = vshrl.u32 %v3755, 7
    %v3757 = vsub.s32 0, %v3756
    %v3758 = vrot.slane %v3753, %v3757
    %v3761 = vsel %vm64, %v3747, 0
    %v3764 = vsel %vm64, %v3748, 0
    %3766 = vmatprep.subr.mxu0 0.0
    %3767 = vmatpush1.msra.mxu0 %v3749
    %3768 = vmatprep.subr.mxu0 0.0
    %3769 = vmatpush1.msra.mxu0 %v3750
    %3770 = vmatprep.subr.mxu0 0.0
    %3771 = vmatpush1.msra.mxu0 %v3751
    %3772 = vmatprep.subr.mxu0 0.0
    %3773 = vmatpush1.msra.mxu0 %v3752
    %3774 = vmatprep.subr.mxu0 0.0
    %3775 = vmatpush1.msra.mxu0 0.0
    %3776 = vmatprep.subr.mxu0 0.0
    %3777 = vmatpush1.msra.mxu0 0.0
    %3778 = vmatprep.subr.mxu0 0.0
    %3779 = vmatpush1.msra.mxu0 0.0
    %3780 = vmatprep.subr.mxu0 0.0
    %3781 = vmatpush1.msra.mxu0 0.0
    %3782 = vmatprep.subr.mxu0 0.0
    %3783 = vmatpush1.msra.mxu0 0.0
    %3784 = vmatprep.subr.mxu0 0.0
    %3785 = vmatpush1.msra.mxu0 0.0
    %3786 = vmatprep.subr.mxu0 0.0
    %3787 = vmatpush1.msra.mxu0 0.0
    %3788 = vmatprep.subr.mxu0 0.0
    %3789 = vmatpush1.msra.mxu0 0.0
    %3790 = vmatprep.subr.mxu0 0.0
    %3791 = vmatpush1.msra.mxu0 0.0
    %3792 = vmatprep.subr.mxu0 0.0
    %3793 = vmatpush1.msra.mxu0 0.0
    %3794 = vmatprep.subr.mxu0 0.0
    %3795 = vmatpush1.msra.mxu0 0.0
    %3796 = vmatprep.subr.mxu0 0.0
    %3797 = vmatpush1.msra.mxu0 0.0
    %3798 = vmatprep.subr.mxu0 0.0
    %3799 = vmatpush1.msra.mxu0 0.0
    %3800 = vmatprep.subr.mxu0 0.0
    %3801 = vmatpush1.msra.mxu0 0.0
    %3802 = vmatprep.subr.mxu0 0.0
    %3803 = vmatpush1.msra.mxu0 0.0
    %3804 = vmatprep.subr.mxu0 0.0
    %3805 = vmatpush1.msra.mxu0 0.0
    %3806 = vmatprep.subr.mxu0 0.0
    %3807 = vmatpush1.msra.mxu0 0.0
    %3808 = vmatprep.subr.mxu0 0.0
    %3809 = vmatpush1.msra.mxu0 0.0
    %3810 = vmatprep.subr.mxu0 0.0
    %3811 = vmatpush1.msra.mxu0 0.0
    %3812 = vmatprep.subr.mxu0 0.0
    %3813 = vmatpush1.msra.mxu0 0.0
    %3814 = vmatprep.subr.mxu0 0.0
    %3815 = vmatpush1.msra.mxu0 0.0
    %3816 = vmatprep.subr.mxu0 0.0
    %3817 = vmatpush1.msra.mxu0 0.0
    %3818 = vmatprep.subr.mxu0 0.0
    %3819 = vmatpush1.msra.mxu0 0.0
    %3820 = vmatprep.subr.mxu0 0.0
    %3821 = vmatpush1.msra.mxu0 0.0
    %3822 = vmatprep.subr.mxu0 0.0
    %3823 = vmatpush1.msra.mxu0 0.0
    %3824 = vmatprep.subr.mxu0 0.0
    %3825 = vmatpush1.msra.mxu0 0.0
    %3826 = vmatprep.subr.mxu0 0.0
    %3827 = vmatpush1.msra.mxu0 0.0
    %3828 = vmatprep.subr.mxu0 0.0
    %3829 = vmatpush1.msra.mxu0 0.0
    %3830 = vmatprep.mubr.f32.mxu0 0.0
    %3831 = vmatmul.mubr.f32.gmra.mrb[0].mxu0 %v3761
    %v3832 = vpop.f32.mrb[0].mxu0
    %v3833 = vadd.f32 %v3758, %v3832
    %v3834 = vpop.f32.mrb[0].mxu0
    %3835 = vmatprep.mubr.f32.mxu0 0.0
    %3836 = vmatmul.mubr.f32.gmra.mrb[0].mxu0 %v3764
    %v3837 = vpop.f32.mrb[0].mxu0
    %v3838 = vadd.f32 %v3758, %v3837
    %v3839 = vpop.f32.mrb[0].mxu0
    %3840 = vdwg.mxu0
    %vm3841 = vcmask 523264
    %3842 = vst.msk [vmem:[#allocation4] sm:$0xff] %vm3841, %v3833
    %3843 = vst.msk [vmem:[#allocation4 + $0x8] sm:$0xff] %vm3841, %v3838
    // Predicated region
    $region54: #{model_forward.1} parent=1 // pred_check
      _
    $region55: #{model_forward.1} parent=1 // pred_check_branch
      %3845 = sbr.rel (0) target = $region57
    $region56: #{model_forward.1} parent=1 // pred_region
      %s3847 = ssub.s32 256, 256
      %3848 = vsyncadd [#allocation5], %s3847
      %s3849 = sshll.u32 [#allocation4], 4
      %s3850 = int_to_ptr.vmem [resolvable:$true] %s3849
      %3855 = dma.vmem_to_hbm [thread:$0]  %s3850, 256, %s13, [#allocation5], 128, 128, 8
    $region57: #{model_forward.1} parent=1 // pred_fallthru
      _
    // Predicated region
    $region58: #{model_forward.1} parent=1 // pred_check
      _
    $region59: #{model_forward.1} parent=1 // pred_check_branch
      %3857 = sbr.rel (0) target = $region61
    $region60: #{model_forward.1} parent=1 // pred_region
      %s3859 = ssub.s32 32, 32
      %3860 = vsyncadd [#allocation7], %s3859
      %s3862 = sshll.u32 [#allocation6], 4
      %s3863 = int_to_ptr.vmem [resolvable:$true] %s3862
      %3865 = dma.vmem_to_hbm [thread:$0]  %s3863, 32, %s14, [#allocation7]
    $region61: #{model_forward.1} parent=1 // pred_fallthru
      _
    // Predicated region
    $region62: #{model_forward.1} parent=1 // pred_check
      _
    $region63: #{model_forward.1} parent=1 // pred_check_branch
      %3867 = sbr.rel (0) target = $region65
    $region64: #{model_forward.1} parent=1 // pred_region
      %s3869 = ssub.s32 32, 32
      %3870 = vsyncadd [#allocation7], %s3869
      %s3872 = sshll.u32 [#allocation8], 4
      %s3873 = int_to_ptr.vmem [resolvable:$true] %s3872
      %3875 = dma.vmem_to_hbm [thread:$0]  %s3873, 32, %s15, [#allocation7]
    $region65: #{model_forward.1} parent=1 // pred_fallthru
      _
    // Predicated region
    $region66: #{model_forward.1} parent=1 // pred_check
      _
    $region67: #{model_forward.1} parent=1 // pred_check_branch
      %3877 = sbr.rel (0) target = $region69
    $region68: #{model_forward.1} parent=1 // pred_region
      %3878 = dma.done [#allocation5], 256
    $region69: #{model_forward.1} parent=1 // pred_fallthru
      _
    // Predicated region
    $region70: #{model_forward.1} parent=1 // pred_check
      _
    $region71: #{model_forward.1} parent=1 // pred_check_branch
      %3880 = sbr.rel (0) target = $region73
    $region72: #{model_forward.1} parent=1 // pred_region
      %3881 = dma.done [#allocation7], 32
    $region73: #{model_forward.1} parent=1 // pred_fallthru
      _
    // Predicated region
    $region74: #{model_forward.1} parent=1 // pred_check
      _
    $region75: #{model_forward.1} parent=1 // pred_check_branch
      %3883 = sbr.rel (0) target = $region77
    $region76: #{model_forward.1} parent=1 // pred_region
      %3884 = dma.done [#allocation7], 32
    $region77: #{model_forward.1} parent=1 // pred_fallthru
      _
    %3885 = vsyncpa [#allocation5], 1
    %3886 = vsyncpa [#allocation7], 1

</llo_original>
